<compile_context>
chip_gen: v7x
topology: tpu7x:2x2x1
jax: 0.10.0
libtpu: 0.0.40
codegen_flags: <defaults>
</compile_context>

<pallas_src>
import functools

import numpy as np
import jax
import jax.numpy as jnp
from jax.experimental import pallas as pl
from jax.experimental.pallas import tpu as pltpu

# ----------------------------- hyper params ---------------------------------
NT = 8                         # number of time steps
VTH = 0.5                      # LIF threshold
DECAY = 0.9                    # LIF membrane decay
DT, TD, TR = 0.05, 20.0, 2.0   # double_exp_filter constants


# ----------------------------- Pallas kernels --------------------------------
def _encoder_fused_kernel(img_ref, u_ref, w1_ref, b1_ref, w2_ref, b2_ref,
                          spk_ref, z_ref, s1_scr, *, vth, decay):
    """Fused encoder for ONE batch element (grid axis = batch, 'parallel').

    img_ref: [1, F]     firing rates in [0,1]
    u_ref:   [nt, F]    uniform draws
    w1_ref:  [F, N1]    conv1 folded to a dense matrix (N1 = hid*OH1*OW1)
    b1_ref:  [1, N1]    conv1 bias, repeated per output pixel
    w2_ref:  [N1, N2]   conv2 folded to a dense matrix (N2 = lat*ls*ls)
    b2_ref:  [1, N2]
    spk_ref: [nt, F]    output Poisson spike image (loss target)
    z_ref:   [1, N2]    output latent firing rate (already flattened)
    s1_scr:  [nt, N1]   VMEM scratch for layer-1 spikes
    """
    nt = u_ref.shape[0]

    # Poisson (Bernoulli-rate) encoding, all timesteps at once.
    spk = (u_ref[...] < img_ref[...]).astype(jnp.float32)        # [nt, F]
    spk_ref[...] = spk

    # conv1 for all timesteps in one MXU call, then pure-VPU LIF recurrence.
    cur1 = jnp.dot(spk, w1_ref[...],
                   preferred_element_type=jnp.float32) + b1_ref[...]  # [nt, N1]
    n1 = cur1.shape[1]
    v1 = jnp.zeros((1, n1), jnp.float32)
    for t in range(nt):                                          # nt static -> unroll
        v1 = v1 * decay + cur1[t:t + 1, :]
        s1 = (v1 >= vth).astype(jnp.float32)
        v1 = v1 * (1.0 - s1)                                     # hard reset
        s1_scr[t:t + 1, :] = s1

    # conv2 for all timesteps in one MXU call, LIF + firing-rate readout fused.
    cur2 = jnp.dot(s1_scr[...], w2_ref[...],
                   preferred_element_type=jnp.float32) + b2_ref[...]  # [nt, N2]
    n2 = cur2.shape[1]
    v2 = jnp.zeros((1, n2), jnp.float32)
    acc = jnp.zeros((1, n2), jnp.float32)
    for t in range(nt):
        v2 = v2 * decay + cur2[t:t + 1, :]
        s2 = (v2 >= vth).astype(jnp.float32)
        v2 = v2 * (1.0 - s2)
        acc = acc + s2
    z_ref[...] = acc * (1.0 / nt)


def _decoder_kernel(z_ref, w_ref, b_ref, o_ref):
    """Population-coded decoder tile: z @ W[:, tile] + b -> threshold spikes."""
    m = jnp.dot(z_ref[...], w_ref[...], preferred_element_type=jnp.float32)
    o_ref[...] = ((m + b_ref[...]) > 0.0).astype(jnp.float32)


def _van_rossum_kernel(t_ref, p_ref, o_ref, *, dt, td, tr):
    """Differenced double-exp (van Rossum) filter + in-kernel reduction.

    The filter is linear, so dr = r_tgt - r_pred and dh = hr_tgt - hr_pred obey
    the same recurrence driven by (target - predict); accumulate dr**2 summed
    over time, then reduce over sublanes so only a [1,1,128] partial leaves the
    kernel.  Matches the reference update order (r[0] == 0).

    t_ref/p_ref: [nt, rows, 128];  o_ref: [1, 1, 128]
    """
    nt = t_ref.shape[0]
    a_r = 1.0 - dt / tr
    a_h = 1.0 - dt / td
    scale = 1.0 / (tr * td)
    shape = t_ref.shape[1:]                       # (rows, 128) sublane/lane dense
    dr = jnp.zeros(shape, jnp.float32)
    dh = jnp.zeros(shape, jnp.float32)
    acc = jnp.zeros(shape, jnp.float32)
    for t in range(nt):
        dr = dr * a_r + dh * dt
        dh = dh * a_h + (t_ref[t] - p_ref[t]) * scale
        acc = acc + dr * dr
    o_ref[0] = jnp.sum(acc, axis=0, keepdims=True)


# ----------------------------- Pallas wrappers --------------------------------
def encoder_fused(params, img, u, *, nt, vth=VTH, decay=DECAY):
    """img: [B,1,F]; u: [B,nt,F] -> (spikes [B,nt,F], z [B,1,N2])."""
    B = img.shape[0]
    F = img.shape[2]
    n1 = params["w1d"].shape[1]
    n2 = params["w2d"].shape[1]
    kernel = functools.partial(_encoder_fused_kernel, vth=vth, decay=decay)
    return pl.pallas_call(
        kernel,
        out_shape=(jax.ShapeDtypeStruct((B, nt, F), jnp.float32),
                   jax.ShapeDtypeStruct((B, 1, n2), jnp.float32)),
        grid=(B,),
        in_specs=[pl.BlockSpec((None, 1, F), lambda b: (b, 0, 0)),
                  pl.BlockSpec((None, nt, F), lambda b: (b, 0, 0)),
                  pl.BlockSpec((F, n1), lambda b: (0, 0)),       # weights: same
                  pl.BlockSpec((1, n1), lambda b: (0, 0)),       # block every step
                  pl.BlockSpec((n1, n2), lambda b: (0, 0)),      # -> fetched once
                  pl.BlockSpec((1, n2), lambda b: (0, 0))],
        out_specs=(pl.BlockSpec((None, nt, F), lambda b: (b, 0, 0)),
                   pl.BlockSpec((None, 1, n2), lambda b: (b, 0, 0))),
        scratch_shapes=[pltpu.VMEM((nt, n1), jnp.float32)],
        compiler_params=pltpu.CompilerParams(
            dimension_semantics=("parallel",)),                  # 2 TCs on v7x
    )(img, u, params["w1d"], params["b1d"], params["w2d"], params["b2d"])


def decoder_population(z_flat, w, b):
    """z_flat: [B, L]; w: [L, Dout]; b: [Dout] -> thresholded spikes [B, Dout]."""
    B, L = z_flat.shape
    Dout = w.shape[1]
    # 2 lane-dense tiles: negligible step overhead on single-TC v5e/v6e, and a
    # "parallel" axis both v7x TensorCores can pick up.  Weight slab stays well
    # under every generation's VMEM budget (v7x: 64 MiB physical).
    n_tiles = 2 if Dout % 256 == 0 else 1
    tn = Dout // n_tiles
    return pl.pallas_call(
        _decoder_kernel,
        out_shape=jax.ShapeDtypeStruct((B, Dout), jnp.float32),
        grid=(n_tiles,),
        in_specs=[pl.BlockSpec((B, L), lambda j: (0, 0)),
                  pl.BlockSpec((L, tn), lambda j: (0, j)),
                  pl.BlockSpec((1, tn), lambda j: (0, j))],
        out_specs=pl.BlockSpec((B, tn), lambda j: (0, j)),
        compiler_params=pltpu.CompilerParams(
            dimension_semantics=("parallel",)),
    )(z_flat, w, b.reshape(1, Dout))


def van_rossum_loss(target_spike, predict_spike, dt=DT, td=TD, tr=TR):
    """double_exp_filter both trains, squared error, sum over time & channel, mean."""
    nt, B, C, H, W = target_spike.shape
    N = B * C * H * W
    assert N % 128 == 0
    sub = N // 128
    n_tiles = 2 if (sub % 2 == 0 and (sub // 2) % 8 == 0) else 1
    rows = sub // n_tiles
    tgt = target_spike.reshape(nt, sub, 128).astype(jnp.float32)
    prd = predict_spike.reshape(nt, sub, 128).astype(jnp.float32)
    kernel = functools.partial(_van_rossum_kernel, dt=dt, td=td, tr=tr)
    partial = pl.pallas_call(
        kernel,
        out_shape=jax.ShapeDtypeStruct((n_tiles, 1, 128), jnp.float32),
        grid=(n_tiles,),
        in_specs=[pl.BlockSpec((nt, rows, 128), lambda j: (0, j, 0)),
                  pl.BlockSpec((nt, rows, 128), lambda j: (0, j, 0))],
        out_specs=pl.BlockSpec((1, 1, 128), lambda j: (j, 0, 0)),
        compiler_params=pltpu.CompilerParams(
            dimension_semantics=("parallel",)),
    )(tgt, prd)
    # loss = sum_{t,c} dr^2 then mean over (batch, H, W)
    return jnp.sum(partial) / (B * H * W)


# ----------------------------- param preprocessing -----------------------------
def _conv_to_dense(w, b, H, W, stride=2, pad=1):
    """Fold a stride-2 3x3 conv into a dense matrix (done once at init).

    w: [Cout, Cin, K, K]; b: [Cout]
    returns dense [Cin*H*W, Cout*OH*OW], bias [1, Cout*OH*OW], OH, OW
    (input flattened as (c,h,w), output flattened as (cout,oh,ow) - matches NCHW
    flatten order used by the PyTorch module).
    """
    w = np.asarray(w, np.float32)
    b = np.asarray(b, np.float32)
    Cout, Cin, K, _ = w.shape
    OH = (H + 2 * pad - K) // stride + 1
    OW = (W + 2 * pad - K) // stride + 1
    dense = np.zeros((Cin * H * W, Cout * OH * OW), np.float32)
    for o in range(Cout):
        for c in range(Cin):
            for ki in range(K):
                for kj in range(K):
                    for oh in range(OH):
                        h = oh * stride - pad + ki
                        if not (0 <= h < H):
                            continue
                        for ow in range(OW):
                            wc = ow * stride - pad + kj
                            if not (0 <= wc < W):
                                continue
                            dense[c * H * W + h * W + wc,
                                  o * OH * OW + oh * OW + ow] = w[o, c, ki, kj]
    bias = np.repeat(b, OH * OW).reshape(1, Cout * OH * OW)
    return jnp.asarray(dense), jnp.asarray(bias), OH, OW


def init_params(key, in_ch, H, W, hidden_ch, latent_ch, nt):
    k1, k2, k3 = jax.random.split(key, 3)
    w1 = jax.random.normal(k1, (hidden_ch, in_ch, 3, 3), jnp.float32) * 0.6
    b1 = jnp.zeros((hidden_ch,), jnp.float32)
    w2 = jax.random.normal(k2, (latent_ch, hidden_ch, 3, 3), jnp.float32) * 0.4
    b2 = jnp.zeros((latent_ch,), jnp.float32)

    # TODO(synk): dense conv folding trades FLOPs for fusion; at much larger
    #             image sizes switch back to an in-kernel strided patch gather.
    w1d, b1d, OH1, OW1 = _conv_to_dense(w1, b1, H, W)
    w2d, b2d, ls, _ = _conv_to_dense(w2, b2, OH1, OW1)

    latent_dim = latent_ch * ls * ls
    dec_out = nt * in_ch * H * W
    params = {
        "w1d": w1d, "b1d": b1d,
        "w2d": w2d, "b2d": b2d,
        "w_dec": jax.random.normal(k3, (latent_dim, dec_out), jnp.float32) * 0.5,
        "b_dec": jnp.zeros((dec_out,), jnp.float32),
    }
    return params, ls


# ----------------------------- forward -----------------------------------------
def img_csnn_ae_v3_forward(params, img, key, *, nt=NT):
    """Mirrors ImgCSNNAEv3.forward: returns (predict_spike, spike_img, z_flat)."""
    B, C, H, W = img.shape
    F = C * H * W
    n2 = params["w2d"].shape[1]

    img3 = img.reshape(B, 1, F).astype(jnp.float32)
    # TODO(synk): on a real-TPU-only build, pltpu.prng_seed/prng_random_bits
    #             inside the fused kernel would remove this uniform tensor's HBM
    #             round-trip; kept jax.random for interpret-mode compatibility.
    u = jax.random.uniform(key, (B, nt, F), jnp.float32)

    # ---- fused encoder: Poisson -> conv-LIF x2 -> latent firing rate ----
    spk, z3 = encoder_fused(params, img3, u, nt=nt)
    spike_img = spk.transpose(1, 0, 2).reshape(nt, B, C, H, W)
    z_flat = z3.reshape(B, n2)                                   # flatten(z)

    # ---- decoder v3: population-coded linear readout -> threshold spikes ----
    # TODO(synk): decoder weight columns assumed time-major; must match the real
    #             ImgCSNNDecoderv3 ordering if bit-matching the reference.
    dec = decoder_population(z_flat, params["w_dec"], params["b_dec"])
    predict_spike = dec.reshape(B, nt, C, H, W).transpose(1, 0, 2, 3, 4)

    return predict_spike, spike_img, z_flat


# ----------------------------- main -------------------------------------------
if __name__ == "__main__":
    key = jax.random.PRNGKey(0)
    k_img, k_par, k_enc = jax.random.split(key, 3)

    B, C, H, W = 2, 4, 16, 16
    hidden_ch, latent_ch = 8, 4

    img = jax.random.uniform(k_img, (B, C, H, W), jnp.float32)    # rates in [0,1]
    params, ls = init_params(k_par, C, H, W, hidden_ch, latent_ch, NT)

    fwd = jax.jit(img_csnn_ae_v3_forward)
    predict_spike, spike_img, z_flat = fwd(params, img, k_enc)
    loss = jax.jit(van_rossum_loss)(spike_img, predict_spike)

    jax.block_until_ready((predict_spike, spike_img, z_flat, loss))

    assert predict_spike.shape == (NT, B, C, H, W)
    assert spike_img.shape == (NT, B, C, H, W)
    assert z_flat.shape == (B, latent_ch * ls * ls)
    assert bool(jnp.isfinite(loss))

    print("KERNEL_OK")
</pallas_src>

<mosaic_0001>
module attributes {stable_mosaic.version = 11 : i64} {
  func.func @_decoder_kernel(%arg0: i32, %arg1: memref<2x64xf32, #tpu.memory_space<vmem>>, %arg2: memref<64x4096xf32, #tpu.memory_space<vmem>>, %arg3: memref<1x4096xf32, #tpu.memory_space<vmem>>, %arg4: memref<2x4096xf32, #tpu.memory_space<vmem>>) attributes {dimension_semantics = [#tpu.dimension_semantics<parallel>], iteration_bounds = array<i64: 2>, scalar_prefetch = 0 : i64, scratch_operands = 0 : i64, tpu.core_type = #tpu.core_type<tc>, window_params = [{pipeline_mode = #tpu.pipeline_mode<synchronous>, transform_indices = @transform_0, window_bounds = array<i64: 2, 64>}, {transform_indices = @transform_1, window_bounds = array<i64: 64, 4096>}, {transform_indices = @transform_2, window_bounds = array<i64: 1, 4096>}, {transform_indices = @transform_3, window_bounds = array<i64: 2, 4096>}]} {
    %c0 = arith.constant 0 : index
    %c0_0 = arith.constant 0 : index
    %0 = vector.load %arg1[%c0, %c0_0] : memref<2x64xf32, #tpu.memory_space<vmem>>, vector<2x64xf32>
    %c0_1 = arith.constant 0 : index
    %c0_2 = arith.constant 0 : index
    %1 = vector.load %arg2[%c0_1, %c0_2] : memref<64x4096xf32, #tpu.memory_space<vmem>>, vector<64x4096xf32>
    %cst = arith.constant dense<0.000000e+00> : vector<2x4096xf32>
    %2 = tpu.matmul %0, %1, %cst {dimension_numbers = #tpu.dot_dimension_numbers<[1], [0], [0], [1], [0, 0, 1, 1], [], []>} : vector<2x64xf32>, vector<64x4096xf32>, vector<2x4096xf32> -> vector<2x4096xf32>
    %c0_3 = arith.constant 0 : index
    %c0_4 = arith.constant 0 : index
    %3 = vector.load %arg3[%c0_3, %c0_4] : memref<1x4096xf32, #tpu.memory_space<vmem>>, vector<1x4096xf32>
    %4 = vector.broadcast %3 : vector<1x4096xf32> to vector<2x4096xf32>
    %5 = arith.addf %2, %4 : vector<2x4096xf32>
    %cst_5 = arith.constant 0.000000e+00 : f32
    %6 = vector.broadcast %cst_5 : f32 to vector<2x4096xf32>
    %7 = arith.cmpf ogt, %5, %6 : vector<2x4096xf32>
    %8 = arith.extui %7 : vector<2x4096xi1> to vector<2x4096xi32>
    %9 = arith.sitofp %8 : vector<2x4096xi32> to vector<2x4096xf32>
    %c0_6 = arith.constant 0 : index
    %c0_7 = arith.constant 0 : index
    %10 = vector.load %arg4[%c0_6, %c0_7] : memref<2x4096xf32, #tpu.memory_space<vmem>>, vector<2x4096xf32>
    tpu.vector_store %arg4[%c0_6, %c0_7], %9 {strides = array<i32>} : memref<2x4096xf32, #tpu.memory_space<vmem>>, vector<2x4096xf32>,
    return
  }
  func.func @transform_0(%arg0: i32) -> (i32, i32) {
    %c0_i32 = arith.constant 0 : i32
    %c0_i32_0 = arith.constant 0 : i32
    %c0_i32_1 = arith.constant 0 : i32
    return %c0_i32, %c0_i32_0 : i32, i32
  }
  func.func @transform_1(%arg0: i32) -> (i32, i32) {
    %c0_i32 = arith.constant 0 : i32
    %c0_i32_0 = arith.constant 0 : i32
    return %c0_i32, %arg0 : i32, i32
  }
  func.func @transform_2(%arg0: i32) -> (i32, i32) {
    %c0_i32 = arith.constant 0 : i32
    %c0_i32_0 = arith.constant 0 : i32
    return %c0_i32, %arg0 : i32, i32
  }
  func.func @transform_3(%arg0: i32) -> (i32, i32) {
    %c0_i32 = arith.constant 0 : i32
    %c0_i32_0 = arith.constant 0 : i32
    return %c0_i32, %arg0 : i32, i32
  }
}

module attributes {stable_mosaic.version = 11 : i64} {
  func.func @_encoder_fused_kernel(%arg0: i32, %arg1: memref<1x1x1024xf32, #tpu.memory_space<vmem>>, %arg2: memref<1x8x1024xf32, #tpu.memory_space<vmem>>, %arg3: memref<1024x512xf32, #tpu.memory_space<vmem>>, %arg4: memref<1x512xf32, #tpu.memory_space<vmem>>, %arg5: memref<512x64xf32, #tpu.memory_space<vmem>>, %arg6: memref<1x64xf32, #tpu.memory_space<vmem>>, %arg7: memref<1x8x1024xf32, #tpu.memory_space<vmem>>, %arg8: memref<1x1x64xf32, #tpu.memory_space<vmem>>, %arg9: memref<8x512xf32, #tpu.memory_space<vmem>>) attributes {dimension_semantics = [#tpu.dimension_semantics<parallel>], iteration_bounds = array<i64: 2>, scalar_prefetch = 0 : i64, scratch_operands = 1 : i64, tpu.core_type = #tpu.core_type<tc>, window_params = [{transform_indices = @transform_0, window_bounds = array<i64: 1, 1, 1024>}, {transform_indices = @transform_1, window_bounds = array<i64: 1, 8, 1024>}, {pipeline_mode = #tpu.pipeline_mode<synchronous>, transform_indices = @transform_2, window_bounds = array<i64: 1024, 512>}, {pipeline_mode = #tpu.pipeline_mode<synchronous>, transform_indices = @transform_3, window_bounds = array<i64: 1, 512>}, {pipeline_mode = #tpu.pipeline_mode<synchronous>, transform_indices = @transform_4, window_bounds = array<i64: 512, 64>}, {pipeline_mode = #tpu.pipeline_mode<synchronous>, transform_indices = @transform_5, window_bounds = array<i64: 1, 64>}, {transform_indices = @transform_6, window_bounds = array<i64: 1, 8, 1024>}, {transform_indices = @transform_7, window_bounds = array<i64: 1, 1, 64>}]} {
    %c0 = arith.constant 0 : index
    %c0_0 = arith.constant 0 : index
    %c0_1 = arith.constant 0 : index
    %0 = vector.load %arg2[%c0, %c0_0, %c0_1] : memref<1x8x1024xf32, #tpu.memory_space<vmem>>, vector<1x8x1024xf32>
    %1 = vector.shape_cast %0 : vector<1x8x1024xf32> to vector<8x1024xf32>
    %c0_2 = arith.constant 0 : index
    %c0_3 = arith.constant 0 : index
    %c0_4 = arith.constant 0 : index
    %2 = vector.load %arg1[%c0_2, %c0_3, %c0_4] : memref<1x1x1024xf32, #tpu.memory_space<vmem>>, vector<1x1x1024xf32>
    %3 = vector.shape_cast %2 : vector<1x1x1024xf32> to vector<1x1024xf32>
    %4 = vector.broadcast %3 : vector<1x1024xf32> to vector<8x1024xf32>
    %5 = arith.cmpf olt, %1, %4 : vector<8x1024xf32>
    %6 = arith.extui %5 : vector<8x1024xi1> to vector<8x1024xi32>
    %7 = arith.sitofp %6 : vector<8x1024xi32> to vector<8x1024xf32>
    %c0_5 = arith.constant 0 : index
    %c0_6 = arith.constant 0 : index
    %c0_7 = arith.constant 0 : index
    %8 = vector.load %arg7[%c0_5, %c0_6, %c0_7] : memref<1x8x1024xf32, #tpu.memory_space<vmem>>, vector<1x8x1024xf32>
    %9 = vector.shape_cast %8 : vector<1x8x1024xf32> to vector<8x1024xf32>
    %10 = vector.shape_cast %7 : vector<8x1024xf32> to vector<1x8x1024xf32>
    tpu.vector_store %arg7[%c0_5, %c0_6, %c0_7], %10 {strides = array<i32>} : memref<1x8x1024xf32, #tpu.memory_space<vmem>>, vector<1x8x1024xf32>,
    %c0_8 = arith.constant 0 : index
    %c0_9 = arith.constant 0 : index
    %11 = vector.load %arg3[%c0_8, %c0_9] : memref<1024x512xf32, #tpu.memory_space<vmem>>, vector<1024x512xf32>
    %cst = arith.constant dense<0.000000e+00> : vector<8x512xf32>
    %12 = tpu.matmul %7, %11, %cst {dimension_numbers = #tpu.dot_dimension_numbers<[1], [0], [0], [1], [0, 0, 1, 1], [], []>} : vector<8x1024xf32>, vector<1024x512xf32>, vector<8x512xf32> -> vector<8x512xf32>
    %c0_10 = arith.constant 0 : index
    %c0_11 = arith.constant 0 : index
    %13 = vector.load %arg4[%c0_10, %c0_11] : memref<1x512xf32, #tpu.memory_space<vmem>>, vector<1x512xf32>
    %14 = vector.broadcast %13 : vector<1x512xf32> to vector<8x512xf32>
    %15 = arith.addf %12, %14 : vector<8x512xf32>
    %cst_12 = arith.constant 0.000000e+00 : f32
    %16 = vector.broadcast %cst_12 : f32 to vector<1x512xf32>
    %cst_13 = arith.constant 0.899999976 : f32
    %17 = vector.broadcast %cst_13 : f32 to vector<1x512xf32>
    %18 = arith.mulf %16, %17 : vector<1x512xf32>
    %19 = vector.extract_strided_slice %15 {offsets = [0, 0], sizes = [1, 512], strides = [1, 1]} : vector<8x512xf32> to vector<1x512xf32>
    %20 = arith.addf %18, %19 : vector<1x512xf32>
    %cst_14 = arith.constant 5.000000e-01 : f32
    %21 = vector.broadcast %cst_14 : f32 to vector<1x512xf32>
    %22 = arith.cmpf oge, %20, %21 : vector<1x512xf32>
    %23 = arith.extui %22 : vector<1x512xi1> to vector<1x512xi32>
    %24 = arith.sitofp %23 : vector<1x512xi32> to vector<1x512xf32>
    %cst_15 = arith.constant 1.000000e+00 : f32
    %25 = vector.broadcast %cst_15 : f32 to vector<1x512xf32>
    %26 = arith.subf %25, %24 : vector<1x512xf32>
    %27 = arith.mulf %20, %26 : vector<1x512xf32>
    %c0_16 = arith.constant 0 : index
    %c0_17 = arith.constant 0 : index
    %28 = vector.load %arg9[%c0_16, %c0_17] : memref<8x512xf32, #tpu.memory_space<vmem>>, vector<1x512xf32>
    tpu.vector_store %arg9[%c0_16, %c0_17], %24 {strides = array<i32>} : memref<8x512xf32, #tpu.memory_space<vmem>>, vector<1x512xf32>,
    %cst_18 = arith.constant 0.899999976 : f32
    %29 = vector.broadcast %cst_18 : f32 to vector<1x512xf32>
    %30 = arith.mulf %27, %29 : vector<1x512xf32>
    %31 = vector.extract_strided_slice %15 {offsets = [1, 0], sizes = [1, 512], strides = [1, 1]} : vector<8x512xf32> to vector<1x512xf32>
    %32 = arith.addf %30, %31 : vector<1x512xf32>
    %cst_19 = arith.constant 5.000000e-01 : f32
    %33 = vector.broadcast %cst_19 : f32 to vector<1x512xf32>
    %34 = arith.cmpf oge, %32, %33 : vector<1x512xf32>
    %35 = arith.extui %34 : vector<1x512xi1> to vector<1x512xi32>
    %36 = arith.sitofp %35 : vector<1x512xi32> to vector<1x512xf32>
    %cst_20 = arith.constant 1.000000e+00 : f32
    %37 = vector.broadcast %cst_20 : f32 to vector<1x512xf32>
    %38 = arith.subf %37, %36 : vector<1x512xf32>
    %39 = arith.mulf %32, %38 : vector<1x512xf32>
    %c1 = arith.constant 1 : index
    %c0_21 = arith.constant 0 : index
    %40 = vector.load %arg9[%c1, %c0_21] : memref<8x512xf32, #tpu.memory_space<vmem>>, vector<1x512xf32>
    tpu.vector_store %arg9[%c1, %c0_21], %36 {strides = array<i32>} : memref<8x512xf32, #tpu.memory_space<vmem>>, vector<1x512xf32>,
    %cst_22 = arith.constant 0.899999976 : f32
    %41 = vector.broadcast %cst_22 : f32 to vector<1x512xf32>
    %42 = arith.mulf %39, %41 : vector<1x512xf32>
    %43 = vector.extract_strided_slice %15 {offsets = [2, 0], sizes = [1, 512], strides = [1, 1]} : vector<8x512xf32> to vector<1x512xf32>
    %44 = arith.addf %42, %43 : vector<1x512xf32>
    %cst_23 = arith.constant 5.000000e-01 : f32
    %45 = vector.broadcast %cst_23 : f32 to vector<1x512xf32>
    %46 = arith.cmpf oge, %44, %45 : vector<1x512xf32>
    %47 = arith.extui %46 : vector<1x512xi1> to vector<1x512xi32>
    %48 = arith.sitofp %47 : vector<1x512xi32> to vector<1x512xf32>
    %cst_24 = arith.constant 1.000000e+00 : f32
    %49 = vector.broadcast %cst_24 : f32 to vector<1x512xf32>
    %50 = arith.subf %49, %48 : vector<1x512xf32>
    %51 = arith.mulf %44, %50 : vector<1x512xf32>
    %c2 = arith.constant 2 : index
    %c0_25 = arith.constant 0 : index
    %52 = vector.load %arg9[%c2, %c0_25] : memref<8x512xf32, #tpu.memory_space<vmem>>, vector<1x512xf32>
    tpu.vector_store %arg9[%c2, %c0_25], %48 {strides = array<i32>} : memref<8x512xf32, #tpu.memory_space<vmem>>, vector<1x512xf32>,
    %cst_26 = arith.constant 0.899999976 : f32
    %53 = vector.broadcast %cst_26 : f32 to vector<1x512xf32>
    %54 = arith.mulf %51, %53 : vector<1x512xf32>
    %55 = vector.extract_strided_slice %15 {offsets = [3, 0], sizes = [1, 512], strides = [1, 1]} : vector<8x512xf32> to vector<1x512xf32>
    %56 = arith.addf %54, %55 : vector<1x512xf32>
    %cst_27 = arith.constant 5.000000e-01 : f32
    %57 = vector.broadcast %cst_27 : f32 to vector<1x512xf32>
    %58 = arith.cmpf oge, %56, %57 : vector<1x512xf32>
    %59 = arith.extui %58 : vector<1x512xi1> to vector<1x512xi32>
    %60 = arith.sitofp %59 : vector<1x512xi32> to vector<1x512xf32>
    %cst_28 = arith.constant 1.000000e+00 : f32
    %61 = vector.broadcast %cst_28 : f32 to vector<1x512xf32>
    %62 = arith.subf %61, %60 : vector<1x512xf32>
    %63 = arith.mulf %56, %62 : vector<1x512xf32>
    %c3 = arith.constant 3 : index
    %c0_29 = arith.constant 0 : index
    %64 = vector.load %arg9[%c3, %c0_29] : memref<8x512xf32, #tpu.memory_space<vmem>>, vector<1x512xf32>
    tpu.vector_store %arg9[%c3, %c0_29], %60 {strides = array<i32>} : memref<8x512xf32, #tpu.memory_space<vmem>>, vector<1x512xf32>,
    %cst_30 = arith.constant 0.899999976 : f32
    %65 = vector.broadcast %cst_30 : f32 to vector<1x512xf32>
    %66 = arith.mulf %63, %65 : vector<1x512xf32>
    %67 = vector.extract_strided_slice %15 {offsets = [4, 0], sizes = [1, 512], strides = [1, 1]} : vector<8x512xf32> to vector<1x512xf32>
    %68 = arith.addf %66, %67 : vector<1x512xf32>
    %cst_31 = arith.constant 5.000000e-01 : f32
    %69 = vector.broadcast %cst_31 : f32 to vector<1x512xf32>
    %70 = arith.cmpf oge, %68, %69 : vector<1x512xf32>
    %71 = arith.extui %70 : vector<1x512xi1> to vector<1x512xi32>
    %72 = arith.sitofp %71 : vector<1x512xi32> to vector<1x512xf32>
    %cst_32 = arith.constant 1.000000e+00 : f32
    %73 = vector.broadcast %cst_32 : f32 to vector<1x512xf32>
    %74 = arith.subf %73, %72 : vector<1x512xf32>
    %75 = arith.mulf %68, %74 : vector<1x512xf32>
    %c4 = arith.constant 4 : index
    %c0_33 = arith.constant 0 : index
    %76 = vector.load %arg9[%c4, %c0_33] : memref<8x512xf32, #tpu.memory_space<vmem>>, vector<1x512xf32>
    tpu.vector_store %arg9[%c4, %c0_33], %72 {strides = array<i32>} : memref<8x512xf32, #tpu.memory_space<vmem>>, vector<1x512xf32>,
    %cst_34 = arith.constant 0.899999976 : f32
    %77 = vector.broadcast %cst_34 : f32 to vector<1x512xf32>
    %78 = arith.mulf %75, %77 : vector<1x512xf32>
    %79 = vector.extract_strided_slice %15 {offsets = [5, 0], sizes = [1, 512], strides = [1, 1]} : vector<8x512xf32> to vector<1x512xf32>
    %80 = arith.addf %78, %79 : vector<1x512xf32>
    %cst_35 = arith.constant 5.000000e-01 : f32
    %81 = vector.broadcast %cst_35 : f32 to vector<1x512xf32>
    %82 = arith.cmpf oge, %80, %81 : vector<1x512xf32>
    %83 = arith.extui %82 : vector<1x512xi1> to vector<1x512xi32>
    %84 = arith.sitofp %83 : vector<1x512xi32> to vector<1x512xf32>
    %cst_36 = arith.constant 1.000000e+00 : f32
    %85 = vector.broadcast %cst_36 : f32 to vector<1x512xf32>
    %86 = arith.subf %85, %84 : vector<1x512xf32>
    %87 = arith.mulf %80, %86 : vector<1x512xf32>
    %c5 = arith.constant 5 : index
    %c0_37 = arith.constant 0 : index
    %88 = vector.load %arg9[%c5, %c0_37] : memref<8x512xf32, #tpu.memory_space<vmem>>, vector<1x512xf32>
    tpu.vector_store %arg9[%c5, %c0_37], %84 {strides = array<i32>} : memref<8x512xf32, #tpu.memory_space<vmem>>, vector<1x512xf32>,
    %cst_38 = arith.constant 0.899999976 : f32
    %89 = vector.broadcast %cst_38 : f32 to vector<1x512xf32>
    %90 = arith.mulf %87, %89 : vector<1x512xf32>
    %91 = vector.extract_strided_slice %15 {offsets = [6, 0], sizes = [1, 512], strides = [1, 1]} : vector<8x512xf32> to vector<1x512xf32>
    %92 = arith.addf %90, %91 : vector<1x512xf32>
    %cst_39 = arith.constant 5.000000e-01 : f32
    %93 = vector.broadcast %cst_39 : f32 to vector<1x512xf32>
    %94 = arith.cmpf oge, %92, %93 : vector<1x512xf32>
    %95 = arith.extui %94 : vector<1x512xi1> to vector<1x512xi32>
    %96 = arith.sitofp %95 : vector<1x512xi32> to vector<1x512xf32>
    %cst_40 = arith.constant 1.000000e+00 : f32
    %97 = vector.broadcast %cst_40 : f32 to vector<1x512xf32>
    %98 = arith.subf %97, %96 : vector<1x512xf32>
    %99 = arith.mulf %92, %98 : vector<1x512xf32>
    %c6 = arith.constant 6 : index
    %c0_41 = arith.constant 0 : index
    %100 = vector.load %arg9[%c6, %c0_41] : memref<8x512xf32, #tpu.memory_space<vmem>>, vector<1x512xf32>
    tpu.vector_store %arg9[%c6, %c0_41], %96 {strides = array<i32>} : memref<8x512xf32, #tpu.memory_space<vmem>>, vector<1x512xf32>,
    %cst_42 = arith.constant 0.899999976 : f32
    %101 = vector.broadcast %cst_42 : f32 to vector<1x512xf32>
    %102 = arith.mulf %99, %101 : vector<1x512xf32>
    %103 = vector.extract_strided_slice %15 {offsets = [7, 0], sizes = [1, 512], strides = [1, 1]} : vector<8x512xf32> to vector<1x512xf32>
    %104 = arith.addf %102, %103 : vector<1x512xf32>
    %cst_43 = arith.constant 5.000000e-01 : f32
    %105 = vector.broadcast %cst_43 : f32 to vector<1x512xf32>
    %106 = arith.cmpf oge, %104, %105 : vector<1x512xf32>
    %107 = arith.extui %106 : vector<1x512xi1> to vector<1x512xi32>
    %108 = arith.sitofp %107 : vector<1x512xi32> to vector<1x512xf32>
    %c7 = arith.constant 7 : index
    %c0_44 = arith.constant 0 : index
    %109 = vector.load %arg9[%c7, %c0_44] : memref<8x512xf32, #tpu.memory_space<vmem>>, vector<1x512xf32>
    tpu.vector_store %arg9[%c7, %c0_44], %108 {strides = array<i32>} : memref<8x512xf32, #tpu.memory_space<vmem>>, vector<1x512xf32>,
    %c0_45 = arith.constant 0 : index
    %c0_46 = arith.constant 0 : index
    %110 = vector.load %arg9[%c0_45, %c0_46] : memref<8x512xf32, #tpu.memory_space<vmem>>, vector<8x512xf32>
    %c0_47 = arith.constant 0 : index
    %c0_48 = arith.constant 0 : index
    %111 = vector.load %arg5[%c0_47, %c0_48] : memref<512x64xf32, #tpu.memory_space<vmem>>, vector<512x64xf32>
    %cst_49 = arith.constant dense<0.000000e+00> : vector<8x64xf32>
    %112 = tpu.matmul %110, %111, %cst_49 {dimension_numbers = #tpu.dot_dimension_numbers<[1], [0], [0], [1], [0, 0, 1, 1], [], []>} : vector<8x512xf32>, vector<512x64xf32>, vector<8x64xf32> -> vector<8x64xf32>
    %c0_50 = arith.constant 0 : index
    %c0_51 = arith.constant 0 : index
    %113 = vector.load %arg6[%c0_50, %c0_51] : memref<1x64xf32, #tpu.memory_space<vmem>>, vector<1x64xf32>
    %114 = vector.broadcast %113 : vector<1x64xf32> to vector<8x64xf32>
    %115 = arith.addf %112, %114 : vector<8x64xf32>
    %cst_52 = arith.constant 0.000000e+00 : f32
    %116 = vector.broadcast %cst_52 : f32 to vector<1x64xf32>
    %cst_53 = arith.constant 0.000000e+00 : f32
    %117 = vector.broadcast %cst_53 : f32 to vector<1x64xf32>
    %cst_54 = arith.constant 0.899999976 : f32
    %118 = vector.broadcast %cst_54 : f32 to vector<1x64xf32>
    %119 = arith.mulf %116, %118 : vector<1x64xf32>
    %120 = vector.extract_strided_slice %115 {offsets = [0, 0], sizes = [1, 64], strides = [1, 1]} : vector<8x64xf32> to vector<1x64xf32>
    %121 = arith.addf %119, %120 : vector<1x64xf32>
    %cst_55 = arith.constant 5.000000e-01 : f32
    %122 = vector.broadcast %cst_55 : f32 to vector<1x64xf32>
    %123 = arith.cmpf oge, %121, %122 : vector<1x64xf32>
    %124 = arith.extui %123 : vector<1x64xi1> to vector<1x64xi32>
    %125 = arith.sitofp %124 : vector<1x64xi32> to vector<1x64xf32>
    %cst_56 = arith.constant 1.000000e+00 : f32
    %126 = vector.broadcast %cst_56 : f32 to vector<1x64xf32>
    %127 = arith.subf %126, %125 : vector<1x64xf32>
    %128 = arith.mulf %121, %127 : vector<1x64xf32>
    %129 = arith.addf %117, %125 : vector<1x64xf32>
    %cst_57 = arith.constant 0.899999976 : f32
    %130 = vector.broadcast %cst_57 : f32 to vector<1x64xf32>
    %131 = arith.mulf %128, %130 : vector<1x64xf32>
    %132 = vector.extract_strided_slice %115 {offsets = [1, 0], sizes = [1, 64], strides = [1, 1]} : vector<8x64xf32> to vector<1x64xf32>
    %133 = arith.addf %131, %132 : vector<1x64xf32>
    %cst_58 = arith.constant 5.000000e-01 : f32
    %134 = vector.broadcast %cst_58 : f32 to vector<1x64xf32>
    %135 = arith.cmpf oge, %133, %134 : vector<1x64xf32>
    %136 = arith.extui %135 : vector<1x64xi1> to vector<1x64xi32>
    %137 = arith.sitofp %136 : vector<1x64xi32> to vector<1x64xf32>
    %cst_59 = arith.constant 1.000000e+00 : f32
    %138 = vector.broadcast %cst_59 : f32 to vector<1x64xf32>
    %139 = arith.subf %138, %137 : vector<1x64xf32>
    %140 = arith.mulf %133, %139 : vector<1x64xf32>
    %141 = arith.addf %129, %137 : vector<1x64xf32>
    %cst_60 = arith.constant 0.899999976 : f32
    %142 = vector.broadcast %cst_60 : f32 to vector<1x64xf32>
    %143 = arith.mulf %140, %142 : vector<1x64xf32>
    %144 = vector.extract_strided_slice %115 {offsets = [2, 0], sizes = [1, 64], strides = [1, 1]} : vector<8x64xf32> to vector<1x64xf32>
    %145 = arith.addf %143, %144 : vector<1x64xf32>
    %cst_61 = arith.constant 5.000000e-01 : f32
    %146 = vector.broadcast %cst_61 : f32 to vector<1x64xf32>
    %147 = arith.cmpf oge, %145, %146 : vector<1x64xf32>
    %148 = arith.extui %147 : vector<1x64xi1> to vector<1x64xi32>
    %149 = arith.sitofp %148 : vector<1x64xi32> to vector<1x64xf32>
    %cst_62 = arith.constant 1.000000e+00 : f32
    %150 = vector.broadcast %cst_62 : f32 to vector<1x64xf32>
    %151 = arith.subf %150, %149 : vector<1x64xf32>
    %152 = arith.mulf %145, %151 : vector<1x64xf32>
    %153 = arith.addf %141, %149 : vector<1x64xf32>
    %cst_63 = arith.constant 0.899999976 : f32
    %154 = vector.broadcast %cst_63 : f32 to vector<1x64xf32>
    %155 = arith.mulf %152, %154 : vector<1x64xf32>
    %156 = vector.extract_strided_slice %115 {offsets = [3, 0], sizes = [1, 64], strides = [1, 1]} : vector<8x64xf32> to vector<1x64xf32>
    %157 = arith.addf %155, %156 : vector<1x64xf32>
    %cst_64 = arith.constant 5.000000e-01 : f32
    %158 = vector.broadcast %cst_64 : f32 to vector<1x64xf32>
    %159 = arith.cmpf oge, %157, %158 : vector<1x64xf32>
    %160 = arith.extui %159 : vector<1x64xi1> to vector<1x64xi32>
    %161 = arith.sitofp %160 : vector<1x64xi32> to vector<1x64xf32>
    %cst_65 = arith.constant 1.000000e+00 : f32
    %162 = vector.broadcast %cst_65 : f32 to vector<1x64xf32>
    %163 = arith.subf %162, %161 : vector<1x64xf32>
    %164 = arith.mulf %157, %163 : vector<1x64xf32>
    %165 = arith.addf %153, %161 : vector<1x64xf32>
    %cst_66 = arith.constant 0.899999976 : f32
    %166 = vector.broadcast %cst_66 : f32 to vector<1x64xf32>
    %167 = arith.mulf %164, %166 : vector<1x64xf32>
    %168 = vector.extract_strided_slice %115 {offsets = [4, 0], sizes = [1, 64], strides = [1, 1]} : vector<8x64xf32> to vector<1x64xf32>
    %169 = arith.addf %167, %168 : vector<1x64xf32>
    %cst_67 = arith.constant 5.000000e-01 : f32
    %170 = vector.broadcast %cst_67 : f32 to vector<1x64xf32>
    %171 = arith.cmpf oge, %169, %170 : vector<1x64xf32>
    %172 = arith.extui %171 : vector<1x64xi1> to vector<1x64xi32>
    %173 = arith.sitofp %172 : vector<1x64xi32> to vector<1x64xf32>
    %cst_68 = arith.constant 1.000000e+00 : f32
    %174 = vector.broadcast %cst_68 : f32 to vector<1x64xf32>
    %175 = arith.subf %174, %173 : vector<1x64xf32>
    %176 = arith.mulf %169, %175 : vector<1x64xf32>
    %177 = arith.addf %165, %173 : vector<1x64xf32>
    %cst_69 = arith.constant 0.899999976 : f32
    %178 = vector.broadcast %cst_69 : f32 to vector<1x64xf32>
    %179 = arith.mulf %176, %178 : vector<1x64xf32>
    %180 = vector.extract_strided_slice %115 {offsets = [5, 0], sizes = [1, 64], strides = [1, 1]} : vector<8x64xf32> to vector<1x64xf32>
    %181 = arith.addf %179, %180 : vector<1x64xf32>
    %cst_70 = arith.constant 5.000000e-01 : f32
    %182 = vector.broadcast %cst_70 : f32 to vector<1x64xf32>
    %183 = arith.cmpf oge, %181, %182 : vector<1x64xf32>
    %184 = arith.extui %183 : vector<1x64xi1> to vector<1x64xi32>
    %185 = arith.sitofp %184 : vector<1x64xi32> to vector<1x64xf32>
    %cst_71 = arith.constant 1.000000e+00 : f32
    %186 = vector.broadcast %cst_71 : f32 to vector<1x64xf32>
    %187 = arith.subf %186, %185 : vector<1x64xf32>
    %188 = arith.mulf %181, %187 : vector<1x64xf32>
    %189 = arith.addf %177, %185 : vector<1x64xf32>
    %cst_72 = arith.constant 0.899999976 : f32
    %190 = vector.broadcast %cst_72 : f32 to vector<1x64xf32>
    %191 = arith.mulf %188, %190 : vector<1x64xf32>
    %192 = vector.extract_strided_slice %115 {offsets = [6, 0], sizes = [1, 64], strides = [1, 1]} : vector<8x64xf32> to vector<1x64xf32>
    %193 = arith.addf %191, %192 : vector<1x64xf32>
    %cst_73 = arith.constant 5.000000e-01 : f32
    %194 = vector.broadcast %cst_73 : f32 to vector<1x64xf32>
    %195 = arith.cmpf oge, %193, %194 : vector<1x64xf32>
    %196 = arith.extui %195 : vector<1x64xi1> to vector<1x64xi32>
    %197 = arith.sitofp %196 : vector<1x64xi32> to vector<1x64xf32>
    %cst_74 = arith.constant 1.000000e+00 : f32
    %198 = vector.broadcast %cst_74 : f32 to vector<1x64xf32>
    %199 = arith.subf %198, %197 : vector<1x64xf32>
    %200 = arith.mulf %193, %199 : vector<1x64xf32>
    %201 = arith.addf %189, %197 : vector<1x64xf32>
    %cst_75 = arith.constant 0.899999976 : f32
    %202 = vector.broadcast %cst_75 : f32 to vector<1x64xf32>
    %203 = arith.mulf %200, %202 : vector<1x64xf32>
    %204 = vector.extract_strided_slice %115 {offsets = [7, 0], sizes = [1, 64], strides = [1, 1]} : vector<8x64xf32> to vector<1x64xf32>
    %205 = arith.addf %203, %204 : vector<1x64xf32>
    %cst_76 = arith.constant 5.000000e-01 : f32
    %206 = vector.broadcast %cst_76 : f32 to vector<1x64xf32>
    %207 = arith.cmpf oge, %205, %206 : vector<1x64xf32>
    %208 = arith.extui %207 : vector<1x64xi1> to vector<1x64xi32>
    %209 = arith.sitofp %208 : vector<1x64xi32> to vector<1x64xf32>
    %210 = arith.addf %201, %209 : vector<1x64xf32>
    %cst_77 = arith.constant 1.250000e-01 : f32
    %211 = vector.broadcast %cst_77 : f32 to vector<1x64xf32>
    %212 = arith.mulf %210, %211 : vector<1x64xf32>
    %c0_78 = arith.constant 0 : index
    %c0_79 = arith.constant 0 : index
    %c0_80 = arith.constant 0 : index
    %213 = vector.load %arg8[%c0_78, %c0_79, %c0_80] : memref<1x1x64xf32, #tpu.memory_space<vmem>>, vector<1x1x64xf32>
    %214 = vector.shape_cast %213 : vector<1x1x64xf32> to vector<1x64xf32>
    %215 = vector.shape_cast %212 : vector<1x64xf32> to vector<1x1x64xf32>
    tpu.vector_store %arg8[%c0_78, %c0_79, %c0_80], %215 {strides = array<i32>} : memref<1x1x64xf32, #tpu.memory_space<vmem>>, vector<1x1x64xf32>,
    return
  }
  func.func @transform_0(%arg0: i32) -> (i32, i32, i32) {
    %c0_i32 = arith.constant 0 : i32
    %c0_i32_0 = arith.constant 0 : i32
    %c0_i32_1 = arith.constant 0 : i32
    return %arg0, %c0_i32, %c0_i32_0 : i32, i32, i32
  }
  func.func @transform_1(%arg0: i32) -> (i32, i32, i32) {
    %c0_i32 = arith.constant 0 : i32
    %c0_i32_0 = arith.constant 0 : i32
    %c0_i32_1 = arith.constant 0 : i32
    return %arg0, %c0_i32, %c0_i32_0 : i32, i32, i32
  }
  func.func @transform_2(%arg0: i32) -> (i32, i32) {
    %c0_i32 = arith.constant 0 : i32
    %c0_i32_0 = arith.constant 0 : i32
    %c0_i32_1 = arith.constant 0 : i32
    return %c0_i32, %c0_i32_0 : i32, i32
  }
  func.func @transform_3(%arg0: i32) -> (i32, i32) {
    %c0_i32 = arith.constant 0 : i32
    %c0_i32_0 = arith.constant 0 : i32
    %c0_i32_1 = arith.constant 0 : i32
    return %c0_i32, %c0_i32_0 : i32, i32
  }
  func.func @transform_4(%arg0: i32) -> (i32, i32) {
    %c0_i32 = arith.constant 0 : i32
    %c0_i32_0 = arith.constant 0 : i32
    %c0_i32_1 = arith.constant 0 : i32
    return %c0_i32, %c0_i32_0 : i32, i32
  }
  func.func @transform_5(%arg0: i32) -> (i32, i32) {
    %c0_i32 = arith.constant 0 : i32
    %c0_i32_0 = arith.constant 0 : i32
    %c0_i32_1 = arith.constant 0 : i32
    return %c0_i32, %c0_i32_0 : i32, i32
  }
  func.func @transform_6(%arg0: i32) -> (i32, i32, i32) {
    %c0_i32 = arith.constant 0 : i32
    %c0_i32_0 = arith.constant 0 : i32
    %c0_i32_1 = arith.constant 0 : i32
    return %arg0, %c0_i32, %c0_i32_0 : i32, i32, i32
  }
  func.func @transform_7(%arg0: i32) -> (i32, i32, i32) {
    %c0_i32 = arith.constant 0 : i32
    %c0_i32_0 = arith.constant 0 : i32
    %c0_i32_1 = arith.constant 0 : i32
    return %arg0, %c0_i32, %c0_i32_0 : i32, i32, i32
  }
}

</mosaic_0001>

<llo_original>
// kernel: img_csnn_ae_v3_forward.3
$region0: #{img_csnn_ae_v3_forward.3}
  #allocation0 [shape = 'u32[]', space=smem, size = 0x4, offset = 0x4, fixed_abs, tag = 'smem constant byte address 0x4 - core index']
  #allocation1 [shape = 'u32[144,128]{1,0:T(1,128)}', space=vmem, size = 0x12000, scoped, tag = 'internal scratch']
  %s0 = inlined_call_operand.vmem [shape: f32[2,64], index: 0, kind: input, shape index: {}]
  %s1 = inlined_call_operand.vmem [shape: f32[64,8192], index: 1, kind: input, shape index: {}]
  %s2 = inlined_call_operand.vmem [shape: f32[1,8192], index: 2, kind: input, shape index: {}]
  %s3 = inlined_call_operand.vmem [shape: f32[2,8192], index: 3, kind: output, shape index: {}]
  %s4 = sld [smem:[#allocation0]]
  $region68: #{img_csnn_ae_v3_forward.3} parent=0
    _
  %s6 = ssub.s32 1, %s4
  %s7 = scalar_select 0, %s6, %s4
  $region1: #{img_csnn_ae_v3_forward.3} parent=0
    #allocation2 [shape = 'u8[2097152]{0}', space=vmem, size = 0x200000, scoped, tag = 'input window, operand 1']
    loop: start=0, step=1, limit=4
    $region2: #{img_csnn_ae_v3_forward.3} parent=1 // loop_pre_header
      _
    $region3: #{img_csnn_ae_v3_forward.3} parent=1 // loop_header
      %s9 = sphi 0, %s13
      %p10 = scmp.ge.s32.totalorder %s9, 4
      %s17 = sphi 0, %s17
      %s19 = sphi 0, %s17
      %s20 = sphi 0, %s19
      %s34 = sphi 0, %s20
      %s40 = sphi 0, %s42
      %s43 = sphi 0, %s40
      %s44 = sphi 0, %s43
      %s60 = sphi 0, %s44
      %s66 = sphi 0, %s68
      %s69 = sphi 0, %s66
      %s70 = sphi 0, %s69
      %s86 = sphi 0, %s70
      %s92 = sphi 0, %s94
      %s95 = sphi 0, %s92
      %s96 = sphi 0, %s95
      %s112 = sphi 0, %s96
    $region4: #{img_csnn_ae_v3_forward.3} parent=1 // loop_header_branch
      %12 = sbr.rel (%p10) target = $region8
    $region5: #{img_csnn_ae_v3_forward.3} parent=1 // loop_body
      %s14 = ssub.s32 %s9, 1
      %s15 = ssub.s32 %s9, 2
      %s16 = sadd.s32 %s9, 1
      %s18 = sadd.s32 %s17, 1
      %p21 = scmp.eq.s32.totalorder %s9, 1
      %p22 = scmp.ne.s32.totalorder %s17, %s19
      %p23 = scmp.eq.s32.totalorder %s9, 0
      %p24 = por %p22, %p23
      %p25 = scmp.ne.s32.totalorder %s17, %s19
      %p26 = scmp.eq.s32.totalorder %s14, 1
      %p27 = por %p25, %p26
      %p28 = scmp.ne.s32.totalorder %s19, %s20
      %p29 = scmp.eq.s32.totalorder %s14, 0
      %p30 = por %p28, %p29
      %p31 = scmp.ne.s32.totalorder %s19, %s20
      %p32 = scmp.eq.s32.totalorder %s15, 1
      %p33 = por %p31, %p32
      %p35 = scmp.ne.s32.totalorder %s20, %s34
      %p36 = scmp.eq.s32.totalorder %s15, 0
      %p37 = por %p35, %p36
      %s38 = ssub.s32 %s9, %s16
      %p39 = scmp.eq.s32.totalorder %s38, 0
      %s41 = sadd.s32 %s40, 1
      %s42 = scalar_select %p39, %s40, %s41
      %p45 = pneg %p39
      %p46 = scmp.eq.s32.totalorder %s9, 1
      %p47 = por %p45, %p46
      %p48 = scmp.ne.s32.totalorder %s40, %s43
      %p49 = scmp.eq.s32.totalorder %s9, 0
      %p50 = por %p48, %p49
      %p51 = scmp.ne.s32.totalorder %s40, %s43
      %p52 = scmp.eq.s32.totalorder %s14, 1
      %p53 = por %p51, %p52
      %p54 = scmp.ne.s32.totalorder %s43, %s44
      %p55 = scmp.eq.s32.totalorder %s14, 0
      %p56 = por %p54, %p55
      %p57 = scmp.ne.s32.totalorder %s43, %s44
      %p58 = scmp.eq.s32.totalorder %s15, 1
      %p59 = por %p57, %p58
      %p61 = scmp.ne.s32.totalorder %s44, %s60
      %p62 = scmp.eq.s32.totalorder %s15, 0
      %p63 = por %p61, %p62
      %s64 = ssub.s32 %s9, %s16
      %p65 = scmp.eq.s32.totalorder %s64, 0
      %s67 = sadd.s32 %s66, 1
      %s68 = scalar_select %p65, %s66, %s67
      %p71 = pneg %p65
      %p72 = scmp.eq.s32.totalorder %s9, 1
      %p73 = por %p71, %p72
      %p74 = scmp.ne.s32.totalorder %s66, %s69
      %p75 = scmp.eq.s32.totalorder %s9, 0
      %p76 = por %p74, %p75
      %p77 = scmp.ne.s32.totalorder %s66, %s69
      %p78 = scmp.eq.s32.totalorder %s14, 1
      %p79 = por %p77, %p78
      %p80 = scmp.ne.s32.totalorder %s69, %s70
      %p81 = scmp.eq.s32.totalorder %s14, 0
      %p82 = por %p80, %p81
      %p83 = scmp.ne.s32.totalorder %s69, %s70
      %p84 = scmp.eq.s32.totalorder %s15, 1
      %p85 = por %p83, %p84
      %p87 = scmp.ne.s32.totalorder %s70, %s86
      %p88 = scmp.eq.s32.totalorder %s15, 0
      %p89 = por %p87, %p88
      %s90 = ssub.s32 %s9, %s16
      %p91 = scmp.eq.s32.totalorder %s90, 0
      %s93 = sadd.s32 %s92, 1
      %s94 = scalar_select %p91, %s92, %s93
      %p97 = pneg %p91
      %p98 = scmp.eq.s32.totalorder %s9, 1
      %p99 = por %p97, %p98
      %p100 = scmp.ne.s32.totalorder %s92, %s95
      %p101 = scmp.eq.s32.totalorder %s9, 0
      %p102 = por %p100, %p101
      %p103 = scmp.ne.s32.totalorder %s92, %s95
      %p104 = scmp.eq.s32.totalorder %s14, 1
      %p105 = por %p103, %p104
      %p106 = scmp.ne.s32.totalorder %s95, %s96
      %p107 = scmp.eq.s32.totalorder %s14, 0
      %p108 = por %p106, %p107
      %p109 = scmp.ne.s32.totalorder %s95, %s96
      %p110 = scmp.eq.s32.totalorder %s15, 1
      %p111 = por %p109, %p110
      %p113 = scmp.ne.s32.totalorder %s96, %s112
      %p114 = scmp.eq.s32.totalorder %s15, 0
      %p115 = por %p113, %p114
      %p116 = scmp.le.s32.totalorder 1, %s9
      %p117 = scmp.lt.s32.totalorder %s9, 3
      %p118 = pnand %p116, %p117
      %p119 = pneg %p118
      // Predicated region
      $region9: #{img_csnn_ae_v3_forward.3} parent=5 // pred_check
        _
      $region10: #{img_csnn_ae_v3_forward.3} parent=5 // pred_check_branch
        %121 = sbr.rel (%p118) target = $region12
      $region11: #{img_csnn_ae_v3_forward.3} parent=5 // pred_region
        %s122 = ssub.s32 %s9, 1
        // Predicated region
        $region13: #{img_csnn_ae_v3_forward.3} parent=11 // pred_check
          %p123 = pneg %p30
        $region14: #{img_csnn_ae_v3_forward.3} parent=11 // pred_check_branch
          %125 = sbr.rel (%p123) target = $region16
        $region15: #{img_csnn_ae_v3_forward.3} parent=11 // pred_region
          _
        $region16: #{img_csnn_ae_v3_forward.3} parent=11 // pred_fallthru
          _
      $region12: #{img_csnn_ae_v3_forward.3} parent=5 // pred_fallthru
        _
      %p126 = scmp.lt.s32.totalorder %s9, 2
      // Predicated region
      $region17: #{img_csnn_ae_v3_forward.3} parent=5 // pred_check
        %p127 = pneg %p126
      $region18: #{img_csnn_ae_v3_forward.3} parent=5 // pred_check_branch
        %129 = sbr.rel (%p127) target = $region20
      $region19: #{img_csnn_ae_v3_forward.3} parent=5 // pred_region
        // Predicated region
        $region21: #{img_csnn_ae_v3_forward.3} parent=19 // pred_check
          %p130 = pneg %p50
        $region22: #{img_csnn_ae_v3_forward.3} parent=19 // pred_check_branch
          %132 = sbr.rel (%p130) target = $region24
        $region23: #{img_csnn_ae_v3_forward.3} parent=19 // pred_region
          %s133 = sand.u32 %s40, 1
          %s134 = sand.u32 %s40, 1
          %s135 = smul.addr %s134, 2048
          %s136 = scalar_lea.vmem [#allocation2], %s135
          %s137 = smul.u32 32, %s9
          %s138 = smul.addr %s137, 8
          %s139 = scalar_lea.vmem %s1, %s138
          // Predicated region
          $region25: #{img_csnn_ae_v3_forward.3} parent=23 // pred_check
            _
          $region26: #{img_csnn_ae_v3_forward.3} parent=23 // pred_check_branch
            %141 = sbr.rel (0) target = $region28
          $region27: #{img_csnn_ae_v3_forward.3} parent=23 // pred_region
            // Predicated region
            $region29: #{img_csnn_ae_v3_forward.3} parent=27 // pred_check
              _
            $region30: #{img_csnn_ae_v3_forward.3} parent=27 // pred_check_branch
              %143 = sbr.rel (0) target = $region32
            $region31: #{img_csnn_ae_v3_forward.3} parent=27 // pred_region
              loop: start=0, step=1, limit=1
              $region33: #{img_csnn_ae_v3_forward.3} parent=31 // loop_pre_header
                _
              $region34: #{img_csnn_ae_v3_forward.3} parent=31 // loop_header
                %s145 = sphi 0, %s149
                %p146 = scmp.ge.s32.totalorder %s145, 1
                %s150 = sphi %s139, %s139
                %s151 = sphi %s136, %s136
              $region35: #{img_csnn_ae_v3_forward.3} parent=31 // loop_header_branch
                %148 = sbr.rel (%p146) target = $region39
              $region36: #{img_csnn_ae_v3_forward.3} parent=31 // loop_body
                %v152 = vld [vmem:[%s150] sm:$0xff]
                %153 = vst [vmem:[%s151] sm:$0xff] %v152
                %v154 = vld [vmem:[%s150 + $0x8] sm:$0xff]
                %155 = vst [vmem:[%s151 + $0x8] sm:$0xff] %v154
                %v156 = vld [vmem:[%s150 + $0x10] sm:$0xff]
                %157 = vst [vmem:[%s151 + $0x10] sm:$0xff] %v156
                %v158 = vld [vmem:[%s150 + $0x18] sm:$0xff]
                %159 = vst [vmem:[%s151 + $0x18] sm:$0xff] %v158
                %v160 = vld [vmem:[%s150 + $0x20] sm:$0xff]
                %161 = vst [vmem:[%s151 + $0x20] sm:$0xff] %v160
                %v162 = vld [vmem:[%s150 + $0x28] sm:$0xff]
                %163 = vst [vmem:[%s151 + $0x28] sm:$0xff] %v162
                %v164 = vld [vmem:[%s150 + $0x30] sm:$0xff]
                %165 = vst [vmem:[%s151 + $0x30] sm:$0xff] %v164
                %v166 = vld [vmem:[%s150 + $0x38] sm:$0xff]
                %167 = vst [vmem:[%s151 + $0x38] sm:$0xff] %v166
                %v168 = vld [vmem:[%s150 + $0x40] sm:$0xff]
                %169 = vst [vmem:[%s151 + $0x40] sm:$0xff] %v168
                %v170 = vld [vmem:[%s150 + $0x48] sm:$0xff]
                %171 = vst [vmem:[%s151 + $0x48] sm:$0xff] %v170
                %v172 = vld [vmem:[%s150 + $0x50] sm:$0xff]
                %173 = vst [vmem:[%s151 + $0x50] sm:$0xff] %v172
                %v174 = vld [vmem:[%s150 + $0x58] sm:$0xff]
                %175 = vst [vmem:[%s151 + $0x58] sm:$0xff] %v174
                %v176 = vld [vmem:[%s150 + $0x60] sm:$0xff]
                %177 = vst [vmem:[%s151 + $0x60] sm:$0xff] %v176
                %v178 = vld [vmem:[%s150 + $0x68] sm:$0xff]
                %179 = vst [vmem:[%s151 + $0x68] sm:$0xff] %v178
                %v180 = vld [vmem:[%s150 + $0x70] sm:$0xff]
                %181 = vst [vmem:[%s151 + $0x70] sm:$0xff] %v180
                %v182 = vld [vmem:[%s150 + $0x78] sm:$0xff]
                %183 = vst [vmem:[%s151 + $0x78] sm:$0xff] %v182
                %v184 = vld [vmem:[%s150 + $0x80] sm:$0xff]
                %185 = vst [vmem:[%s151 + $0x80] sm:$0xff] %v184
                %v186 = vld [vmem:[%s150 + $0x88] sm:$0xff]
                %187 = vst [vmem:[%s151 + $0x88] sm:$0xff] %v186
                %v188 = vld [vmem:[%s150 + $0x90] sm:$0xff]
                %189 = vst [vmem:[%s151 + $0x90] sm:$0xff] %v188
                %v190 = vld [vmem:[%s150 + $0x98] sm:$0xff]
                %191 = vst [vmem:[%s151 + $0x98] sm:$0xff] %v190
                %v192 = vld [vmem:[%s150 + $0xa0] sm:$0xff]
                %193 = vst [vmem:[%s151 + $0xa0] sm:$0xff] %v192
                %v194 = vld [vmem:[%s150 + $0xa8] sm:$0xff]
                %195 = vst [vmem:[%s151 + $0xa8] sm:$0xff] %v194
                %v196 = vld [vmem:[%s150 + $0xb0] sm:$0xff]
                %197 = vst [vmem:[%s151 + $0xb0] sm:$0xff] %v196
                %v198 = vld [vmem:[%s150 + $0xb8] sm:$0xff]
                %199 = vst [vmem:[%s151 + $0xb8] sm:$0xff] %v198
                %v200 = vld [vmem:[%s150 + $0xc0] sm:$0xff]
                %201 = vst [vmem:[%s151 + $0xc0] sm:$0xff] %v200
                %v202 = vld [vmem:[%s150 + $0xc8] sm:$0xff]
                %203 = vst [vmem:[%s151 + $0xc8] sm:$0xff] %v202
                %v204 = vld [vmem:[%s150 + $0xd0] sm:$0xff]
                %205 = vst [vmem:[%s151 + $0xd0] sm:$0xff] %v204
                %v206 = vld [vmem:[%s150 + $0xd8] sm:$0xff]
                %207 = vst [vmem:[%s151 + $0xd8] sm:$0xff] %v206
                %v208 = vld [vmem:[%s150 + $0xe0] sm:$0xff]
                %209 = vst [vmem:[%s151 + $0xe0] sm:$0xff] %v208
                %v210 = vld [vmem:[%s150 + $0xe8] sm:$0xff]
                %211 = vst [vmem:[%s151 + $0xe8] sm:$0xff] %v210
                %v212 = vld [vmem:[%s150 + $0xf0] sm:$0xff]
                %213 = vst [vmem:[%s151 + $0xf0] sm:$0xff] %v212
                %v214 = vld [vmem:[%s150 + $0xf8] sm:$0xff]
                %215 = vst [vmem:[%s151 + $0xf8] sm:$0xff] %v214
                %v216 = vld [vmem:[%s150 + $0x200] sm:$0xff]
                %217 = vst [vmem:[%s151 + $0x100] sm:$0xff] %v216
                %v218 = vld [vmem:[%s150 + $0x208] sm:$0xff]
                %219 = vst [vmem:[%s151 + $0x108] sm:$0xff] %v218
                %v220 = vld [vmem:[%s150 + $0x210] sm:$0xff]
                %221 = vst [vmem:[%s151 + $0x110] sm:$0xff] %v220
                %v222 = vld [vmem:[%s150 + $0x218] sm:$0xff]
                %223 = vst [vmem:[%s151 + $0x118] sm:$0xff] %v222
                %v224 = vld [vmem:[%s150 + $0x220] sm:$0xff]
                %225 = vst [vmem:[%s151 + $0x120] sm:$0xff] %v224
                %v226 = vld [vmem:[%s150 + $0x228] sm:$0xff]
                %227 = vst [vmem:[%s151 + $0x128] sm:$0xff] %v226
                %v228 = vld [vmem:[%s150 + $0x230] sm:$0xff]
                %229 = vst [vmem:[%s151 + $0x130] sm:$0xff] %v228
                %v230 = vld [vmem:[%s150 + $0x238] sm:$0xff]
                %231 = vst [vmem:[%s151 + $0x138] sm:$0xff] %v230
                %v232 = vld [vmem:[%s150 + $0x240] sm:$0xff]
                %233 = vst [vmem:[%s151 + $0x140] sm:$0xff] %v232
                %v234 = vld [vmem:[%s150 + $0x248] sm:$0xff]
                %235 = vst [vmem:[%s151 + $0x148] sm:$0xff] %v234
                %v236 = vld [vmem:[%s150 + $0x250] sm:$0xff]
                %237 = vst [vmem:[%s151 + $0x150] sm:$0xff] %v236
                %v238 = vld [vmem:[%s150 + $0x258] sm:$0xff]
                %239 = vst [vmem:[%s151 + $0x158] sm:$0xff] %v238
                %v240 = vld [vmem:[%s150 + $0x260] sm:$0xff]
                %241 = vst [vmem:[%s151 + $0x160] sm:$0xff] %v240
                %v242 = vld [vmem:[%s150 + $0x268] sm:$0xff]
                %243 = vst [vmem:[%s151 + $0x168] sm:$0xff] %v242
                %v244 = vld [vmem:[%s150 + $0x270] sm:$0xff]
                %245 = vst [vmem:[%s151 + $0x170] sm:$0xff] %v244
                %v246 = vld [vmem:[%s150 + $0x278] sm:$0xff]
                %247 = vst [vmem:[%s151 + $0x178] sm:$0xff] %v246
                %v248 = vld [vmem:[%s150 + $0x280] sm:$0xff]
                %249 = vst [vmem:[%s151 + $0x180] sm:$0xff] %v248
                %v250 = vld [vmem:[%s150 + $0x288] sm:$0xff]
                %251 = vst [vmem:[%s151 + $0x188] sm:$0xff] %v250
                %v252 = vld [vmem:[%s150 + $0x290] sm:$0xff]
                %253 = vst [vmem:[%s151 + $0x190] sm:$0xff] %v252
                %v254 = vld [vmem:[%s150 + $0x298] sm:$0xff]
                %255 = vst [vmem:[%s151 + $0x198] sm:$0xff] %v254
                %v256 = vld [vmem:[%s150 + $0x2a0] sm:$0xff]
                %257 = vst [vmem:[%s151 + $0x1a0] sm:$0xff] %v256
                %v258 = vld [vmem:[%s150 + $0x2a8] sm:$0xff]
                %259 = vst [vmem:[%s151 + $0x1a8] sm:$0xff] %v258
                %v260 = vld [vmem:[%s150 + $0x2b0] sm:$0xff]
                %261 = vst [vmem:[%s151 + $0x1b0] sm:$0xff] %v260
                %v262 = vld [vmem:[%s150 + $0x2b8] sm:$0xff]
                %263 = vst [vmem:[%s151 + $0x1b8] sm:$0xff] %v262
                %v264 = vld [vmem:[%s150 + $0x2c0] sm:$0xff]
                %265 = vst [vmem:[%s151 + $0x1c0] sm:$0xff] %v264
                %v266 = vld [vmem:[%s150 + $0x2c8] sm:$0xff]
                %267 = vst [vmem:[%s151 + $0x1c8] sm:$0xff] %v266
                %v268 = vld [vmem:[%s150 + $0x2d0] sm:$0xff]
                %269 = vst [vmem:[%s151 + $0x1d0] sm:$0xff] %v268
                %v270 = vld [vmem:[%s150 + $0x2d8] sm:$0xff]
                %271 = vst [vmem:[%s151 + $0x1d8] sm:$0xff] %v270
                %v272 = vld [vmem:[%s150 + $0x2e0] sm:$0xff]
                %273 = vst [vmem:[%s151 + $0x1e0] sm:$0xff] %v272
                %v274 = vld [vmem:[%s150 + $0x2e8] sm:$0xff]
                %275 = vst [vmem:[%s151 + $0x1e8] sm:$0xff] %v274
                %v276 = vld [vmem:[%s150 + $0x2f0] sm:$0xff]
                %277 = vst [vmem:[%s151 + $0x1f0] sm:$0xff] %v276
                %v278 = vld [vmem:[%s150 + $0x2f8] sm:$0xff]
                %279 = vst [vmem:[%s151 + $0x1f8] sm:$0xff] %v278
                %v280 = vld [vmem:[%s150 + $0x400] sm:$0xff]
                %281 = vst [vmem:[%s151 + $0x200] sm:$0xff] %v280
                %v282 = vld [vmem:[%s150 + $0x408] sm:$0xff]
                %283 = vst [vmem:[%s151 + $0x208] sm:$0xff] %v282
                %v284 = vld [vmem:[%s150 + $0x410] sm:$0xff]
                %285 = vst [vmem:[%s151 + $0x210] sm:$0xff] %v284
                %v286 = vld [vmem:[%s150 + $0x418] sm:$0xff]
                %287 = vst [vmem:[%s151 + $0x218] sm:$0xff] %v286
                %v288 = vld [vmem:[%s150 + $0x420] sm:$0xff]
                %289 = vst [vmem:[%s151 + $0x220] sm:$0xff] %v288
                %v290 = vld [vmem:[%s150 + $0x428] sm:$0xff]
                %291 = vst [vmem:[%s151 + $0x228] sm:$0xff] %v290
                %v292 = vld [vmem:[%s150 + $0x430] sm:$0xff]
                %293 = vst [vmem:[%s151 + $0x230] sm:$0xff] %v292
                %v294 = vld [vmem:[%s150 + $0x438] sm:$0xff]
                %295 = vst [vmem:[%s151 + $0x238] sm:$0xff] %v294
                %v296 = vld [vmem:[%s150 + $0x440] sm:$0xff]
                %297 = vst [vmem:[%s151 + $0x240] sm:$0xff] %v296
                %v298 = vld [vmem:[%s150 + $0x448] sm:$0xff]
                %299 = vst [vmem:[%s151 + $0x248] sm:$0xff] %v298
                %v300 = vld [vmem:[%s150 + $0x450] sm:$0xff]
                %301 = vst [vmem:[%s151 + $0x250] sm:$0xff] %v300
                %v302 = vld [vmem:[%s150 + $0x458] sm:$0xff]
                %303 = vst [vmem:[%s151 + $0x258] sm:$0xff] %v302
                %v304 = vld [vmem:[%s150 + $0x460] sm:$0xff]
                %305 = vst [vmem:[%s151 + $0x260] sm:$0xff] %v304
                %v306 = vld [vmem:[%s150 + $0x468] sm:$0xff]
                %307 = vst [vmem:[%s151 + $0x268] sm:$0xff] %v306
                %v308 = vld [vmem:[%s150 + $0x470] sm:$0xff]
                %309 = vst [vmem:[%s151 + $0x270] sm:$0xff] %v308
                %v310 = vld [vmem:[%s150 + $0x478] sm:$0xff]
                %311 = vst [vmem:[%s151 + $0x278] sm:$0xff] %v310
                %v312 = vld [vmem:[%s150 + $0x480] sm:$0xff]
                %313 = vst [vmem:[%s151 + $0x280] sm:$0xff] %v312
                %v314 = vld [vmem:[%s150 + $0x488] sm:$0xff]
                %315 = vst [vmem:[%s151 + $0x288] sm:$0xff] %v314
                %v316 = vld [vmem:[%s150 + $0x490] sm:$0xff]
                %317 = vst [vmem:[%s151 + $0x290] sm:$0xff] %v316
                %v318 = vld [vmem:[%s150 + $0x498] sm:$0xff]
                %319 = vst [vmem:[%s151 + $0x298] sm:$0xff] %v318
                %v320 = vld [vmem:[%s150 + $0x4a0] sm:$0xff]
                %321 = vst [vmem:[%s151 + $0x2a0] sm:$0xff] %v320
                %v322 = vld [vmem:[%s150 + $0x4a8] sm:$0xff]
                %323 = vst [vmem:[%s151 + $0x2a8] sm:$0xff] %v322
                %v324 = vld [vmem:[%s150 + $0x4b0] sm:$0xff]
                %325 = vst [vmem:[%s151 + $0x2b0] sm:$0xff] %v324
                %v326 = vld [vmem:[%s150 + $0x4b8] sm:$0xff]
                %327 = vst [vmem:[%s151 + $0x2b8] sm:$0xff] %v326
                %v328 = vld [vmem:[%s150 + $0x4c0] sm:$0xff]
                %329 = vst [vmem:[%s151 + $0x2c0] sm:$0xff] %v328
                %v330 = vld [vmem:[%s150 + $0x4c8] sm:$0xff]
                %331 = vst [vmem:[%s151 + $0x2c8] sm:$0xff] %v330
                %v332 = vld [vmem:[%s150 + $0x4d0] sm:$0xff]
                %333 = vst [vmem:[%s151 + $0x2d0] sm:$0xff] %v332
                %v334 = vld [vmem:[%s150 + $0x4d8] sm:$0xff]
                %335 = vst [vmem:[%s151 + $0x2d8] sm:$0xff] %v334
                %v336 = vld [vmem:[%s150 + $0x4e0] sm:$0xff]
                %337 = vst [vmem:[%s151 + $0x2e0] sm:$0xff] %v336
                %v338 = vld [vmem:[%s150 + $0x4e8] sm:$0xff]
                %339 = vst [vmem:[%s151 + $0x2e8] sm:$0xff] %v338
                %v340 = vld [vmem:[%s150 + $0x4f0] sm:$0xff]
                %341 = vst [vmem:[%s151 + $0x2f0] sm:$0xff] %v340
                %v342 = vld [vmem:[%s150 + $0x4f8] sm:$0xff]
                %343 = vst [vmem:[%s151 + $0x2f8] sm:$0xff] %v342
                %v344 = vld [vmem:[%s150 + $0x600] sm:$0xff]
                %345 = vst [vmem:[%s151 + $0x300] sm:$0xff] %v344
                %v346 = vld [vmem:[%s150 + $0x608] sm:$0xff]
                %347 = vst [vmem:[%s151 + $0x308] sm:$0xff] %v346
                %v348 = vld [vmem:[%s150 + $0x610] sm:$0xff]
                %349 = vst [vmem:[%s151 + $0x310] sm:$0xff] %v348
                %v350 = vld [vmem:[%s150 + $0x618] sm:$0xff]
                %351 = vst [vmem:[%s151 + $0x318] sm:$0xff] %v350
                %v352 = vld [vmem:[%s150 + $0x620] sm:$0xff]
                %353 = vst [vmem:[%s151 + $0x320] sm:$0xff] %v352
                %v354 = vld [vmem:[%s150 + $0x628] sm:$0xff]
                %355 = vst [vmem:[%s151 + $0x328] sm:$0xff] %v354
                %v356 = vld [vmem:[%s150 + $0x630] sm:$0xff]
                %357 = vst [vmem:[%s151 + $0x330] sm:$0xff] %v356
                %v358 = vld [vmem:[%s150 + $0x638] sm:$0xff]
                %359 = vst [vmem:[%s151 + $0x338] sm:$0xff] %v358
                %v360 = vld [vmem:[%s150 + $0x640] sm:$0xff]
                %361 = vst [vmem:[%s151 + $0x340] sm:$0xff] %v360
                %v362 = vld [vmem:[%s150 + $0x648] sm:$0xff]
                %363 = vst [vmem:[%s151 + $0x348] sm:$0xff] %v362
                %v364 = vld [vmem:[%s150 + $0x650] sm:$0xff]
                %365 = vst [vmem:[%s151 + $0x350] sm:$0xff] %v364
                %v366 = vld [vmem:[%s150 + $0x658] sm:$0xff]
                %367 = vst [vmem:[%s151 + $0x358] sm:$0xff] %v366
                %v368 = vld [vmem:[%s150 + $0x660] sm:$0xff]
                %369 = vst [vmem:[%s151 + $0x360] sm:$0xff] %v368
                %v370 = vld [vmem:[%s150 + $0x668] sm:$0xff]
                %371 = vst [vmem:[%s151 + $0x368] sm:$0xff] %v370
                %v372 = vld [vmem:[%s150 + $0x670] sm:$0xff]
                %373 = vst [vmem:[%s151 + $0x370] sm:$0xff] %v372
                %v374 = vld [vmem:[%s150 + $0x678] sm:$0xff]
                %375 = vst [vmem:[%s151 + $0x378] sm:$0xff] %v374
                %v376 = vld [vmem:[%s150 + $0x680] sm:$0xff]
                %377 = vst [vmem:[%s151 + $0x380] sm:$0xff] %v376
                %v378 = vld [vmem:[%s150 + $0x688] sm:$0xff]
                %379 = vst [vmem:[%s151 + $0x388] sm:$0xff] %v378
                %v380 = vld [vmem:[%s150 + $0x690] sm:$0xff]
                %381 = vst [vmem:[%s151 + $0x390] sm:$0xff] %v380
                %v382 = vld [vmem:[%s150 + $0x698] sm:$0xff]
                %383 = vst [vmem:[%s151 + $0x398] sm:$0xff] %v382
                %v384 = vld [vmem:[%s150 + $0x6a0] sm:$0xff]
                %385 = vst [vmem:[%s151 + $0x3a0] sm:$0xff] %v384
                %v386 = vld [vmem:[%s150 + $0x6a8] sm:$0xff]
                %387 = vst [vmem:[%s151 + $0x3a8] sm:$0xff] %v386
                %v388 = vld [vmem:[%s150 + $0x6b0] sm:$0xff]
                %389 = vst [vmem:[%s151 + $0x3b0] sm:$0xff] %v388
                %v390 = vld [vmem:[%s150 + $0x6b8] sm:$0xff]
                %391 = vst [vmem:[%s151 + $0x3b8] sm:$0xff] %v390
                %v392 = vld [vmem:[%s150 + $0x6c0] sm:$0xff]
                %393 = vst [vmem:[%s151 + $0x3c0] sm:$0xff] %v392
                %v394 = vld [vmem:[%s150 + $0x6c8] sm:$0xff]
                %395 = vst [vmem:[%s151 + $0x3c8] sm:$0xff] %v394
                %v396 = vld [vmem:[%s150 + $0x6d0] sm:$0xff]
                %397 = vst [vmem:[%s151 + $0x3d0] sm:$0xff] %v396
                %v398 = vld [vmem:[%s150 + $0x6d8] sm:$0xff]
                %399 = vst [vmem:[%s151 + $0x3d8] sm:$0xff] %v398
                %v400 = vld [vmem:[%s150 + $0x6e0] sm:$0xff]
                %401 = vst [vmem:[%s151 + $0x3e0] sm:$0xff] %v400
                %v402 = vld [vmem:[%s150 + $0x6e8] sm:$0xff]
                %403 = vst [vmem:[%s151 + $0x3e8] sm:$0xff] %v402
                %v404 = vld [vmem:[%s150 + $0x6f0] sm:$0xff]
                %405 = vst [vmem:[%s151 + $0x3f0] sm:$0xff] %v404
                %v406 = vld [vmem:[%s150 + $0x6f8] sm:$0xff]
                %407 = vst [vmem:[%s151 + $0x3f8] sm:$0xff] %v406
                %v408 = vld [vmem:[%s150 + $0x800] sm:$0xff]
                %409 = vst [vmem:[%s151 + $0x400] sm:$0xff] %v408
                %v410 = vld [vmem:[%s150 + $0x808] sm:$0xff]
                %411 = vst [vmem:[%s151 + $0x408] sm:$0xff] %v410
                %v412 = vld [vmem:[%s150 + $0x810] sm:$0xff]
                %413 = vst [vmem:[%s151 + $0x410] sm:$0xff] %v412
                %v414 = vld [vmem:[%s150 + $0x818] sm:$0xff]
                %415 = vst [vmem:[%s151 + $0x418] sm:$0xff] %v414
                %v416 = vld [vmem:[%s150 + $0x820] sm:$0xff]
                %417 = vst [vmem:[%s151 + $0x420] sm:$0xff] %v416
                %v418 = vld [vmem:[%s150 + $0x828] sm:$0xff]
                %419 = vst [vmem:[%s151 + $0x428] sm:$0xff] %v418
                %v420 = vld [vmem:[%s150 + $0x830] sm:$0xff]
                %421 = vst [vmem:[%s151 + $0x430] sm:$0xff] %v420
                %v422 = vld [vmem:[%s150 + $0x838] sm:$0xff]
                %423 = vst [vmem:[%s151 + $0x438] sm:$0xff] %v422
                %v424 = vld [vmem:[%s150 + $0x840] sm:$0xff]
                %425 = vst [vmem:[%s151 + $0x440] sm:$0xff] %v424
                %v426 = vld [vmem:[%s150 + $0x848] sm:$0xff]
                %427 = vst [vmem:[%s151 + $0x448] sm:$0xff] %v426
                %v428 = vld [vmem:[%s150 + $0x850] sm:$0xff]
                %429 = vst [vmem:[%s151 + $0x450] sm:$0xff] %v428
                %v430 = vld [vmem:[%s150 + $0x858] sm:$0xff]
                %431 = vst [vmem:[%s151 + $0x458] sm:$0xff] %v430
                %v432 = vld [vmem:[%s150 + $0x860] sm:$0xff]
                %433 = vst [vmem:[%s151 + $0x460] sm:$0xff] %v432
                %v434 = vld [vmem:[%s150 + $0x868] sm:$0xff]
                %435 = vst [vmem:[%s151 + $0x468] sm:$0xff] %v434
                %v436 = vld [vmem:[%s150 + $0x870] sm:$0xff]
                %437 = vst [vmem:[%s151 + $0x470] sm:$0xff] %v436
                %v438 = vld [vmem:[%s150 + $0x878] sm:$0xff]
                %439 = vst [vmem:[%s151 + $0x478] sm:$0xff] %v438
                %v440 = vld [vmem:[%s150 + $0x880] sm:$0xff]
                %441 = vst [vmem:[%s151 + $0x480] sm:$0xff] %v440
                %v442 = vld [vmem:[%s150 + $0x888] sm:$0xff]
                %443 = vst [vmem:[%s151 + $0x488] sm:$0xff] %v442
                %v444 = vld [vmem:[%s150 + $0x890] sm:$0xff]
                %445 = vst [vmem:[%s151 + $0x490] sm:$0xff] %v444
                %v446 = vld [vmem:[%s150 + $0x898] sm:$0xff]
                %447 = vst [vmem:[%s151 + $0x498] sm:$0xff] %v446
                %v448 = vld [vmem:[%s150 + $0x8a0] sm:$0xff]
                %449 = vst [vmem:[%s151 + $0x4a0] sm:$0xff] %v448
                %v450 = vld [vmem:[%s150 + $0x8a8] sm:$0xff]
                %451 = vst [vmem:[%s151 + $0x4a8] sm:$0xff] %v450
                %v452 = vld [vmem:[%s150 + $0x8b0] sm:$0xff]
                %453 = vst [vmem:[%s151 + $0x4b0] sm:$0xff] %v452
                %v454 = vld [vmem:[%s150 + $0x8b8] sm:$0xff]
                %455 = vst [vmem:[%s151 + $0x4b8] sm:$0xff] %v454
                %v456 = vld [vmem:[%s150 + $0x8c0] sm:$0xff]
                %457 = vst [vmem:[%s151 + $0x4c0] sm:$0xff] %v456
                %v458 = vld [vmem:[%s150 + $0x8c8] sm:$0xff]
                %459 = vst [vmem:[%s151 + $0x4c8] sm:$0xff] %v458
                %v460 = vld [vmem:[%s150 + $0x8d0] sm:$0xff]
                %461 = vst [vmem:[%s151 + $0x4d0] sm:$0xff] %v460
                %v462 = vld [vmem:[%s150 + $0x8d8] sm:$0xff]
                %463 = vst [vmem:[%s151 + $0x4d8] sm:$0xff] %v462
                %v464 = vld [vmem:[%s150 + $0x8e0] sm:$0xff]
                %465 = vst [vmem:[%s151 + $0x4e0] sm:$0xff] %v464
                %v466 = vld [vmem:[%s150 + $0x8e8] sm:$0xff]
                %467 = vst [vmem:[%s151 + $0x4e8] sm:$0xff] %v466
                %v468 = vld [vmem:[%s150 + $0x8f0] sm:$0xff]
                %469 = vst [vmem:[%s151 + $0x4f0] sm:$0xff] %v468
                %v470 = vld [vmem:[%s150 + $0x8f8] sm:$0xff]
                %471 = vst [vmem:[%s151 + $0x4f8] sm:$0xff] %v470
                %v472 = vld [vmem:[%s150 + $0xa00] sm:$0xff]
                %473 = vst [vmem:[%s151 + $0x500] sm:$0xff] %v472
                %v474 = vld [vmem:[%s150 + $0xa08] sm:$0xff]
                %475 = vst [vmem:[%s151 + $0x508] sm:$0xff] %v474
                %v476 = vld [vmem:[%s150 + $0xa10] sm:$0xff]
                %477 = vst [vmem:[%s151 + $0x510] sm:$0xff] %v476
                %v478 = vld [vmem:[%s150 + $0xa18] sm:$0xff]
                %479 = vst [vmem:[%s151 + $0x518] sm:$0xff] %v478
                %v480 = vld [vmem:[%s150 + $0xa20] sm:$0xff]
                %481 = vst [vmem:[%s151 + $0x520] sm:$0xff] %v480
                %v482 = vld [vmem:[%s150 + $0xa28] sm:$0xff]
                %483 = vst [vmem:[%s151 + $0x528] sm:$0xff] %v482
                %v484 = vld [vmem:[%s150 + $0xa30] sm:$0xff]
                %485 = vst [vmem:[%s151 + $0x530] sm:$0xff] %v484
                %v486 = vld [vmem:[%s150 + $0xa38] sm:$0xff]
                %487 = vst [vmem:[%s151 + $0x538] sm:$0xff] %v486
                %v488 = vld [vmem:[%s150 + $0xa40] sm:$0xff]
                %489 = vst [vmem:[%s151 + $0x540] sm:$0xff] %v488
                %v490 = vld [vmem:[%s150 + $0xa48] sm:$0xff]
                %491 = vst [vmem:[%s151 + $0x548] sm:$0xff] %v490
                %v492 = vld [vmem:[%s150 + $0xa50] sm:$0xff]
                %493 = vst [vmem:[%s151 + $0x550] sm:$0xff] %v492
                %v494 = vld [vmem:[%s150 + $0xa58] sm:$0xff]
                %495 = vst [vmem:[%s151 + $0x558] sm:$0xff] %v494
                %v496 = vld [vmem:[%s150 + $0xa60] sm:$0xff]
                %497 = vst [vmem:[%s151 + $0x560] sm:$0xff] %v496
                %v498 = vld [vmem:[%s150 + $0xa68] sm:$0xff]
                %499 = vst [vmem:[%s151 + $0x568] sm:$0xff] %v498
                %v500 = vld [vmem:[%s150 + $0xa70] sm:$0xff]
                %501 = vst [vmem:[%s151 + $0x570] sm:$0xff] %v500
                %v502 = vld [vmem:[%s150 + $0xa78] sm:$0xff]
                %503 = vst [vmem:[%s151 + $0x578] sm:$0xff] %v502
                %v504 = vld [vmem:[%s150 + $0xa80] sm:$0xff]
                %505 = vst [vmem:[%s151 + $0x580] sm:$0xff] %v504
                %v506 = vld [vmem:[%s150 + $0xa88] sm:$0xff]
                %507 = vst [vmem:[%s151 + $0x588] sm:$0xff] %v506
                %v508 = vld [vmem:[%s150 + $0xa90] sm:$0xff]
                %509 = vst [vmem:[%s151 + $0x590] sm:$0xff] %v508
                %v510 = vld [vmem:[%s150 + $0xa98] sm:$0xff]
                %511 = vst [vmem:[%s151 + $0x598] sm:$0xff] %v510
                %v512 = vld [vmem:[%s150 + $0xaa0] sm:$0xff]
                %513 = vst [vmem:[%s151 + $0x5a0] sm:$0xff] %v512
                %v514 = vld [vmem:[%s150 + $0xaa8] sm:$0xff]
                %515 = vst [vmem:[%s151 + $0x5a8] sm:$0xff] %v514
                %v516 = vld [vmem:[%s150 + $0xab0] sm:$0xff]
                %517 = vst [vmem:[%s151 + $0x5b0] sm:$0xff] %v516
                %v518 = vld [vmem:[%s150 + $0xab8] sm:$0xff]
                %519 = vst [vmem:[%s151 + $0x5b8] sm:$0xff] %v518
                %v520 = vld [vmem:[%s150 + $0xac0] sm:$0xff]
                %521 = vst [vmem:[%s151 + $0x5c0] sm:$0xff] %v520
                %v522 = vld [vmem:[%s150 + $0xac8] sm:$0xff]
                %523 = vst [vmem:[%s151 + $0x5c8] sm:$0xff] %v522
                %v524 = vld [vmem:[%s150 + $0xad0] sm:$0xff]
                %525 = vst [vmem:[%s151 + $0x5d0] sm:$0xff] %v524
                %v526 = vld [vmem:[%s150 + $0xad8] sm:$0xff]
                %527 = vst [vmem:[%s151 + $0x5d8] sm:$0xff] %v526
                %v528 = vld [vmem:[%s150 + $0xae0] sm:$0xff]
                %529 = vst [vmem:[%s151 + $0x5e0] sm:$0xff] %v528
                %v530 = vld [vmem:[%s150 + $0xae8] sm:$0xff]
                %531 = vst [vmem:[%s151 + $0x5e8] sm:$0xff] %v530
                %v532 = vld [vmem:[%s150 + $0xaf0] sm:$0xff]
                %533 = vst [vmem:[%s151 + $0x5f0] sm:$0xff] %v532
                %v534 = vld [vmem:[%s150 + $0xaf8] sm:$0xff]
                %535 = vst [vmem:[%s151 + $0x5f8] sm:$0xff] %v534
                %v536 = vld [vmem:[%s150 + $0xc00] sm:$0xff]
                %537 = vst [vmem:[%s151 + $0x600] sm:$0xff] %v536
                %v538 = vld [vmem:[%s150 + $0xc08] sm:$0xff]
                %539 = vst [vmem:[%s151 + $0x608] sm:$0xff] %v538
                %v540 = vld [vmem:[%s150 + $0xc10] sm:$0xff]
                %541 = vst [vmem:[%s151 + $0x610] sm:$0xff] %v540
                %v542 = vld [vmem:[%s150 + $0xc18] sm:$0xff]
                %543 = vst [vmem:[%s151 + $0x618] sm:$0xff] %v542
                %v544 = vld [vmem:[%s150 + $0xc20] sm:$0xff]
                %545 = vst [vmem:[%s151 + $0x620] sm:$0xff] %v544
                %v546 = vld [vmem:[%s150 + $0xc28] sm:$0xff]
                %547 = vst [vmem:[%s151 + $0x628] sm:$0xff] %v546
                %v548 = vld [vmem:[%s150 + $0xc30] sm:$0xff]
                %549 = vst [vmem:[%s151 + $0x630] sm:$0xff] %v548
                %v550 = vld [vmem:[%s150 + $0xc38] sm:$0xff]
                %551 = vst [vmem:[%s151 + $0x638] sm:$0xff] %v550
                %v552 = vld [vmem:[%s150 + $0xc40] sm:$0xff]
                %553 = vst [vmem:[%s151 + $0x640] sm:$0xff] %v552
                %v554 = vld [vmem:[%s150 + $0xc48] sm:$0xff]
                %555 = vst [vmem:[%s151 + $0x648] sm:$0xff] %v554
                %v556 = vld [vmem:[%s150 + $0xc50] sm:$0xff]
                %557 = vst [vmem:[%s151 + $0x650] sm:$0xff] %v556
                %v558 = vld [vmem:[%s150 + $0xc58] sm:$0xff]
                %559 = vst [vmem:[%s151 + $0x658] sm:$0xff] %v558
                %v560 = vld [vmem:[%s150 + $0xc60] sm:$0xff]
                %561 = vst [vmem:[%s151 + $0x660] sm:$0xff] %v560
                %v562 = vld [vmem:[%s150 + $0xc68] sm:$0xff]
                %563 = vst [vmem:[%s151 + $0x668] sm:$0xff] %v562
                %v564 = vld [vmem:[%s150 + $0xc70] sm:$0xff]
                %565 = vst [vmem:[%s151 + $0x670] sm:$0xff] %v564
                %v566 = vld [vmem:[%s150 + $0xc78] sm:$0xff]
                %567 = vst [vmem:[%s151 + $0x678] sm:$0xff] %v566
                %v568 = vld [vmem:[%s150 + $0xc80] sm:$0xff]
                %569 = vst [vmem:[%s151 + $0x680] sm:$0xff] %v568
                %v570 = vld [vmem:[%s150 + $0xc88] sm:$0xff]
                %571 = vst [vmem:[%s151 + $0x688] sm:$0xff] %v570
                %v572 = vld [vmem:[%s150 + $0xc90] sm:$0xff]
                %573 = vst [vmem:[%s151 + $0x690] sm:$0xff] %v572
                %v574 = vld [vmem:[%s150 + $0xc98] sm:$0xff]
                %575 = vst [vmem:[%s151 + $0x698] sm:$0xff] %v574
                %v576 = vld [vmem:[%s150 + $0xca0] sm:$0xff]
                %577 = vst [vmem:[%s151 + $0x6a0] sm:$0xff] %v576
                %v578 = vld [vmem:[%s150 + $0xca8] sm:$0xff]
                %579 = vst [vmem:[%s151 + $0x6a8] sm:$0xff] %v578
                %v580 = vld [vmem:[%s150 + $0xcb0] sm:$0xff]
                %581 = vst [vmem:[%s151 + $0x6b0] sm:$0xff] %v580
                %v582 = vld [vmem:[%s150 + $0xcb8] sm:$0xff]
                %583 = vst [vmem:[%s151 + $0x6b8] sm:$0xff] %v582
                %v584 = vld [vmem:[%s150 + $0xcc0] sm:$0xff]
                %585 = vst [vmem:[%s151 + $0x6c0] sm:$0xff] %v584
                %v586 = vld [vmem:[%s150 + $0xcc8] sm:$0xff]
                %587 = vst [vmem:[%s151 + $0x6c8] sm:$0xff] %v586
                %v588 = vld [vmem:[%s150 + $0xcd0] sm:$0xff]
                %589 = vst [vmem:[%s151 + $0x6d0] sm:$0xff] %v588
                %v590 = vld [vmem:[%s150 + $0xcd8] sm:$0xff]
                %591 = vst [vmem:[%s151 + $0x6d8] sm:$0xff] %v590
                %v592 = vld [vmem:[%s150 + $0xce0] sm:$0xff]
                %593 = vst [vmem:[%s151 + $0x6e0] sm:$0xff] %v592
                %v594 = vld [vmem:[%s150 + $0xce8] sm:$0xff]
                %595 = vst [vmem:[%s151 + $0x6e8] sm:$0xff] %v594
                %v596 = vld [vmem:[%s150 + $0xcf0] sm:$0xff]
                %597 = vst [vmem:[%s151 + $0x6f0] sm:$0xff] %v596
                %v598 = vld [vmem:[%s150 + $0xcf8] sm:$0xff]
                %599 = vst [vmem:[%s151 + $0x6f8] sm:$0xff] %v598
                %v600 = vld [vmem:[%s150 + $0xe00] sm:$0xff]
                %601 = vst [vmem:[%s151 + $0x700] sm:$0xff] %v600
                %v602 = vld [vmem:[%s150 + $0xe08] sm:$0xff]
                %603 = vst [vmem:[%s151 + $0x708] sm:$0xff] %v602
                %v604 = vld [vmem:[%s150 + $0xe10] sm:$0xff]
                %605 = vst [vmem:[%s151 + $0x710] sm:$0xff] %v604
                %v606 = vld [vmem:[%s150 + $0xe18] sm:$0xff]
                %607 = vst [vmem:[%s151 + $0x718] sm:$0xff] %v606
                %v608 = vld [vmem:[%s150 + $0xe20] sm:$0xff]
                %609 = vst [vmem:[%s151 + $0x720] sm:$0xff] %v608
                %v610 = vld [vmem:[%s150 + $0xe28] sm:$0xff]
                %611 = vst [vmem:[%s151 + $0x728] sm:$0xff] %v610
                %v612 = vld [vmem:[%s150 + $0xe30] sm:$0xff]
                %613 = vst [vmem:[%s151 + $0x730] sm:$0xff] %v612
                %v614 = vld [vmem:[%s150 + $0xe38] sm:$0xff]
                %615 = vst [vmem:[%s151 + $0x738] sm:$0xff] %v614
                %v616 = vld [vmem:[%s150 + $0xe40] sm:$0xff]
                %617 = vst [vmem:[%s151 + $0x740] sm:$0xff] %v616
                %v618 = vld [vmem:[%s150 + $0xe48] sm:$0xff]
                %619 = vst [vmem:[%s151 + $0x748] sm:$0xff] %v618
                %v620 = vld [vmem:[%s150 + $0xe50] sm:$0xff]
                %621 = vst [vmem:[%s151 + $0x750] sm:$0xff] %v620
                %v622 = vld [vmem:[%s150 + $0xe58] sm:$0xff]
                %623 = vst [vmem:[%s151 + $0x758] sm:$0xff] %v622
                %v624 = vld [vmem:[%s150 + $0xe60] sm:$0xff]
                %625 = vst [vmem:[%s151 + $0x760] sm:$0xff] %v624
                %v626 = vld [vmem:[%s150 + $0xe68] sm:$0xff]
                %627 = vst [vmem:[%s151 + $0x768] sm:$0xff] %v626
                %v628 = vld [vmem:[%s150 + $0xe70] sm:$0xff]
                %629 = vst [vmem:[%s151 + $0x770] sm:$0xff] %v628
                %v630 = vld [vmem:[%s150 + $0xe78] sm:$0xff]
                %631 = vst [vmem:[%s151 + $0x778] sm:$0xff] %v630
                %v632 = vld [vmem:[%s150 + $0xe80] sm:$0xff]
                %633 = vst [vmem:[%s151 + $0x780] sm:$0xff] %v632
                %v634 = vld [vmem:[%s150 + $0xe88] sm:$0xff]
                %635 = vst [vmem:[%s151 + $0x788] sm:$0xff] %v634
                %v636 = vld [vmem:[%s150 + $0xe90] sm:$0xff]
                %637 = vst [vmem:[%s151 + $0x790] sm:$0xff] %v636
                %v638 = vld [vmem:[%s150 + $0xe98] sm:$0xff]
                %639 = vst [vmem:[%s151 + $0x798] sm:$0xff] %v638
                %v640 = vld [vmem:[%s150 + $0xea0] sm:$0xff]
                %641 = vst [vmem:[%s151 + $0x7a0] sm:$0xff] %v640
                %v642 = vld [vmem:[%s150 + $0xea8] sm:$0xff]
                %643 = vst [vmem:[%s151 + $0x7a8] sm:$0xff] %v642
                %v644 = vld [vmem:[%s150 + $0xeb0] sm:$0xff]
                %645 = vst [vmem:[%s151 + $0x7b0] sm:$0xff] %v644
                %v646 = vld [vmem:[%s150 + $0xeb8] sm:$0xff]
                %647 = vst [vmem:[%s151 + $0x7b8] sm:$0xff] %v646
                %v648 = vld [vmem:[%s150 + $0xec0] sm:$0xff]
                %649 = vst [vmem:[%s151 + $0x7c0] sm:$0xff] %v648
                %v650 = vld [vmem:[%s150 + $0xec8] sm:$0xff]
                %651 = vst [vmem:[%s151 + $0x7c8] sm:$0xff] %v650
                %v652 = vld [vmem:[%s150 + $0xed0] sm:$0xff]
                %653 = vst [vmem:[%s151 + $0x7d0] sm:$0xff] %v652
                %v654 = vld [vmem:[%s150 + $0xed8] sm:$0xff]
                %655 = vst [vmem:[%s151 + $0x7d8] sm:$0xff] %v654
                %v656 = vld [vmem:[%s150 + $0xee0] sm:$0xff]
                %657 = vst [vmem:[%s151 + $0x7e0] sm:$0xff] %v656
                %v658 = vld [vmem:[%s150 + $0xee8] sm:$0xff]
                %659 = vst [vmem:[%s151 + $0x7e8] sm:$0xff] %v658
                %v660 = vld [vmem:[%s150 + $0xef0] sm:$0xff]
                %661 = vst [vmem:[%s151 + $0x7f0] sm:$0xff] %v660
                %v662 = vld [vmem:[%s150 + $0xef8] sm:$0xff]
                %663 = vst [vmem:[%s151 + $0x7f8] sm:$0xff] %v662
              $region37: #{img_csnn_ae_v3_forward.3} parent=31 // loop_footer
                %s149 = sadd.s32 1, %s145
              $region38: #{img_csnn_ae_v3_forward.3} parent=31 // loop_footer_branch
                %144 = sbr.rel target = $region34
              $region39: #{img_csnn_ae_v3_forward.3} parent=31 // loop_exit
                _
            $region32: #{img_csnn_ae_v3_forward.3} parent=27 // pred_fallthru
              _
            // Predicated region
            $region40: #{img_csnn_ae_v3_forward.3} parent=27 // pred_check
              _
            $region41: #{img_csnn_ae_v3_forward.3} parent=27 // pred_check_branch
              %665 = sbr.rel target = $region43
            $region42: #{img_csnn_ae_v3_forward.3} parent=27 // pred_region
              _
            $region43: #{img_csnn_ae_v3_forward.3} parent=27 // pred_fallthru
              _
          $region28: #{img_csnn_ae_v3_forward.3} parent=23 // pred_fallthru
            _
          %666 = vnop
        $region24: #{img_csnn_ae_v3_forward.3} parent=19 // pred_fallthru
          _
        // Predicated region
        $region44: #{img_csnn_ae_v3_forward.3} parent=19 // pred_check
          %p667 = pneg %p76
        $region45: #{img_csnn_ae_v3_forward.3} parent=19 // pred_check_branch
          %669 = sbr.rel (%p667) target = $region47
        $region46: #{img_csnn_ae_v3_forward.3} parent=19 // pred_region
          %s670 = smul.u32 32, %s9
          %p671 = scmp.lt.s32.totalorder %s670, 63
          %s672 = scalar_select %p671, %s670, 63
          %s673 = scalar_lea.vmem %s2, %s672
          %s674 = smul.u32 32, %s9
        $region47: #{img_csnn_ae_v3_forward.3} parent=19 // pred_fallthru
          _
      $region20: #{img_csnn_ae_v3_forward.3} parent=5 // pred_fallthru
        _
      %p675 = scmp.le.s32.totalorder 1, %s9
      %p676 = scmp.lt.s32.totalorder %s9, 3
      %p677 = pnand %p675, %p676
      %p678 = pneg %p677
      // Predicated region
      $region48: #{img_csnn_ae_v3_forward.3} parent=5 // pred_check
        _
      $region49: #{img_csnn_ae_v3_forward.3} parent=5 // pred_check_branch
        %680 = sbr.rel (%p677) target = $region51
      $region50: #{img_csnn_ae_v3_forward.3} parent=5 // pred_region
        %s681 = ssub.s32 %s9, 1
        %s682 = sand.u32 %s43, 1
        %s683 = sand.u32 %s43, 1
        %s684 = smul.addr %s683, 2048
        %s685 = scalar_lea.vmem [#allocation2], %s684
        // Predicated region
        $region52: #{img_csnn_ae_v3_forward.3} parent=50 // pred_check
          %p686 = pneg %p56
        $region53: #{img_csnn_ae_v3_forward.3} parent=50 // pred_check_branch
          %688 = sbr.rel (%p686) target = $region55
        $region54: #{img_csnn_ae_v3_forward.3} parent=50 // pred_region
          _
        $region55: #{img_csnn_ae_v3_forward.3} parent=50 // pred_fallthru
          _
        %p689 = pneg %p30
        %p690 = pneg %p27
        %s691 = sand.u32 %s43, 1
        %s692 = sand.u32 %s43, 1
        %s693 = smul.addr %s692, 2048
        %s694 = scalar_lea.vmem [#allocation2], %s693
        %p695 = pneg %p56
        %p696 = pneg %p53
        %s697 = smul.u32 32, %s14
        %p698 = scmp.lt.s32.totalorder %s697, 63
        %s699 = scalar_select %p698, %s697, 63
        %s700 = scalar_lea.vmem %s2, %s699
        %p701 = pneg %p82
        %p702 = pneg %p79
        %p703 = pneg %p108
        %p704 = pneg %p105
        %s705 = smul.u32 32, %s14
        %p706 = scmp.lt.s32.totalorder %s705, 63
        %s707 = scalar_select %p706, %s705, 63
        %s708 = smul.addr %s707, 2
        %s709 = scalar_lea.vmem %s3, %s708
        %s710 = smul.u32 32, %s14
        %s711 = smul.u32 32, %s14
        %p712 = scmp.lt.s32.totalorder %s711, 63
        %s713 = scalar_select %p712, %s711, 63
        %s714 = scalar_lea.vmem %s2, %s713
        %s715 = smul.u32 32, %s14
        %s716 = smul.u32 32, %s14
        %p717 = scmp.lt.s32.totalorder %s716, 63
        %s718 = scalar_select %p717, %s716, 63
        %s719 = smul.addr %s718, 2
        %s720 = scalar_lea.vmem %s3, %s719
        %s721 = smul.u32 32, %s14
        %v722 = vld [vmem:[%s0] sm:$0x3]
        %v723 = vld [vmem:[%s685] sm:$0xff]
        %v724 = vld [vmem:[%s685 + $0x8] sm:$0xff]
        %v725 = vld [vmem:[%s685 + $0x10] sm:$0xff]
        %v726 = vld [vmem:[%s685 + $0x18] sm:$0xff]
        %v727 = vld [vmem:[%s685 + $0x20] sm:$0xff]
        %v728 = vld [vmem:[%s685 + $0x28] sm:$0xff]
        %v729 = vld [vmem:[%s685 + $0x30] sm:$0xff]
        %v730 = vld [vmem:[%s685 + $0x38] sm:$0xff]
        %v731 = vld [vmem:[%s685 + $0x40] sm:$0xff]
        %v732 = vld [vmem:[%s685 + $0x48] sm:$0xff]
        %v733 = vld [vmem:[%s685 + $0x50] sm:$0xff]
        %v734 = vld [vmem:[%s685 + $0x58] sm:$0xff]
        %v735 = vld [vmem:[%s685 + $0x60] sm:$0xff]
        %v736 = vld [vmem:[%s685 + $0x68] sm:$0xff]
        %v737 = vld [vmem:[%s685 + $0x70] sm:$0xff]
        %v738 = vld [vmem:[%s685 + $0x78] sm:$0xff]
        %v739 = vld [vmem:[%s685 + $0x80] sm:$0xff]
        %v740 = vld [vmem:[%s685 + $0x88] sm:$0xff]
        %v741 = vld [vmem:[%s685 + $0x90] sm:$0xff]
        %v742 = vld [vmem:[%s685 + $0x98] sm:$0xff]
        %v743 = vld [vmem:[%s685 + $0xa0] sm:$0xff]
        %v744 = vld [vmem:[%s685 + $0xa8] sm:$0xff]
        %v745 = vld [vmem:[%s685 + $0xb0] sm:$0xff]
        %v746 = vld [vmem:[%s685 + $0xb8] sm:$0xff]
        %v747 = vld [vmem:[%s685 + $0xc0] sm:$0xff]
        %v748 = vld [vmem:[%s685 + $0xc8] sm:$0xff]
        %v749 = vld [vmem:[%s685 + $0xd0] sm:$0xff]
        %v750 = vld [vmem:[%s685 + $0xd8] sm:$0xff]
        %v751 = vld [vmem:[%s685 + $0xe0] sm:$0xff]
        %v752 = vld [vmem:[%s685 + $0xe8] sm:$0xff]
        %v753 = vld [vmem:[%s685 + $0xf0] sm:$0xff]
        %v754 = vld [vmem:[%s685 + $0xf8] sm:$0xff]
        %v755 = vld [vmem:[%s685 + $0x100] sm:$0xff]
        %v756 = vld [vmem:[%s685 + $0x108] sm:$0xff]
        %v757 = vld [vmem:[%s685 + $0x110] sm:$0xff]
        %v758 = vld [vmem:[%s685 + $0x118] sm:$0xff]
        %v759 = vld [vmem:[%s685 + $0x120] sm:$0xff]
        %v760 = vld [vmem:[%s685 + $0x128] sm:$0xff]
        %v761 = vld [vmem:[%s685 + $0x130] sm:$0xff]
        %v762 = vld [vmem:[%s685 + $0x138] sm:$0xff]
        %v763 = vld [vmem:[%s685 + $0x140] sm:$0xff]
        %v764 = vld [vmem:[%s685 + $0x148] sm:$0xff]
        %v765 = vld [vmem:[%s685 + $0x150] sm:$0xff]
        %v766 = vld [vmem:[%s685 + $0x158] sm:$0xff]
        %v767 = vld [vmem:[%s685 + $0x160] sm:$0xff]
        %v768 = vld [vmem:[%s685 + $0x168] sm:$0xff]
        %v769 = vld [vmem:[%s685 + $0x170] sm:$0xff]
        %v770 = vld [vmem:[%s685 + $0x178] sm:$0xff]
        %v771 = vld [vmem:[%s685 + $0x180] sm:$0xff]
        %v772 = vld [vmem:[%s685 + $0x188] sm:$0xff]
        %v773 = vld [vmem:[%s685 + $0x190] sm:$0xff]
        %v774 = vld [vmem:[%s685 + $0x198] sm:$0xff]
        %v775 = vld [vmem:[%s685 + $0x1a0] sm:$0xff]
        %v776 = vld [vmem:[%s685 + $0x1a8] sm:$0xff]
        %v777 = vld [vmem:[%s685 + $0x1b0] sm:$0xff]
        %v778 = vld [vmem:[%s685 + $0x1b8] sm:$0xff]
        %v779 = vld [vmem:[%s685 + $0x1c0] sm:$0xff]
        %v780 = vld [vmem:[%s685 + $0x1c8] sm:$0xff]
        %v781 = vld [vmem:[%s685 + $0x1d0] sm:$0xff]
        %v782 = vld [vmem:[%s685 + $0x1d8] sm:$0xff]
        %v783 = vld [vmem:[%s685 + $0x1e0] sm:$0xff]
        %v784 = vld [vmem:[%s685 + $0x1e8] sm:$0xff]
        %v785 = vld [vmem:[%s685 + $0x1f0] sm:$0xff]
        %v786 = vld [vmem:[%s685 + $0x1f8] sm:$0xff]
        %v787 = vld [vmem:[%s685 + $0x200] sm:$0xff]
        %v788 = vld [vmem:[%s685 + $0x208] sm:$0xff]
        %v789 = vld [vmem:[%s685 + $0x210] sm:$0xff]
        %v790 = vld [vmem:[%s685 + $0x218] sm:$0xff]
        %v791 = vld [vmem:[%s685 + $0x220] sm:$0xff]
        %v792 = vld [vmem:[%s685 + $0x228] sm:$0xff]
        %v793 = vld [vmem:[%s685 + $0x230] sm:$0xff]
        %v794 = vld [vmem:[%s685 + $0x238] sm:$0xff]
        %v795 = vld [vmem:[%s685 + $0x240] sm:$0xff]
        %v796 = vld [vmem:[%s685 + $0x248] sm:$0xff]
        %v797 = vld [vmem:[%s685 + $0x250] sm:$0xff]
        %v798 = vld [vmem:[%s685 + $0x258] sm:$0xff]
        %v799 = vld [vmem:[%s685 + $0x260] sm:$0xff]
        %v800 = vld [vmem:[%s685 + $0x268] sm:$0xff]
        %v801 = vld [vmem:[%s685 + $0x270] sm:$0xff]
        %v802 = vld [vmem:[%s685 + $0x278] sm:$0xff]
        %v803 = vld [vmem:[%s685 + $0x280] sm:$0xff]
        %v804 = vld [vmem:[%s685 + $0x288] sm:$0xff]
        %v805 = vld [vmem:[%s685 + $0x290] sm:$0xff]
        %v806 = vld [vmem:[%s685 + $0x298] sm:$0xff]
        %v807 = vld [vmem:[%s685 + $0x2a0] sm:$0xff]
        %v808 = vld [vmem:[%s685 + $0x2a8] sm:$0xff]
        %v809 = vld [vmem:[%s685 + $0x2b0] sm:$0xff]
        %v810 = vld [vmem:[%s685 + $0x2b8] sm:$0xff]
        %v811 = vld [vmem:[%s685 + $0x2c0] sm:$0xff]
        %v812 = vld [vmem:[%s685 + $0x2c8] sm:$0xff]
        %v813 = vld [vmem:[%s685 + $0x2d0] sm:$0xff]
        %v814 = vld [vmem:[%s685 + $0x2d8] sm:$0xff]
        %v815 = vld [vmem:[%s685 + $0x2e0] sm:$0xff]
        %v816 = vld [vmem:[%s685 + $0x2e8] sm:$0xff]
        %v817 = vld [vmem:[%s685 + $0x2f0] sm:$0xff]
        %v818 = vld [vmem:[%s685 + $0x2f8] sm:$0xff]
        %v819 = vld [vmem:[%s685 + $0x300] sm:$0xff]
        %v820 = vld [vmem:[%s685 + $0x308] sm:$0xff]
        %v821 = vld [vmem:[%s685 + $0x310] sm:$0xff]
        %v822 = vld [vmem:[%s685 + $0x318] sm:$0xff]
        %v823 = vld [vmem:[%s685 + $0x320] sm:$0xff]
        %v824 = vld [vmem:[%s685 + $0x328] sm:$0xff]
        %v825 = vld [vmem:[%s685 + $0x330] sm:$0xff]
        %v826 = vld [vmem:[%s685 + $0x338] sm:$0xff]
        %v827 = vld [vmem:[%s685 + $0x340] sm:$0xff]
        %v828 = vld [vmem:[%s685 + $0x348] sm:$0xff]
        %v829 = vld [vmem:[%s685 + $0x350] sm:$0xff]
        %v830 = vld [vmem:[%s685 + $0x358] sm:$0xff]
        %v831 = vld [vmem:[%s685 + $0x360] sm:$0xff]
        %v832 = vld [vmem:[%s685 + $0x368] sm:$0xff]
        %v833 = vld [vmem:[%s685 + $0x370] sm:$0xff]
        %v834 = vld [vmem:[%s685 + $0x378] sm:$0xff]
        %v835 = vld [vmem:[%s685 + $0x380] sm:$0xff]
        %v836 = vld [vmem:[%s685 + $0x388] sm:$0xff]
        %v837 = vld [vmem:[%s685 + $0x390] sm:$0xff]
        %v838 = vld [vmem:[%s685 + $0x398] sm:$0xff]
        %v839 = vld [vmem:[%s685 + $0x3a0] sm:$0xff]
        %v840 = vld [vmem:[%s685 + $0x3a8] sm:$0xff]
        %v841 = vld [vmem:[%s685 + $0x3b0] sm:$0xff]
        %v842 = vld [vmem:[%s685 + $0x3b8] sm:$0xff]
        %v843 = vld [vmem:[%s685 + $0x3c0] sm:$0xff]
        %v844 = vld [vmem:[%s685 + $0x3c8] sm:$0xff]
        %v845 = vld [vmem:[%s685 + $0x3d0] sm:$0xff]
        %v846 = vld [vmem:[%s685 + $0x3d8] sm:$0xff]
        %v847 = vld [vmem:[%s685 + $0x3e0] sm:$0xff]
        %v848 = vld [vmem:[%s685 + $0x3e8] sm:$0xff]
        %v849 = vld [vmem:[%s685 + $0x3f0] sm:$0xff]
        %v850 = vld [vmem:[%s685 + $0x3f8] sm:$0xff]
        %v851 = vld [vmem:[%s685 + $0x400] sm:$0xff]
        %v852 = vld [vmem:[%s685 + $0x408] sm:$0xff]
        %v853 = vld [vmem:[%s685 + $0x410] sm:$0xff]
        %v854 = vld [vmem:[%s685 + $0x418] sm:$0xff]
        %v855 = vld [vmem:[%s685 + $0x420] sm:$0xff]
        %v856 = vld [vmem:[%s685 + $0x428] sm:$0xff]
        %v857 = vld [vmem:[%s685 + $0x430] sm:$0xff]
        %v858 = vld [vmem:[%s685 + $0x438] sm:$0xff]
        %v859 = vld [vmem:[%s685 + $0x440] sm:$0xff]
        %v860 = vld [vmem:[%s685 + $0x448] sm:$0xff]
        %v861 = vld [vmem:[%s685 + $0x450] sm:$0xff]
        %v862 = vld [vmem:[%s685 + $0x458] sm:$0xff]
        %v863 = vld [vmem:[%s685 + $0x460] sm:$0xff]
        %v864 = vld [vmem:[%s685 + $0x468] sm:$0xff]
        %v865 = vld [vmem:[%s685 + $0x470] sm:$0xff]
        %v866 = vld [vmem:[%s685 + $0x478] sm:$0xff]
        %v867 = vld [vmem:[%s685 + $0x480] sm:$0xff]
        %v868 = vld [vmem:[%s685 + $0x488] sm:$0xff]
        %v869 = vld [vmem:[%s685 + $0x490] sm:$0xff]
        %v870 = vld [vmem:[%s685 + $0x498] sm:$0xff]
        %v871 = vld [vmem:[%s685 + $0x4a0] sm:$0xff]
        %v872 = vld [vmem:[%s685 + $0x4a8] sm:$0xff]
        %v873 = vld [vmem:[%s685 + $0x4b0] sm:$0xff]
        %v874 = vld [vmem:[%s685 + $0x4b8] sm:$0xff]
        %v875 = vld [vmem:[%s685 + $0x4c0] sm:$0xff]
        %v876 = vld [vmem:[%s685 + $0x4c8] sm:$0xff]
        %v877 = vld [vmem:[%s685 + $0x4d0] sm:$0xff]
        %v878 = vld [vmem:[%s685 + $0x4d8] sm:$0xff]
        %v879 = vld [vmem:[%s685 + $0x4e0] sm:$0xff]
        %v880 = vld [vmem:[%s685 + $0x4e8] sm:$0xff]
        %v881 = vld [vmem:[%s685 + $0x4f0] sm:$0xff]
        %v882 = vld [vmem:[%s685 + $0x4f8] sm:$0xff]
        %v883 = vld [vmem:[%s685 + $0x500] sm:$0xff]
        %v884 = vld [vmem:[%s685 + $0x508] sm:$0xff]
        %v885 = vld [vmem:[%s685 + $0x510] sm:$0xff]
        %v886 = vld [vmem:[%s685 + $0x518] sm:$0xff]
        %v887 = vld [vmem:[%s685 + $0x520] sm:$0xff]
        %v888 = vld [vmem:[%s685 + $0x528] sm:$0xff]
        %v889 = vld [vmem:[%s685 + $0x530] sm:$0xff]
        %v890 = vld [vmem:[%s685 + $0x538] sm:$0xff]
        %v891 = vld [vmem:[%s685 + $0x540] sm:$0xff]
        %v892 = vld [vmem:[%s685 + $0x548] sm:$0xff]
        %v893 = vld [vmem:[%s685 + $0x550] sm:$0xff]
        %v894 = vld [vmem:[%s685 + $0x558] sm:$0xff]
        %v895 = vld [vmem:[%s685 + $0x560] sm:$0xff]
        %v896 = vld [vmem:[%s685 + $0x568] sm:$0xff]
        %v897 = vld [vmem:[%s685 + $0x570] sm:$0xff]
        %v898 = vld [vmem:[%s685 + $0x578] sm:$0xff]
        %v899 = vld [vmem:[%s685 + $0x580] sm:$0xff]
        %v900 = vld [vmem:[%s685 + $0x588] sm:$0xff]
        %v901 = vld [vmem:[%s685 + $0x590] sm:$0xff]
        %v902 = vld [vmem:[%s685 + $0x598] sm:$0xff]
        %v903 = vld [vmem:[%s685 + $0x5a0] sm:$0xff]
        %v904 = vld [vmem:[%s685 + $0x5a8] sm:$0xff]
        %v905 = vld [vmem:[%s685 + $0x5b0] sm:$0xff]
        %v906 = vld [vmem:[%s685 + $0x5b8] sm:$0xff]
        %v907 = vld [vmem:[%s685 + $0x5c0] sm:$0xff]
        %v908 = vld [vmem:[%s685 + $0x5c8] sm:$0xff]
        %v909 = vld [vmem:[%s685 + $0x5d0] sm:$0xff]
        %v910 = vld [vmem:[%s685 + $0x5d8] sm:$0xff]
        %v911 = vld [vmem:[%s685 + $0x5e0] sm:$0xff]
        %v912 = vld [vmem:[%s685 + $0x5e8] sm:$0xff]
        %v913 = vld [vmem:[%s685 + $0x5f0] sm:$0xff]
        %v914 = vld [vmem:[%s685 + $0x5f8] sm:$0xff]
        %v915 = vld [vmem:[%s685 + $0x600] sm:$0xff]
        %v916 = vld [vmem:[%s685 + $0x608] sm:$0xff]
        %v917 = vld [vmem:[%s685 + $0x610] sm:$0xff]
        %v918 = vld [vmem:[%s685 + $0x618] sm:$0xff]
        %v919 = vld [vmem:[%s685 + $0x620] sm:$0xff]
        %v920 = vld [vmem:[%s685 + $0x628] sm:$0xff]
        %v921 = vld [vmem:[%s685 + $0x630] sm:$0xff]
        %v922 = vld [vmem:[%s685 + $0x638] sm:$0xff]
        %v923 = vld [vmem:[%s685 + $0x640] sm:$0xff]
        %v924 = vld [vmem:[%s685 + $0x648] sm:$0xff]
        %v925 = vld [vmem:[%s685 + $0x650] sm:$0xff]
        %v926 = vld [vmem:[%s685 + $0x658] sm:$0xff]
        %v927 = vld [vmem:[%s685 + $0x660] sm:$0xff]
        %v928 = vld [vmem:[%s685 + $0x668] sm:$0xff]
        %v929 = vld [vmem:[%s685 + $0x670] sm:$0xff]
        %v930 = vld [vmem:[%s685 + $0x678] sm:$0xff]
        %v931 = vld [vmem:[%s685 + $0x680] sm:$0xff]
        %v932 = vld [vmem:[%s685 + $0x688] sm:$0xff]
        %v933 = vld [vmem:[%s685 + $0x690] sm:$0xff]
        %v934 = vld [vmem:[%s685 + $0x698] sm:$0xff]
        %v935 = vld [vmem:[%s685 + $0x6a0] sm:$0xff]
        %v936 = vld [vmem:[%s685 + $0x6a8] sm:$0xff]
        %v937 = vld [vmem:[%s685 + $0x6b0] sm:$0xff]
        %v938 = vld [vmem:[%s685 + $0x6b8] sm:$0xff]
        %v939 = vld [vmem:[%s685 + $0x6c0] sm:$0xff]
        %v940 = vld [vmem:[%s685 + $0x6c8] sm:$0xff]
        %v941 = vld [vmem:[%s685 + $0x6d0] sm:$0xff]
        %v942 = vld [vmem:[%s685 + $0x6d8] sm:$0xff]
        %v943 = vld [vmem:[%s685 + $0x6e0] sm:$0xff]
        %v944 = vld [vmem:[%s685 + $0x6e8] sm:$0xff]
        %v945 = vld [vmem:[%s685 + $0x6f0] sm:$0xff]
        %v946 = vld [vmem:[%s685 + $0x6f8] sm:$0xff]
        %v947 = vld [vmem:[%s685 + $0x700] sm:$0xff]
        %v948 = vld [vmem:[%s685 + $0x708] sm:$0xff]
        %v949 = vld [vmem:[%s685 + $0x710] sm:$0xff]
        %v950 = vld [vmem:[%s685 + $0x718] sm:$0xff]
        %v951 = vld [vmem:[%s685 + $0x720] sm:$0xff]
        %v952 = vld [vmem:[%s685 + $0x728] sm:$0xff]
        %v953 = vld [vmem:[%s685 + $0x730] sm:$0xff]
        %v954 = vld [vmem:[%s685 + $0x738] sm:$0xff]
        %v955 = vld [vmem:[%s685 + $0x740] sm:$0xff]
        %v956 = vld [vmem:[%s685 + $0x748] sm:$0xff]
        %v957 = vld [vmem:[%s685 + $0x750] sm:$0xff]
        %v958 = vld [vmem:[%s685 + $0x758] sm:$0xff]
        %v959 = vld [vmem:[%s685 + $0x760] sm:$0xff]
        %v960 = vld [vmem:[%s685 + $0x768] sm:$0xff]
        %v961 = vld [vmem:[%s685 + $0x770] sm:$0xff]
        %v962 = vld [vmem:[%s685 + $0x778] sm:$0xff]
        %v963 = vld [vmem:[%s685 + $0x780] sm:$0xff]
        %v964 = vld [vmem:[%s685 + $0x788] sm:$0xff]
        %v965 = vld [vmem:[%s685 + $0x790] sm:$0xff]
        %v966 = vld [vmem:[%s685 + $0x798] sm:$0xff]
        %v967 = vld [vmem:[%s685 + $0x7a0] sm:$0xff]
        %v968 = vld [vmem:[%s685 + $0x7a8] sm:$0xff]
        %v969 = vld [vmem:[%s685 + $0x7b0] sm:$0xff]
        %v970 = vld [vmem:[%s685 + $0x7b8] sm:$0xff]
        %v971 = vld [vmem:[%s685 + $0x7c0] sm:$0xff]
        %v972 = vld [vmem:[%s685 + $0x7c8] sm:$0xff]
        %v973 = vld [vmem:[%s685 + $0x7d0] sm:$0xff]
        %v974 = vld [vmem:[%s685 + $0x7d8] sm:$0xff]
        %v975 = vld [vmem:[%s685 + $0x7e0] sm:$0xff]
        %v976 = vld [vmem:[%s685 + $0x7e8] sm:$0xff]
        %v977 = vld [vmem:[%s685 + $0x7f0] sm:$0xff]
        %v978 = vld [vmem:[%s685 + $0x7f8] sm:$0xff]
        %v979 = vld [vmem:[%s714] sm:$0xff]
        %v980 = vld [vmem:[%s714 + $0x8] sm:$0xff]
        %v981 = vld [vmem:[%s714 + $0x10] sm:$0xff]
        %v982 = vld [vmem:[%s714 + $0x18] sm:$0xff]
        %v987 = vlaneseq
        %v988 = vshrl.u32 %v987, 7
        %v989 = vsub.s32 0, %v988
        %v990 = vrot.slane %v979, %v989
        %v991 = vlaneseq
        %v992 = vshrl.u32 %v991, 7
        %v993 = vsub.s32 1, %v992
        %v994 = vrot.slane %v979, %v993
        %v995 = vlaneseq
        %v996 = vshrl.u32 %v995, 7
        %v997 = vsub.s32 2, %v996
        %v998 = vrot.slane %v979, %v997
        %v999 = vlaneseq
        %v1000 = vshrl.u32 %v999, 7
        %v1001 = vsub.s32 3, %v1000
        %v1002 = vrot.slane %v979, %v1001
        %v1003 = vlaneseq
        %v1004 = vshrl.u32 %v1003, 7
        %v1005 = vsub.s32 4, %v1004
        %v1006 = vrot.slane %v979, %v1005
        %v1007 = vlaneseq
        %v1008 = vshrl.u32 %v1007, 7
        %v1009 = vsub.s32 5, %v1008
        %v1010 = vrot.slane %v979, %v1009
        %v1011 = vlaneseq
        %v1012 = vshrl.u32 %v1011, 7
        %v1013 = vsub.s32 6, %v1012
        %v1014 = vrot.slane %v979, %v1013
        %v1015 = vlaneseq
        %v1016 = vshrl.u32 %v1015, 7
        %v1017 = vsub.s32 7, %v1016
        %v1018 = vrot.slane %v979, %v1017
        %v1019 = vlaneseq
        %v1020 = vshrl.u32 %v1019, 7
        %v1021 = vsub.s32 0, %v1020
        %v1022 = vrot.slane %v980, %v1021
        %v1023 = vlaneseq
        %v1024 = vshrl.u32 %v1023, 7
        %v1025 = vsub.s32 1, %v1024
        %v1026 = vrot.slane %v980, %v1025
        %v1027 = vlaneseq
        %v1028 = vshrl.u32 %v1027, 7
        %v1029 = vsub.s32 2, %v1028
        %v1030 = vrot.slane %v980, %v1029
        %v1031 = vlaneseq
        %v1032 = vshrl.u32 %v1031, 7
        %v1033 = vsub.s32 3, %v1032
        %v1034 = vrot.slane %v980, %v1033
        %v1035 = vlaneseq
        %v1036 = vshrl.u32 %v1035, 7
        %v1037 = vsub.s32 4, %v1036
        %v1038 = vrot.slane %v980, %v1037
        %v1039 = vlaneseq
        %v1040 = vshrl.u32 %v1039, 7
        %v1041 = vsub.s32 5, %v1040
        %v1042 = vrot.slane %v980, %v1041
        %v1043 = vlaneseq
        %v1044 = vshrl.u32 %v1043, 7
        %v1045 = vsub.s32 6, %v1044
        %v1046 = vrot.slane %v980, %v1045
        %v1047 = vlaneseq
        %v1048 = vshrl.u32 %v1047, 7
        %v1049 = vsub.s32 7, %v1048
        %v1050 = vrot.slane %v980, %v1049
        %v1051 = vlaneseq
        %v1052 = vshrl.u32 %v1051, 7
        %v1053 = vsub.s32 0, %v1052
        %v1054 = vrot.slane %v981, %v1053
        %v1055 = vlaneseq
        %v1056 = vshrl.u32 %v1055, 7
        %v1057 = vsub.s32 1, %v1056
        %v1058 = vrot.slane %v981, %v1057
        %v1059 = vlaneseq
        %v1060 = vshrl.u32 %v1059, 7
        %v1061 = vsub.s32 2, %v1060
        %v1062 = vrot.slane %v981, %v1061
        %v1063 = vlaneseq
        %v1064 = vshrl.u32 %v1063, 7
        %v1065 = vsub.s32 3, %v1064
        %v1066 = vrot.slane %v981, %v1065
        %v1067 = vlaneseq
        %v1068 = vshrl.u32 %v1067, 7
        %v1069 = vsub.s32 4, %v1068
        %v1070 = vrot.slane %v981, %v1069
        %v1071 = vlaneseq
        %v1072 = vshrl.u32 %v1071, 7
        %v1073 = vsub.s32 5, %v1072
        %v1074 = vrot.slane %v981, %v1073
        %v1075 = vlaneseq
        %v1076 = vshrl.u32 %v1075, 7
        %v1077 = vsub.s32 6, %v1076
        %v1078 = vrot.slane %v981, %v1077
        %v1079 = vlaneseq
        %v1080 = vshrl.u32 %v1079, 7
        %v1081 = vsub.s32 7, %v1080
        %v1082 = vrot.slane %v981, %v1081
        %v1083 = vlaneseq
        %v1084 = vshrl.u32 %v1083, 7
        %v1085 = vsub.s32 0, %v1084
        %v1086 = vrot.slane %v982, %v1085
        %v1087 = vlaneseq
        %v1088 = vshrl.u32 %v1087, 7
        %v1089 = vsub.s32 1, %v1088
        %v1090 = vrot.slane %v982, %v1089
        %v1091 = vlaneseq
        %v1092 = vshrl.u32 %v1091, 7
        %v1093 = vsub.s32 2, %v1092
        %v1094 = vrot.slane %v982, %v1093
        %v1095 = vlaneseq
        %v1096 = vshrl.u32 %v1095, 7
        %v1097 = vsub.s32 3, %v1096
        %v1098 = vrot.slane %v982, %v1097
        %v1099 = vlaneseq
        %v1100 = vshrl.u32 %v1099, 7
        %v1101 = vsub.s32 4, %v1100
        %v1102 = vrot.slane %v982, %v1101
        %v1103 = vlaneseq
        %v1104 = vshrl.u32 %v1103, 7
        %v1105 = vsub.s32 5, %v1104
        %v1106 = vrot.slane %v982, %v1105
        %v1107 = vlaneseq
        %v1108 = vshrl.u32 %v1107, 7
        %v1109 = vsub.s32 6, %v1108
        %v1110 = vrot.slane %v982, %v1109
        %v1111 = vlaneseq
        %v1112 = vshrl.u32 %v1111, 7
        %v1113 = vsub.s32 7, %v1112
        %v1114 = vrot.slane %v982, %v1113
        %vm1147 = vcmask 523264
        %v1149 = vsel %vm1147, %v722, 0
        %1151 = vmatprep.subr.mxu0 %v724
        %1152 = vmatpush1.msra.mxu0 %v723
        %1153 = vmatprep.subr.mxu0 %v756
        %1154 = vmatpush1.msra.mxu0 %v755
        %1155 = vmatprep.subr.mxu0 %v788
        %1156 = vmatpush1.msra.mxu0 %v787
        %1157 = vmatprep.subr.mxu0 %v820
        %1158 = vmatpush1.msra.mxu0 %v819
        %1159 = vmatprep.subr.mxu0 %v852
        %1160 = vmatpush1.msra.mxu0 %v851
        %1161 = vmatprep.subr.mxu0 %v884
        %1162 = vmatpush1.msra.mxu0 %v883
        %1163 = vmatprep.subr.mxu0 %v916
        %1164 = vmatpush1.msra.mxu0 %v915
        %1165 = vmatprep.subr.mxu0 %v948
        %1166 = vmatpush1.msra.mxu0 %v947
        %1167 = vmatprep.subr.mxu0 0.0
        %1168 = vmatpush1.msra.mxu0 0.0
        %1169 = vmatprep.subr.mxu0 0.0
        %1170 = vmatpush1.msra.mxu0 0.0
        %1171 = vmatprep.subr.mxu0 0.0
        %1172 = vmatpush1.msra.mxu0 0.0
        %1173 = vmatprep.subr.mxu0 0.0
        %1174 = vmatpush1.msra.mxu0 0.0
        %1175 = vmatprep.subr.mxu0 0.0
        %1176 = vmatpush1.msra.mxu0 0.0
        %1177 = vmatprep.subr.mxu0 0.0
        %1178 = vmatpush1.msra.mxu0 0.0
        %1179 = vmatprep.subr.mxu0 0.0
        %1180 = vmatpush1.msra.mxu0 0.0
        %1181 = vmatprep.subr.mxu0 0.0
        %1182 = vmatpush1.msra.mxu0 0.0
        %1183 = vmatprep.subr.mxu0 0.0
        %1184 = vmatpush1.msra.mxu0 0.0
        %1185 = vmatprep.subr.mxu0 0.0
        %1186 = vmatpush1.msra.mxu0 0.0
        %1187 = vmatprep.subr.mxu0 0.0
        %1188 = vmatpush1.msra.mxu0 0.0
        %1189 = vmatprep.subr.mxu0 0.0
        %1190 = vmatpush1.msra.mxu0 0.0
        %1191 = vmatprep.subr.mxu0 0.0
        %1192 = vmatpush1.msra.mxu0 0.0
        %1193 = vmatprep.subr.mxu0 0.0
        %1194 = vmatpush1.msra.mxu0 0.0
        %1195 = vmatprep.subr.mxu0 0.0
        %1196 = vmatpush1.msra.mxu0 0.0
        %1197 = vmatprep.subr.mxu0 0.0
        %1198 = vmatpush1.msra.mxu0 0.0
        %1199 = vmatprep.subr.mxu0 0.0
        %1200 = vmatpush1.msra.mxu0 0.0
        %1201 = vmatprep.subr.mxu0 0.0
        %1202 = vmatpush1.msra.mxu0 0.0
        %1203 = vmatprep.subr.mxu0 0.0
        %1204 = vmatpush1.msra.mxu0 0.0
        %1205 = vmatprep.subr.mxu0 0.0
        %1206 = vmatpush1.msra.mxu0 0.0
        %1207 = vmatprep.subr.mxu0 0.0
        %1208 = vmatpush1.msra.mxu0 0.0
        %1209 = vmatprep.subr.mxu0 0.0
        %1210 = vmatpush1.msra.mxu0 0.0
        %1211 = vmatprep.subr.mxu0 0.0
        %1212 = vmatpush1.msra.mxu0 0.0
        %1213 = vmatprep.subr.mxu0 0.0
        %1214 = vmatpush1.msra.mxu0 0.0
        %1215 = vmatprep.mubr.f32.mxu0 0.0
        %1216 = vmatmul.mubr.f32.gmra.mrb[0].mxu0 %v1149
        %v1217 = vpop.f32.mrb[0].mxu0
        %v1218 = vadd.f32 %v990, %v1217
        %v1219 = vpop.f32.mrb[0].mxu0
        %v1220 = vadd.f32 %v994, %v1219
        %1221 = vdwg.mxu0
        %1222 = vmatprep.subr.mxu0 %v726
        %1223 = vmatpush1.msra.mxu0 %v725
        %1224 = vmatprep.subr.mxu0 %v758
        %1225 = vmatpush1.msra.mxu0 %v757
        %1226 = vmatprep.subr.mxu0 %v790
        %1227 = vmatpush1.msra.mxu0 %v789
        %1228 = vmatprep.subr.mxu0 %v822
        %1229 = vmatpush1.msra.mxu0 %v821
        %1230 = vmatprep.subr.mxu0 %v854
        %1231 = vmatpush1.msra.mxu0 %v853
        %1232 = vmatprep.subr.mxu0 %v886
        %1233 = vmatpush1.msra.mxu0 %v885
        %1234 = vmatprep.subr.mxu0 %v918
        %1235 = vmatpush1.msra.mxu0 %v917
        %1236 = vmatprep.subr.mxu0 %v950
        %1237 = vmatpush1.msra.mxu0 %v949
        %1238 = vmatprep.subr.mxu0 0.0
        %1239 = vmatpush1.msra.mxu0 0.0
        %1240 = vmatprep.subr.mxu0 0.0
        %1241 = vmatpush1.msra.mxu0 0.0
        %1242 = vmatprep.subr.mxu0 0.0
        %1243 = vmatpush1.msra.mxu0 0.0
        %1244 = vmatprep.subr.mxu0 0.0
        %1245 = vmatpush1.msra.mxu0 0.0
        %1246 = vmatprep.subr.mxu0 0.0
        %1247 = vmatpush1.msra.mxu0 0.0
        %1248 = vmatprep.subr.mxu0 0.0
        %1249 = vmatpush1.msra.mxu0 0.0
        %1250 = vmatprep.subr.mxu0 0.0
        %1251 = vmatpush1.msra.mxu0 0.0
        %1252 = vmatprep.subr.mxu0 0.0
        %1253 = vmatpush1.msra.mxu0 0.0
        %1254 = vmatprep.subr.mxu0 0.0
        %1255 = vmatpush1.msra.mxu0 0.0
        %1256 = vmatprep.subr.mxu0 0.0
        %1257 = vmatpush1.msra.mxu0 0.0
        %1258 = vmatprep.subr.mxu0 0.0
        %1259 = vmatpush1.msra.mxu0 0.0
        %1260 = vmatprep.subr.mxu0 0.0
        %1261 = vmatpush1.msra.mxu0 0.0
        %1262 = vmatprep.subr.mxu0 0.0
        %1263 = vmatpush1.msra.mxu0 0.0
        %1264 = vmatprep.subr.mxu0 0.0
        %1265 = vmatpush1.msra.mxu0 0.0
        %1266 = vmatprep.subr.mxu0 0.0
        %1267 = vmatpush1.msra.mxu0 0.0
        %1268 = vmatprep.subr.mxu0 0.0
        %1269 = vmatpush1.msra.mxu0 0.0
        %1270 = vmatprep.subr.mxu0 0.0
        %1271 = vmatpush1.msra.mxu0 0.0
        %1272 = vmatprep.subr.mxu0 0.0
        %1273 = vmatpush1.msra.mxu0 0.0
        %1274 = vmatprep.subr.mxu0 0.0
        %1275 = vmatpush1.msra.mxu0 0.0
        %1276 = vmatprep.subr.mxu0 0.0
        %1277 = vmatpush1.msra.mxu0 0.0
        %1278 = vmatprep.subr.mxu0 0.0
        %1279 = vmatpush1.msra.mxu0 0.0
        %1280 = vmatprep.subr.mxu0 0.0
        %1281 = vmatpush1.msra.mxu0 0.0
        %1282 = vmatprep.subr.mxu0 0.0
        %1283 = vmatpush1.msra.mxu0 0.0
        %1284 = vmatprep.subr.mxu0 0.0
        %1285 = vmatpush1.msra.mxu0 0.0
        %1286 = vmatprep.mubr.f32.mxu0 0.0
        %1287 = vmatmul.mubr.f32.gmra.mrb[0].mxu0 %v1149
        %v1288 = vpop.f32.mrb[0].mxu0
        %v1289 = vadd.f32 %v998, %v1288
        %v1290 = vpop.f32.mrb[0].mxu0
        %v1291 = vadd.f32 %v1002, %v1290
        %1292 = vdwg.mxu0
        %1293 = vmatprep.subr.mxu0 %v728
        %1294 = vmatpush1.msra.mxu0 %v727
        %1295 = vmatprep.subr.mxu0 %v760
        %1296 = vmatpush1.msra.mxu0 %v759
        %1297 = vmatprep.subr.mxu0 %v792
        %1298 = vmatpush1.msra.mxu0 %v791
        %1299 = vmatprep.subr.mxu0 %v824
        %1300 = vmatpush1.msra.mxu0 %v823
        %1301 = vmatprep.subr.mxu0 %v856
        %1302 = vmatpush1.msra.mxu0 %v855
        %1303 = vmatprep.subr.mxu0 %v888
        %1304 = vmatpush1.msra.mxu0 %v887
        %1305 = vmatprep.subr.mxu0 %v920
        %1306 = vmatpush1.msra.mxu0 %v919
        %1307 = vmatprep.subr.mxu0 %v952
        %1308 = vmatpush1.msra.mxu0 %v951
        %1309 = vmatprep.subr.mxu0 0.0
        %1310 = vmatpush1.msra.mxu0 0.0
        %1311 = vmatprep.subr.mxu0 0.0
        %1312 = vmatpush1.msra.mxu0 0.0
        %1313 = vmatprep.subr.mxu0 0.0
        %1314 = vmatpush1.msra.mxu0 0.0
        %1315 = vmatprep.subr.mxu0 0.0
        %1316 = vmatpush1.msra.mxu0 0.0
        %1317 = vmatprep.subr.mxu0 0.0
        %1318 = vmatpush1.msra.mxu0 0.0
        %1319 = vmatprep.subr.mxu0 0.0
        %1320 = vmatpush1.msra.mxu0 0.0
        %1321 = vmatprep.subr.mxu0 0.0
        %1322 = vmatpush1.msra.mxu0 0.0
        %1323 = vmatprep.subr.mxu0 0.0
        %1324 = vmatpush1.msra.mxu0 0.0
        %1325 = vmatprep.subr.mxu0 0.0
        %1326 = vmatpush1.msra.mxu0 0.0
        %1327 = vmatprep.subr.mxu0 0.0
        %1328 = vmatpush1.msra.mxu0 0.0
        %1329 = vmatprep.subr.mxu0 0.0
        %1330 = vmatpush1.msra.mxu0 0.0
        %1331 = vmatprep.subr.mxu0 0.0
        %1332 = vmatpush1.msra.mxu0 0.0
        %1333 = vmatprep.subr.mxu0 0.0
        %1334 = vmatpush1.msra.mxu0 0.0
        %1335 = vmatprep.subr.mxu0 0.0
        %1336 = vmatpush1.msra.mxu0 0.0
        %1337 = vmatprep.subr.mxu0 0.0
        %1338 = vmatpush1.msra.mxu0 0.0
        %1339 = vmatprep.subr.mxu0 0.0
        %1340 = vmatpush1.msra.mxu0 0.0
        %1341 = vmatprep.subr.mxu0 0.0
        %1342 = vmatpush1.msra.mxu0 0.0
        %1343 = vmatprep.subr.mxu0 0.0
        %1344 = vmatpush1.msra.mxu0 0.0
        %1345 = vmatprep.subr.mxu0 0.0
        %1346 = vmatpush1.msra.mxu0 0.0
        %1347 = vmatprep.subr.mxu0 0.0
        %1348 = vmatpush1.msra.mxu0 0.0
        %1349 = vmatprep.subr.mxu0 0.0
        %1350 = vmatpush1.msra.mxu0 0.0
        %1351 = vmatprep.subr.mxu0 0.0
        %1352 = vmatpush1.msra.mxu0 0.0
        %1353 = vmatprep.subr.mxu0 0.0
        %1354 = vmatpush1.msra.mxu0 0.0
        %1355 = vmatprep.subr.mxu0 0.0
        %1356 = vmatpush1.msra.mxu0 0.0
        %1357 = vmatprep.mubr.f32.mxu0 0.0
        %1358 = vmatmul.mubr.f32.gmra.mrb[0].mxu0 %v1149
        %v1359 = vpop.f32.mrb[0].mxu0
        %v1360 = vadd.f32 %v1006, %v1359
        %v1361 = vpop.f32.mrb[0].mxu0
        %v1362 = vadd.f32 %v1010, %v1361
        %1363 = vdwg.mxu0
        %1364 = vmatprep.subr.mxu0 %v730
        %1365 = vmatpush1.msra.mxu0 %v729
        %1366 = vmatprep.subr.mxu0 %v762
        %1367 = vmatpush1.msra.mxu0 %v761
        %1368 = vmatprep.subr.mxu0 %v794
        %1369 = vmatpush1.msra.mxu0 %v793
        %1370 = vmatprep.subr.mxu0 %v826
        %1371 = vmatpush1.msra.mxu0 %v825
        %1372 = vmatprep.subr.mxu0 %v858
        %1373 = vmatpush1.msra.mxu0 %v857
        %1374 = vmatprep.subr.mxu0 %v890
        %1375 = vmatpush1.msra.mxu0 %v889
        %1376 = vmatprep.subr.mxu0 %v922
        %1377 = vmatpush1.msra.mxu0 %v921
        %1378 = vmatprep.subr.mxu0 %v954
        %1379 = vmatpush1.msra.mxu0 %v953
        %1380 = vmatprep.subr.mxu0 0.0
        %1381 = vmatpush1.msra.mxu0 0.0
        %1382 = vmatprep.subr.mxu0 0.0
        %1383 = vmatpush1.msra.mxu0 0.0
        %1384 = vmatprep.subr.mxu0 0.0
        %1385 = vmatpush1.msra.mxu0 0.0
        %1386 = vmatprep.subr.mxu0 0.0
        %1387 = vmatpush1.msra.mxu0 0.0
        %1388 = vmatprep.subr.mxu0 0.0
        %1389 = vmatpush1.msra.mxu0 0.0
        %1390 = vmatprep.subr.mxu0 0.0
        %1391 = vmatpush1.msra.mxu0 0.0
        %1392 = vmatprep.subr.mxu0 0.0
        %1393 = vmatpush1.msra.mxu0 0.0
        %1394 = vmatprep.subr.mxu0 0.0
        %1395 = vmatpush1.msra.mxu0 0.0
        %1396 = vmatprep.subr.mxu0 0.0
        %1397 = vmatpush1.msra.mxu0 0.0
        %1398 = vmatprep.subr.mxu0 0.0
        %1399 = vmatpush1.msra.mxu0 0.0
        %1400 = vmatprep.subr.mxu0 0.0
        %1401 = vmatpush1.msra.mxu0 0.0
        %1402 = vmatprep.subr.mxu0 0.0
        %1403 = vmatpush1.msra.mxu0 0.0
        %1404 = vmatprep.subr.mxu0 0.0
        %1405 = vmatpush1.msra.mxu0 0.0
        %1406 = vmatprep.subr.mxu0 0.0
        %1407 = vmatpush1.msra.mxu0 0.0
        %1408 = vmatprep.subr.mxu0 0.0
        %1409 = vmatpush1.msra.mxu0 0.0
        %1410 = vmatprep.subr.mxu0 0.0
        %1411 = vmatpush1.msra.mxu0 0.0
        %1412 = vmatprep.subr.mxu0 0.0
        %1413 = vmatpush1.msra.mxu0 0.0
        %1414 = vmatprep.subr.mxu0 0.0
        %1415 = vmatpush1.msra.mxu0 0.0
        %1416 = vmatprep.subr.mxu0 0.0
        %1417 = vmatpush1.msra.mxu0 0.0
        %1418 = vmatprep.subr.mxu0 0.0
        %1419 = vmatpush1.msra.mxu0 0.0
        %1420 = vmatprep.subr.mxu0 0.0
        %1421 = vmatpush1.msra.mxu0 0.0
        %1422 = vmatprep.subr.mxu0 0.0
        %1423 = vmatpush1.msra.mxu0 0.0
        %1424 = vmatprep.subr.mxu0 0.0
        %1425 = vmatpush1.msra.mxu0 0.0
        %1426 = vmatprep.subr.mxu0 0.0
        %1427 = vmatpush1.msra.mxu0 0.0
        %1428 = vmatprep.mubr.f32.mxu0 0.0
        %1429 = vmatmul.mubr.f32.gmra.mrb[0].mxu0 %v1149
        %v1430 = vpop.f32.mrb[0].mxu0
        %v1431 = vadd.f32 %v1014, %v1430
        %v1432 = vpop.f32.mrb[0].mxu0
        %v1433 = vadd.f32 %v1018, %v1432
        %1434 = vdwg.mxu0
        %1435 = vmatprep.subr.mxu0 %v732
        %1436 = vmatpush1.msra.mxu0 %v731
        %1437 = vmatprep.subr.mxu0 %v764
        %1438 = vmatpush1.msra.mxu0 %v763
        %1439 = vmatprep.subr.mxu0 %v796
        %1440 = vmatpush1.msra.mxu0 %v795
        %1441 = vmatprep.subr.mxu0 %v828
        %1442 = vmatpush1.msra.mxu0 %v827
        %1443 = vmatprep.subr.mxu0 %v860
        %1444 = vmatpush1.msra.mxu0 %v859
        %1445 = vmatprep.subr.mxu0 %v892
        %1446 = vmatpush1.msra.mxu0 %v891
        %1447 = vmatprep.subr.mxu0 %v924
        %1448 = vmatpush1.msra.mxu0 %v923
        %1449 = vmatprep.subr.mxu0 %v956
        %1450 = vmatpush1.msra.mxu0 %v955
        %1451 = vmatprep.subr.mxu0 0.0
        %1452 = vmatpush1.msra.mxu0 0.0
        %1453 = vmatprep.subr.mxu0 0.0
        %1454 = vmatpush1.msra.mxu0 0.0
        %1455 = vmatprep.subr.mxu0 0.0
        %1456 = vmatpush1.msra.mxu0 0.0
        %1457 = vmatprep.subr.mxu0 0.0
        %1458 = vmatpush1.msra.mxu0 0.0
        %1459 = vmatprep.subr.mxu0 0.0
        %1460 = vmatpush1.msra.mxu0 0.0
        %1461 = vmatprep.subr.mxu0 0.0
        %1462 = vmatpush1.msra.mxu0 0.0
        %1463 = vmatprep.subr.mxu0 0.0
        %1464 = vmatpush1.msra.mxu0 0.0
        %1465 = vmatprep.subr.mxu0 0.0
        %1466 = vmatpush1.msra.mxu0 0.0
        %1467 = vmatprep.subr.mxu0 0.0
        %1468 = vmatpush1.msra.mxu0 0.0
        %1469 = vmatprep.subr.mxu0 0.0
        %1470 = vmatpush1.msra.mxu0 0.0
        %1471 = vmatprep.subr.mxu0 0.0
        %1472 = vmatpush1.msra.mxu0 0.0
        %1473 = vmatprep.subr.mxu0 0.0
        %1474 = vmatpush1.msra.mxu0 0.0
        %1475 = vmatprep.subr.mxu0 0.0
        %1476 = vmatpush1.msra.mxu0 0.0
        %1477 = vmatprep.subr.mxu0 0.0
        %1478 = vmatpush1.msra.mxu0 0.0
        %1479 = vmatprep.subr.mxu0 0.0
        %1480 = vmatpush1.msra.mxu0 0.0
        %1481 = vmatprep.subr.mxu0 0.0
        %1482 = vmatpush1.msra.mxu0 0.0
        %1483 = vmatprep.subr.mxu0 0.0
        %1484 = vmatpush1.msra.mxu0 0.0
        %1485 = vmatprep.subr.mxu0 0.0
        %1486 = vmatpush1.msra.mxu0 0.0
        %1487 = vmatprep.subr.mxu0 0.0
        %1488 = vmatpush1.msra.mxu0 0.0
        %1489 = vmatprep.subr.mxu0 0.0
        %1490 = vmatpush1.msra.mxu0 0.0
        %1491 = vmatprep.subr.mxu0 0.0
        %1492 = vmatpush1.msra.mxu0 0.0
        %1493 = vmatprep.subr.mxu0 0.0
        %1494 = vmatpush1.msra.mxu0 0.0
        %1495 = vmatprep.subr.mxu0 0.0
        %1496 = vmatpush1.msra.mxu0 0.0
        %1497 = vmatprep.subr.mxu0 0.0
        %1498 = vmatpush1.msra.mxu0 0.0
        %1499 = vmatprep.mubr.f32.mxu0 0.0
        %1500 = vmatmul.mubr.f32.gmra.mrb[0].mxu0 %v1149
        %v1501 = vpop.f32.mrb[0].mxu0
        %v1502 = vadd.f32 %v1022, %v1501
        %v1503 = vpop.f32.mrb[0].mxu0
        %v1504 = vadd.f32 %v1026, %v1503
        %1505 = vdwg.mxu0
        %1506 = vmatprep.subr.mxu0 %v734
        %1507 = vmatpush1.msra.mxu0 %v733
        %1508 = vmatprep.subr.mxu0 %v766
        %1509 = vmatpush1.msra.mxu0 %v765
        %1510 = vmatprep.subr.mxu0 %v798
        %1511 = vmatpush1.msra.mxu0 %v797
        %1512 = vmatprep.subr.mxu0 %v830
        %1513 = vmatpush1.msra.mxu0 %v829
        %1514 = vmatprep.subr.mxu0 %v862
        %1515 = vmatpush1.msra.mxu0 %v861
        %1516 = vmatprep.subr.mxu0 %v894
        %1517 = vmatpush1.msra.mxu0 %v893
        %1518 = vmatprep.subr.mxu0 %v926
        %1519 = vmatpush1.msra.mxu0 %v925
        %1520 = vmatprep.subr.mxu0 %v958
        %1521 = vmatpush1.msra.mxu0 %v957
        %1522 = vmatprep.subr.mxu0 0.0
        %1523 = vmatpush1.msra.mxu0 0.0
        %1524 = vmatprep.subr.mxu0 0.0
        %1525 = vmatpush1.msra.mxu0 0.0
        %1526 = vmatprep.subr.mxu0 0.0
        %1527 = vmatpush1.msra.mxu0 0.0
        %1528 = vmatprep.subr.mxu0 0.0
        %1529 = vmatpush1.msra.mxu0 0.0
        %1530 = vmatprep.subr.mxu0 0.0
        %1531 = vmatpush1.msra.mxu0 0.0
        %1532 = vmatprep.subr.mxu0 0.0
        %1533 = vmatpush1.msra.mxu0 0.0
        %1534 = vmatprep.subr.mxu0 0.0
        %1535 = vmatpush1.msra.mxu0 0.0
        %1536 = vmatprep.subr.mxu0 0.0
        %1537 = vmatpush1.msra.mxu0 0.0
        %1538 = vmatprep.subr.mxu0 0.0
        %1539 = vmatpush1.msra.mxu0 0.0
        %1540 = vmatprep.subr.mxu0 0.0
        %1541 = vmatpush1.msra.mxu0 0.0
        %1542 = vmatprep.subr.mxu0 0.0
        %1543 = vmatpush1.msra.mxu0 0.0
        %1544 = vmatprep.subr.mxu0 0.0
        %1545 = vmatpush1.msra.mxu0 0.0
        %1546 = vmatprep.subr.mxu0 0.0
        %1547 = vmatpush1.msra.mxu0 0.0
        %1548 = vmatprep.subr.mxu0 0.0
        %1549 = vmatpush1.msra.mxu0 0.0
        %1550 = vmatprep.subr.mxu0 0.0
        %1551 = vmatpush1.msra.mxu0 0.0
        %1552 = vmatprep.subr.mxu0 0.0
        %1553 = vmatpush1.msra.mxu0 0.0
        %1554 = vmatprep.subr.mxu0 0.0
        %1555 = vmatpush1.msra.mxu0 0.0
        %1556 = vmatprep.subr.mxu0 0.0
        %1557 = vmatpush1.msra.mxu0 0.0
        %1558 = vmatprep.subr.mxu0 0.0
        %1559 = vmatpush1.msra.mxu0 0.0
        %1560 = vmatprep.subr.mxu0 0.0
        %1561 = vmatpush1.msra.mxu0 0.0
        %1562 = vmatprep.subr.mxu0 0.0
        %1563 = vmatpush1.msra.mxu0 0.0
        %1564 = vmatprep.subr.mxu0 0.0
        %1565 = vmatpush1.msra.mxu0 0.0
        %1566 = vmatprep.subr.mxu0 0.0
        %1567 = vmatpush1.msra.mxu0 0.0
        %1568 = vmatprep.subr.mxu0 0.0
        %1569 = vmatpush1.msra.mxu0 0.0
        %1570 = vmatprep.mubr.f32.mxu0 0.0
        %1571 = vmatmul.mubr.f32.gmra.mrb[0].mxu0 %v1149
        %v1572 = vpop.f32.mrb[0].mxu0
        %v1573 = vadd.f32 %v1030, %v1572
        %v1574 = vpop.f32.mrb[0].mxu0
        %v1575 = vadd.f32 %v1034, %v1574
        %1576 = vdwg.mxu0
        %1577 = vmatprep.subr.mxu0 %v736
        %1578 = vmatpush1.msra.mxu0 %v735
        %1579 = vmatprep.subr.mxu0 %v768
        %1580 = vmatpush1.msra.mxu0 %v767
        %1581 = vmatprep.subr.mxu0 %v800
        %1582 = vmatpush1.msra.mxu0 %v799
        %1583 = vmatprep.subr.mxu0 %v832
        %1584 = vmatpush1.msra.mxu0 %v831
        %1585 = vmatprep.subr.mxu0 %v864
        %1586 = vmatpush1.msra.mxu0 %v863
        %1587 = vmatprep.subr.mxu0 %v896
        %1588 = vmatpush1.msra.mxu0 %v895
        %1589 = vmatprep.subr.mxu0 %v928
        %1590 = vmatpush1.msra.mxu0 %v927
        %1591 = vmatprep.subr.mxu0 %v960
        %1592 = vmatpush1.msra.mxu0 %v959
        %1593 = vmatprep.subr.mxu0 0.0
        %1594 = vmatpush1.msra.mxu0 0.0
        %1595 = vmatprep.subr.mxu0 0.0
        %1596 = vmatpush1.msra.mxu0 0.0
        %1597 = vmatprep.subr.mxu0 0.0
        %1598 = vmatpush1.msra.mxu0 0.0
        %1599 = vmatprep.subr.mxu0 0.0
        %1600 = vmatpush1.msra.mxu0 0.0
        %1601 = vmatprep.subr.mxu0 0.0
        %1602 = vmatpush1.msra.mxu0 0.0
        %1603 = vmatprep.subr.mxu0 0.0
        %1604 = vmatpush1.msra.mxu0 0.0
        %1605 = vmatprep.subr.mxu0 0.0
        %1606 = vmatpush1.msra.mxu0 0.0
        %1607 = vmatprep.subr.mxu0 0.0
        %1608 = vmatpush1.msra.mxu0 0.0
        %1609 = vmatprep.subr.mxu0 0.0
        %1610 = vmatpush1.msra.mxu0 0.0
        %1611 = vmatprep.subr.mxu0 0.0
        %1612 = vmatpush1.msra.mxu0 0.0
        %1613 = vmatprep.subr.mxu0 0.0
        %1614 = vmatpush1.msra.mxu0 0.0
        %1615 = vmatprep.subr.mxu0 0.0
        %1616 = vmatpush1.msra.mxu0 0.0
        %1617 = vmatprep.subr.mxu0 0.0
        %1618 = vmatpush1.msra.mxu0 0.0
        %1619 = vmatprep.subr.mxu0 0.0
        %1620 = vmatpush1.msra.mxu0 0.0
        %1621 = vmatprep.subr.mxu0 0.0
        %1622 = vmatpush1.msra.mxu0 0.0
        %1623 = vmatprep.subr.mxu0 0.0
        %1624 = vmatpush1.msra.mxu0 0.0
        %1625 = vmatprep.subr.mxu0 0.0
        %1626 = vmatpush1.msra.mxu0 0.0
        %1627 = vmatprep.subr.mxu0 0.0
        %1628 = vmatpush1.msra.mxu0 0.0
        %1629 = vmatprep.subr.mxu0 0.0
        %1630 = vmatpush1.msra.mxu0 0.0
        %1631 = vmatprep.subr.mxu0 0.0
        %1632 = vmatpush1.msra.mxu0 0.0
        %1633 = vmatprep.subr.mxu0 0.0
        %1634 = vmatpush1.msra.mxu0 0.0
        %1635 = vmatprep.subr.mxu0 0.0
        %1636 = vmatpush1.msra.mxu0 0.0
        %1637 = vmatprep.subr.mxu0 0.0
        %1638 = vmatpush1.msra.mxu0 0.0
        %1639 = vmatprep.subr.mxu0 0.0
        %1640 = vmatpush1.msra.mxu0 0.0
        %1641 = vmatprep.mubr.f32.mxu0 0.0
        %1642 = vmatmul.mubr.f32.gmra.mrb[0].mxu0 %v1149
        %v1643 = vpop.f32.mrb[0].mxu0
        %v1644 = vadd.f32 %v1038, %v1643
        %v1645 = vpop.f32.mrb[0].mxu0
        %v1646 = vadd.f32 %v1042, %v1645
        %1647 = vdwg.mxu0
        %1648 = vmatprep.subr.mxu0 %v738
        %1649 = vmatpush1.msra.mxu0 %v737
        %1650 = vmatprep.subr.mxu0 %v770
        %1651 = vmatpush1.msra.mxu0 %v769
        %1652 = vmatprep.subr.mxu0 %v802
        %1653 = vmatpush1.msra.mxu0 %v801
        %1654 = vmatprep.subr.mxu0 %v834
        %1655 = vmatpush1.msra.mxu0 %v833
        %1656 = vmatprep.subr.mxu0 %v866
        %1657 = vmatpush1.msra.mxu0 %v865
        %1658 = vmatprep.subr.mxu0 %v898
        %1659 = vmatpush1.msra.mxu0 %v897
        %1660 = vmatprep.subr.mxu0 %v930
        %1661 = vmatpush1.msra.mxu0 %v929
        %1662 = vmatprep.subr.mxu0 %v962
        %1663 = vmatpush1.msra.mxu0 %v961
        %1664 = vmatprep.subr.mxu0 0.0
        %1665 = vmatpush1.msra.mxu0 0.0
        %1666 = vmatprep.subr.mxu0 0.0
        %1667 = vmatpush1.msra.mxu0 0.0
        %1668 = vmatprep.subr.mxu0 0.0
        %1669 = vmatpush1.msra.mxu0 0.0
        %1670 = vmatprep.subr.mxu0 0.0
        %1671 = vmatpush1.msra.mxu0 0.0
        %1672 = vmatprep.subr.mxu0 0.0
        %1673 = vmatpush1.msra.mxu0 0.0
        %1674 = vmatprep.subr.mxu0 0.0
        %1675 = vmatpush1.msra.mxu0 0.0
        %1676 = vmatprep.subr.mxu0 0.0
        %1677 = vmatpush1.msra.mxu0 0.0
        %1678 = vmatprep.subr.mxu0 0.0
        %1679 = vmatpush1.msra.mxu0 0.0
        %1680 = vmatprep.subr.mxu0 0.0
        %1681 = vmatpush1.msra.mxu0 0.0
        %1682 = vmatprep.subr.mxu0 0.0
        %1683 = vmatpush1.msra.mxu0 0.0
        %1684 = vmatprep.subr.mxu0 0.0
        %1685 = vmatpush1.msra.mxu0 0.0
        %1686 = vmatprep.subr.mxu0 0.0
        %1687 = vmatpush1.msra.mxu0 0.0
        %1688 = vmatprep.subr.mxu0 0.0
        %1689 = vmatpush1.msra.mxu0 0.0
        %1690 = vmatprep.subr.mxu0 0.0
        %1691 = vmatpush1.msra.mxu0 0.0
        %1692 = vmatprep.subr.mxu0 0.0
        %1693 = vmatpush1.msra.mxu0 0.0
        %1694 = vmatprep.subr.mxu0 0.0
        %1695 = vmatpush1.msra.mxu0 0.0
        %1696 = vmatprep.subr.mxu0 0.0
        %1697 = vmatpush1.msra.mxu0 0.0
        %1698 = vmatprep.subr.mxu0 0.0
        %1699 = vmatpush1.msra.mxu0 0.0
        %1700 = vmatprep.subr.mxu0 0.0
        %1701 = vmatpush1.msra.mxu0 0.0
        %1702 = vmatprep.subr.mxu0 0.0
        %1703 = vmatpush1.msra.mxu0 0.0
        %1704 = vmatprep.subr.mxu0 0.0
        %1705 = vmatpush1.msra.mxu0 0.0
        %1706 = vmatprep.subr.mxu0 0.0
        %1707 = vmatpush1.msra.mxu0 0.0
        %1708 = vmatprep.subr.mxu0 0.0
        %1709 = vmatpush1.msra.mxu0 0.0
        %1710 = vmatprep.subr.mxu0 0.0
        %1711 = vmatpush1.msra.mxu0 0.0
        %1712 = vmatprep.mubr.f32.mxu0 0.0
        %1713 = vmatmul.mubr.f32.gmra.mrb[0].mxu0 %v1149
        %v1714 = vpop.f32.mrb[0].mxu0
        %v1715 = vadd.f32 %v1046, %v1714
        %v1716 = vpop.f32.mrb[0].mxu0
        %v1717 = vadd.f32 %v1050, %v1716
        %1718 = vdwg.mxu0
        %1719 = vmatprep.subr.mxu0 %v740
        %1720 = vmatpush1.msra.mxu0 %v739
        %1721 = vmatprep.subr.mxu0 %v772
        %1722 = vmatpush1.msra.mxu0 %v771
        %1723 = vmatprep.subr.mxu0 %v804
        %1724 = vmatpush1.msra.mxu0 %v803
        %1725 = vmatprep.subr.mxu0 %v836
        %1726 = vmatpush1.msra.mxu0 %v835
        %1727 = vmatprep.subr.mxu0 %v868
        %1728 = vmatpush1.msra.mxu0 %v867
        %1729 = vmatprep.subr.mxu0 %v900
        %1730 = vmatpush1.msra.mxu0 %v899
        %1731 = vmatprep.subr.mxu0 %v932
        %1732 = vmatpush1.msra.mxu0 %v931
        %1733 = vmatprep.subr.mxu0 %v964
        %1734 = vmatpush1.msra.mxu0 %v963
        %1735 = vmatprep.subr.mxu0 0.0
        %1736 = vmatpush1.msra.mxu0 0.0
        %1737 = vmatprep.subr.mxu0 0.0
        %1738 = vmatpush1.msra.mxu0 0.0
        %1739 = vmatprep.subr.mxu0 0.0
        %1740 = vmatpush1.msra.mxu0 0.0
        %1741 = vmatprep.subr.mxu0 0.0
        %1742 = vmatpush1.msra.mxu0 0.0
        %1743 = vmatprep.subr.mxu0 0.0
        %1744 = vmatpush1.msra.mxu0 0.0
        %1745 = vmatprep.subr.mxu0 0.0
        %1746 = vmatpush1.msra.mxu0 0.0
        %1747 = vmatprep.subr.mxu0 0.0
        %1748 = vmatpush1.msra.mxu0 0.0
        %1749 = vmatprep.subr.mxu0 0.0
        %1750 = vmatpush1.msra.mxu0 0.0
        %1751 = vmatprep.subr.mxu0 0.0
        %1752 = vmatpush1.msra.mxu0 0.0
        %1753 = vmatprep.subr.mxu0 0.0
        %1754 = vmatpush1.msra.mxu0 0.0
        %1755 = vmatprep.subr.mxu0 0.0
        %1756 = vmatpush1.msra.mxu0 0.0
        %1757 = vmatprep.subr.mxu0 0.0
        %1758 = vmatpush1.msra.mxu0 0.0
        %1759 = vmatprep.subr.mxu0 0.0
        %1760 = vmatpush1.msra.mxu0 0.0
        %1761 = vmatprep.subr.mxu0 0.0
        %1762 = vmatpush1.msra.mxu0 0.0
        %1763 = vmatprep.subr.mxu0 0.0
        %1764 = vmatpush1.msra.mxu0 0.0
        %1765 = vmatprep.subr.mxu0 0.0
        %1766 = vmatpush1.msra.mxu0 0.0
        %1767 = vmatprep.subr.mxu0 0.0
        %1768 = vmatpush1.msra.mxu0 0.0
        %1769 = vmatprep.subr.mxu0 0.0
        %1770 = vmatpush1.msra.mxu0 0.0
        %1771 = vmatprep.subr.mxu0 0.0
        %1772 = vmatpush1.msra.mxu0 0.0
        %1773 = vmatprep.subr.mxu0 0.0
        %1774 = vmatpush1.msra.mxu0 0.0
        %1775 = vmatprep.subr.mxu0 0.0
        %1776 = vmatpush1.msra.mxu0 0.0
        %1777 = vmatprep.subr.mxu0 0.0
        %1778 = vmatpush1.msra.mxu0 0.0
        %1779 = vmatprep.subr.mxu0 0.0
        %1780 = vmatpush1.msra.mxu0 0.0
        %1781 = vmatprep.subr.mxu0 0.0
        %1782 = vmatpush1.msra.mxu0 0.0
        %1783 = vmatprep.mubr.f32.mxu0 0.0
        %1784 = vmatmul.mubr.f32.gmra.mrb[0].mxu0 %v1149
        %v1785 = vpop.f32.mrb[0].mxu0
        %v1786 = vadd.f32 %v1054, %v1785
        %v1787 = vpop.f32.mrb[0].mxu0
        %v1788 = vadd.f32 %v1058, %v1787
        %1789 = vdwg.mxu0
        %1790 = vmatprep.subr.mxu0 %v742
        %1791 = vmatpush1.msra.mxu0 %v741
        %1792 = vmatprep.subr.mxu0 %v774
        %1793 = vmatpush1.msra.mxu0 %v773
        %1794 = vmatprep.subr.mxu0 %v806
        %1795 = vmatpush1.msra.mxu0 %v805
        %1796 = vmatprep.subr.mxu0 %v838
        %1797 = vmatpush1.msra.mxu0 %v837
        %1798 = vmatprep.subr.mxu0 %v870
        %1799 = vmatpush1.msra.mxu0 %v869
        %1800 = vmatprep.subr.mxu0 %v902
        %1801 = vmatpush1.msra.mxu0 %v901
        %1802 = vmatprep.subr.mxu0 %v934
        %1803 = vmatpush1.msra.mxu0 %v933
        %1804 = vmatprep.subr.mxu0 %v966
        %1805 = vmatpush1.msra.mxu0 %v965
        %1806 = vmatprep.subr.mxu0 0.0
        %1807 = vmatpush1.msra.mxu0 0.0
        %1808 = vmatprep.subr.mxu0 0.0
        %1809 = vmatpush1.msra.mxu0 0.0
        %1810 = vmatprep.subr.mxu0 0.0
        %1811 = vmatpush1.msra.mxu0 0.0
        %1812 = vmatprep.subr.mxu0 0.0
        %1813 = vmatpush1.msra.mxu0 0.0
        %1814 = vmatprep.subr.mxu0 0.0
        %1815 = vmatpush1.msra.mxu0 0.0
        %1816 = vmatprep.subr.mxu0 0.0
        %1817 = vmatpush1.msra.mxu0 0.0
        %1818 = vmatprep.subr.mxu0 0.0
        %1819 = vmatpush1.msra.mxu0 0.0
        %1820 = vmatprep.subr.mxu0 0.0
        %1821 = vmatpush1.msra.mxu0 0.0
        %1822 = vmatprep.subr.mxu0 0.0
        %1823 = vmatpush1.msra.mxu0 0.0
        %1824 = vmatprep.subr.mxu0 0.0
        %1825 = vmatpush1.msra.mxu0 0.0
        %1826 = vmatprep.subr.mxu0 0.0
        %1827 = vmatpush1.msra.mxu0 0.0
        %1828 = vmatprep.subr.mxu0 0.0
        %1829 = vmatpush1.msra.mxu0 0.0
        %1830 = vmatprep.subr.mxu0 0.0
        %1831 = vmatpush1.msra.mxu0 0.0
        %1832 = vmatprep.subr.mxu0 0.0
        %1833 = vmatpush1.msra.mxu0 0.0
        %1834 = vmatprep.subr.mxu0 0.0
        %1835 = vmatpush1.msra.mxu0 0.0
        %1836 = vmatprep.subr.mxu0 0.0
        %1837 = vmatpush1.msra.mxu0 0.0
        %1838 = vmatprep.subr.mxu0 0.0
        %1839 = vmatpush1.msra.mxu0 0.0
        %1840 = vmatprep.subr.mxu0 0.0
        %1841 = vmatpush1.msra.mxu0 0.0
        %1842 = vmatprep.subr.mxu0 0.0
        %1843 = vmatpush1.msra.mxu0 0.0
        %1844 = vmatprep.subr.mxu0 0.0
        %1845 = vmatpush1.msra.mxu0 0.0
        %1846 = vmatprep.subr.mxu0 0.0
        %1847 = vmatpush1.msra.mxu0 0.0
        %1848 = vmatprep.subr.mxu0 0.0
        %1849 = vmatpush1.msra.mxu0 0.0
        %1850 = vmatprep.subr.mxu0 0.0
        %1851 = vmatpush1.msra.mxu0 0.0
        %1852 = vmatprep.subr.mxu0 0.0
        %1853 = vmatpush1.msra.mxu0 0.0
        %1854 = vmatprep.mubr.f32.mxu0 0.0
        %1855 = vmatmul.mubr.f32.gmra.mrb[0].mxu0 %v1149
        %v1856 = vpop.f32.mrb[0].mxu0
        %v1857 = vadd.f32 %v1062, %v1856
        %v1858 = vpop.f32.mrb[0].mxu0
        %v1859 = vadd.f32 %v1066, %v1858
        %1860 = vdwg.mxu0
        %1861 = vmatprep.subr.mxu0 %v744
        %1862 = vmatpush1.msra.mxu0 %v743
        %1863 = vmatprep.subr.mxu0 %v776
        %1864 = vmatpush1.msra.mxu0 %v775
        %1865 = vmatprep.subr.mxu0 %v808
        %1866 = vmatpush1.msra.mxu0 %v807
        %1867 = vmatprep.subr.mxu0 %v840
        %1868 = vmatpush1.msra.mxu0 %v839
        %1869 = vmatprep.subr.mxu0 %v872
        %1870 = vmatpush1.msra.mxu0 %v871
        %1871 = vmatprep.subr.mxu0 %v904
        %1872 = vmatpush1.msra.mxu0 %v903
        %1873 = vmatprep.subr.mxu0 %v936
        %1874 = vmatpush1.msra.mxu0 %v935
        %1875 = vmatprep.subr.mxu0 %v968
        %1876 = vmatpush1.msra.mxu0 %v967
        %1877 = vmatprep.subr.mxu0 0.0
        %1878 = vmatpush1.msra.mxu0 0.0
        %1879 = vmatprep.subr.mxu0 0.0
        %1880 = vmatpush1.msra.mxu0 0.0
        %1881 = vmatprep.subr.mxu0 0.0
        %1882 = vmatpush1.msra.mxu0 0.0
        %1883 = vmatprep.subr.mxu0 0.0
        %1884 = vmatpush1.msra.mxu0 0.0
        %1885 = vmatprep.subr.mxu0 0.0
        %1886 = vmatpush1.msra.mxu0 0.0
        %1887 = vmatprep.subr.mxu0 0.0
        %1888 = vmatpush1.msra.mxu0 0.0
        %1889 = vmatprep.subr.mxu0 0.0
        %1890 = vmatpush1.msra.mxu0 0.0
        %1891 = vmatprep.subr.mxu0 0.0
        %1892 = vmatpush1.msra.mxu0 0.0
        %1893 = vmatprep.subr.mxu0 0.0
        %1894 = vmatpush1.msra.mxu0 0.0
        %1895 = vmatprep.subr.mxu0 0.0
        %1896 = vmatpush1.msra.mxu0 0.0
        %1897 = vmatprep.subr.mxu0 0.0
        %1898 = vmatpush1.msra.mxu0 0.0
        %1899 = vmatprep.subr.mxu0 0.0
        %1900 = vmatpush1.msra.mxu0 0.0
        %1901 = vmatprep.subr.mxu0 0.0
        %1902 = vmatpush1.msra.mxu0 0.0
        %1903 = vmatprep.subr.mxu0 0.0
        %1904 = vmatpush1.msra.mxu0 0.0
        %1905 = vmatprep.subr.mxu0 0.0
        %1906 = vmatpush1.msra.mxu0 0.0
        %1907 = vmatprep.subr.mxu0 0.0
        %1908 = vmatpush1.msra.mxu0 0.0
        %1909 = vmatprep.subr.mxu0 0.0
        %1910 = vmatpush1.msra.mxu0 0.0
        %1911 = vmatprep.subr.mxu0 0.0
        %1912 = vmatpush1.msra.mxu0 0.0
        %1913 = vmatprep.subr.mxu0 0.0
        %1914 = vmatpush1.msra.mxu0 0.0
        %1915 = vmatprep.subr.mxu0 0.0
        %1916 = vmatpush1.msra.mxu0 0.0
        %1917 = vmatprep.subr.mxu0 0.0
        %1918 = vmatpush1.msra.mxu0 0.0
        %1919 = vmatprep.subr.mxu0 0.0
        %1920 = vmatpush1.msra.mxu0 0.0
        %1921 = vmatprep.subr.mxu0 0.0
        %1922 = vmatpush1.msra.mxu0 0.0
        %1923 = vmatprep.subr.mxu0 0.0
        %1924 = vmatpush1.msra.mxu0 0.0
        %1925 = vmatprep.mubr.f32.mxu0 0.0
        %1926 = vmatmul.mubr.f32.gmra.mrb[0].mxu0 %v1149
        %v1927 = vpop.f32.mrb[0].mxu0
        %v1928 = vadd.f32 %v1070, %v1927
        %v1929 = vpop.f32.mrb[0].mxu0
        %v1930 = vadd.f32 %v1074, %v1929
        %1931 = vdwg.mxu0
        %1932 = vmatprep.subr.mxu0 %v746
        %1933 = vmatpush1.msra.mxu0 %v745
        %1934 = vmatprep.subr.mxu0 %v778
        %1935 = vmatpush1.msra.mxu0 %v777
        %1936 = vmatprep.subr.mxu0 %v810
        %1937 = vmatpush1.msra.mxu0 %v809
        %1938 = vmatprep.subr.mxu0 %v842
        %1939 = vmatpush1.msra.mxu0 %v841
        %1940 = vmatprep.subr.mxu0 %v874
        %1941 = vmatpush1.msra.mxu0 %v873
        %1942 = vmatprep.subr.mxu0 %v906
        %1943 = vmatpush1.msra.mxu0 %v905
        %1944 = vmatprep.subr.mxu0 %v938
        %1945 = vmatpush1.msra.mxu0 %v937
        %1946 = vmatprep.subr.mxu0 %v970
        %1947 = vmatpush1.msra.mxu0 %v969
        %1948 = vmatprep.subr.mxu0 0.0
        %1949 = vmatpush1.msra.mxu0 0.0
        %1950 = vmatprep.subr.mxu0 0.0
        %1951 = vmatpush1.msra.mxu0 0.0
        %1952 = vmatprep.subr.mxu0 0.0
        %1953 = vmatpush1.msra.mxu0 0.0
        %1954 = vmatprep.subr.mxu0 0.0
        %1955 = vmatpush1.msra.mxu0 0.0
        %1956 = vmatprep.subr.mxu0 0.0
        %1957 = vmatpush1.msra.mxu0 0.0
        %1958 = vmatprep.subr.mxu0 0.0
        %1959 = vmatpush1.msra.mxu0 0.0
        %1960 = vmatprep.subr.mxu0 0.0
        %1961 = vmatpush1.msra.mxu0 0.0
        %1962 = vmatprep.subr.mxu0 0.0
        %1963 = vmatpush1.msra.mxu0 0.0
        %1964 = vmatprep.subr.mxu0 0.0
        %1965 = vmatpush1.msra.mxu0 0.0
        %1966 = vmatprep.subr.mxu0 0.0
        %1967 = vmatpush1.msra.mxu0 0.0
        %1968 = vmatprep.subr.mxu0 0.0
        %1969 = vmatpush1.msra.mxu0 0.0
        %1970 = vmatprep.subr.mxu0 0.0
        %1971 = vmatpush1.msra.mxu0 0.0
        %1972 = vmatprep.subr.mxu0 0.0
        %1973 = vmatpush1.msra.mxu0 0.0
        %1974 = vmatprep.subr.mxu0 0.0
        %1975 = vmatpush1.msra.mxu0 0.0
        %1976 = vmatprep.subr.mxu0 0.0
        %1977 = vmatpush1.msra.mxu0 0.0
        %1978 = vmatprep.subr.mxu0 0.0
        %1979 = vmatpush1.msra.mxu0 0.0
        %1980 = vmatprep.subr.mxu0 0.0
        %1981 = vmatpush1.msra.mxu0 0.0
        %1982 = vmatprep.subr.mxu0 0.0
        %1983 = vmatpush1.msra.mxu0 0.0
        %1984 = vmatprep.subr.mxu0 0.0
        %1985 = vmatpush1.msra.mxu0 0.0
        %1986 = vmatprep.subr.mxu0 0.0
        %1987 = vmatpush1.msra.mxu0 0.0
        %1988 = vmatprep.subr.mxu0 0.0
        %1989 = vmatpush1.msra.mxu0 0.0
        %1990 = vmatprep.subr.mxu0 0.0
        %1991 = vmatpush1.msra.mxu0 0.0
        %1992 = vmatprep.subr.mxu0 0.0
        %1993 = vmatpush1.msra.mxu0 0.0
        %1994 = vmatprep.subr.mxu0 0.0
        %1995 = vmatpush1.msra.mxu0 0.0
        %1996 = vmatprep.mubr.f32.mxu0 0.0
        %1997 = vmatmul.mubr.f32.gmra.mrb[0].mxu0 %v1149
        %v1998 = vpop.f32.mrb[0].mxu0
        %v1999 = vadd.f32 %v1078, %v1998
        %v2000 = vpop.f32.mrb[0].mxu0
        %v2001 = vadd.f32 %v1082, %v2000
        %2002 = vdwg.mxu0
        %2003 = vmatprep.subr.mxu0 %v748
        %2004 = vmatpush1.msra.mxu0 %v747
        %2005 = vmatprep.subr.mxu0 %v780
        %2006 = vmatpush1.msra.mxu0 %v779
        %2007 = vmatprep.subr.mxu0 %v812
        %2008 = vmatpush1.msra.mxu0 %v811
        %2009 = vmatprep.subr.mxu0 %v844
        %2010 = vmatpush1.msra.mxu0 %v843
        %2011 = vmatprep.subr.mxu0 %v876
        %2012 = vmatpush1.msra.mxu0 %v875
        %2013 = vmatprep.subr.mxu0 %v908
        %2014 = vmatpush1.msra.mxu0 %v907
        %2015 = vmatprep.subr.mxu0 %v940
        %2016 = vmatpush1.msra.mxu0 %v939
        %2017 = vmatprep.subr.mxu0 %v972
        %2018 = vmatpush1.msra.mxu0 %v971
        %2019 = vmatprep.subr.mxu0 0.0
        %2020 = vmatpush1.msra.mxu0 0.0
        %2021 = vmatprep.subr.mxu0 0.0
        %2022 = vmatpush1.msra.mxu0 0.0
        %2023 = vmatprep.subr.mxu0 0.0
        %2024 = vmatpush1.msra.mxu0 0.0
        %2025 = vmatprep.subr.mxu0 0.0
        %2026 = vmatpush1.msra.mxu0 0.0
        %2027 = vmatprep.subr.mxu0 0.0
        %2028 = vmatpush1.msra.mxu0 0.0
        %2029 = vmatprep.subr.mxu0 0.0
        %2030 = vmatpush1.msra.mxu0 0.0
        %2031 = vmatprep.subr.mxu0 0.0
        %2032 = vmatpush1.msra.mxu0 0.0
        %2033 = vmatprep.subr.mxu0 0.0
        %2034 = vmatpush1.msra.mxu0 0.0
        %2035 = vmatprep.subr.mxu0 0.0
        %2036 = vmatpush1.msra.mxu0 0.0
        %2037 = vmatprep.subr.mxu0 0.0
        %2038 = vmatpush1.msra.mxu0 0.0
        %2039 = vmatprep.subr.mxu0 0.0
        %2040 = vmatpush1.msra.mxu0 0.0
        %2041 = vmatprep.subr.mxu0 0.0
        %2042 = vmatpush1.msra.mxu0 0.0
        %2043 = vmatprep.subr.mxu0 0.0
        %2044 = vmatpush1.msra.mxu0 0.0
        %2045 = vmatprep.subr.mxu0 0.0
        %2046 = vmatpush1.msra.mxu0 0.0
        %2047 = vmatprep.subr.mxu0 0.0
        %2048 = vmatpush1.msra.mxu0 0.0
        %2049 = vmatprep.subr.mxu0 0.0
        %2050 = vmatpush1.msra.mxu0 0.0
        %2051 = vmatprep.subr.mxu0 0.0
        %2052 = vmatpush1.msra.mxu0 0.0
        %2053 = vmatprep.subr.mxu0 0.0
        %2054 = vmatpush1.msra.mxu0 0.0
        %2055 = vmatprep.subr.mxu0 0.0
        %2056 = vmatpush1.msra.mxu0 0.0
        %2057 = vmatprep.subr.mxu0 0.0
        %2058 = vmatpush1.msra.mxu0 0.0
        %2059 = vmatprep.subr.mxu0 0.0
        %2060 = vmatpush1.msra.mxu0 0.0
        %2061 = vmatprep.subr.mxu0 0.0
        %2062 = vmatpush1.msra.mxu0 0.0
        %2063 = vmatprep.subr.mxu0 0.0
        %2064 = vmatpush1.msra.mxu0 0.0
        %2065 = vmatprep.subr.mxu0 0.0
        %2066 = vmatpush1.msra.mxu0 0.0
        %2067 = vmatprep.mubr.f32.mxu0 0.0
        %2068 = vmatmul.mubr.f32.gmra.mrb[0].mxu0 %v1149
        %v2069 = vpop.f32.mrb[0].mxu0
        %v2070 = vadd.f32 %v1086, %v2069
        %v2071 = vpop.f32.mrb[0].mxu0
        %v2072 = vadd.f32 %v1090, %v2071
        %2073 = vdwg.mxu0
        %2074 = vmatprep.subr.mxu0 %v750
        %2075 = vmatpush1.msra.mxu0 %v749
        %2076 = vmatprep.subr.mxu0 %v782
        %2077 = vmatpush1.msra.mxu0 %v781
        %2078 = vmatprep.subr.mxu0 %v814
        %2079 = vmatpush1.msra.mxu0 %v813
        %2080 = vmatprep.subr.mxu0 %v846
        %2081 = vmatpush1.msra.mxu0 %v845
        %2082 = vmatprep.subr.mxu0 %v878
        %2083 = vmatpush1.msra.mxu0 %v877
        %2084 = vmatprep.subr.mxu0 %v910
        %2085 = vmatpush1.msra.mxu0 %v909
        %2086 = vmatprep.subr.mxu0 %v942
        %2087 = vmatpush1.msra.mxu0 %v941
        %2088 = vmatprep.subr.mxu0 %v974
        %2089 = vmatpush1.msra.mxu0 %v973
        %2090 = vmatprep.subr.mxu0 0.0
        %2091 = vmatpush1.msra.mxu0 0.0
        %2092 = vmatprep.subr.mxu0 0.0
        %2093 = vmatpush1.msra.mxu0 0.0
        %2094 = vmatprep.subr.mxu0 0.0
        %2095 = vmatpush1.msra.mxu0 0.0
        %2096 = vmatprep.subr.mxu0 0.0
        %2097 = vmatpush1.msra.mxu0 0.0
        %2098 = vmatprep.subr.mxu0 0.0
        %2099 = vmatpush1.msra.mxu0 0.0
        %2100 = vmatprep.subr.mxu0 0.0
        %2101 = vmatpush1.msra.mxu0 0.0
        %2102 = vmatprep.subr.mxu0 0.0
        %2103 = vmatpush1.msra.mxu0 0.0
        %2104 = vmatprep.subr.mxu0 0.0
        %2105 = vmatpush1.msra.mxu0 0.0
        %2106 = vmatprep.subr.mxu0 0.0
        %2107 = vmatpush1.msra.mxu0 0.0
        %2108 = vmatprep.subr.mxu0 0.0
        %2109 = vmatpush1.msra.mxu0 0.0
        %2110 = vmatprep.subr.mxu0 0.0
        %2111 = vmatpush1.msra.mxu0 0.0
        %2112 = vmatprep.subr.mxu0 0.0
        %2113 = vmatpush1.msra.mxu0 0.0
        %2114 = vmatprep.subr.mxu0 0.0
        %2115 = vmatpush1.msra.mxu0 0.0
        %2116 = vmatprep.subr.mxu0 0.0
        %2117 = vmatpush1.msra.mxu0 0.0
        %2118 = vmatprep.subr.mxu0 0.0
        %2119 = vmatpush1.msra.mxu0 0.0
        %2120 = vmatprep.subr.mxu0 0.0
        %2121 = vmatpush1.msra.mxu0 0.0
        %2122 = vmatprep.subr.mxu0 0.0
        %2123 = vmatpush1.msra.mxu0 0.0
        %2124 = vmatprep.subr.mxu0 0.0
        %2125 = vmatpush1.msra.mxu0 0.0
        %2126 = vmatprep.subr.mxu0 0.0
        %2127 = vmatpush1.msra.mxu0 0.0
        %2128 = vmatprep.subr.mxu0 0.0
        %2129 = vmatpush1.msra.mxu0 0.0
        %2130 = vmatprep.subr.mxu0 0.0
        %2131 = vmatpush1.msra.mxu0 0.0
        %2132 = vmatprep.subr.mxu0 0.0
        %2133 = vmatpush1.msra.mxu0 0.0
        %2134 = vmatprep.subr.mxu0 0.0
        %2135 = vmatpush1.msra.mxu0 0.0
        %2136 = vmatprep.subr.mxu0 0.0
        %2137 = vmatpush1.msra.mxu0 0.0
        %2138 = vmatprep.mubr.f32.mxu0 0.0
        %2139 = vmatmul.mubr.f32.gmra.mrb[0].mxu0 %v1149
        %v2140 = vpop.f32.mrb[0].mxu0
        %v2141 = vadd.f32 %v1094, %v2140
        %v2142 = vpop.f32.mrb[0].mxu0
        %v2143 = vadd.f32 %v1098, %v2142
        %2144 = vdwg.mxu0
        %2145 = vmatprep.subr.mxu0 %v752
        %2146 = vmatpush1.msra.mxu0 %v751
        %2147 = vmatprep.subr.mxu0 %v784
        %2148 = vmatpush1.msra.mxu0 %v783
        %2149 = vmatprep.subr.mxu0 %v816
        %2150 = vmatpush1.msra.mxu0 %v815
        %2151 = vmatprep.subr.mxu0 %v848
        %2152 = vmatpush1.msra.mxu0 %v847
        %2153 = vmatprep.subr.mxu0 %v880
        %2154 = vmatpush1.msra.mxu0 %v879
        %2155 = vmatprep.subr.mxu0 %v912
        %2156 = vmatpush1.msra.mxu0 %v911
        %2157 = vmatprep.subr.mxu0 %v944
        %2158 = vmatpush1.msra.mxu0 %v943
        %2159 = vmatprep.subr.mxu0 %v976
        %2160 = vmatpush1.msra.mxu0 %v975
        %2161 = vmatprep.subr.mxu0 0.0
        %2162 = vmatpush1.msra.mxu0 0.0
        %2163 = vmatprep.subr.mxu0 0.0
        %2164 = vmatpush1.msra.mxu0 0.0
        %2165 = vmatprep.subr.mxu0 0.0
        %2166 = vmatpush1.msra.mxu0 0.0
        %2167 = vmatprep.subr.mxu0 0.0
        %2168 = vmatpush1.msra.mxu0 0.0
        %2169 = vmatprep.subr.mxu0 0.0
        %2170 = vmatpush1.msra.mxu0 0.0
        %2171 = vmatprep.subr.mxu0 0.0
        %2172 = vmatpush1.msra.mxu0 0.0
        %2173 = vmatprep.subr.mxu0 0.0
        %2174 = vmatpush1.msra.mxu0 0.0
        %2175 = vmatprep.subr.mxu0 0.0
        %2176 = vmatpush1.msra.mxu0 0.0
        %2177 = vmatprep.subr.mxu0 0.0
        %2178 = vmatpush1.msra.mxu0 0.0
        %2179 = vmatprep.subr.mxu0 0.0
        %2180 = vmatpush1.msra.mxu0 0.0
        %2181 = vmatprep.subr.mxu0 0.0
        %2182 = vmatpush1.msra.mxu0 0.0
        %2183 = vmatprep.subr.mxu0 0.0
        %2184 = vmatpush1.msra.mxu0 0.0
        %2185 = vmatprep.subr.mxu0 0.0
        %2186 = vmatpush1.msra.mxu0 0.0
        %2187 = vmatprep.subr.mxu0 0.0
        %2188 = vmatpush1.msra.mxu0 0.0
        %2189 = vmatprep.subr.mxu0 0.0
        %2190 = vmatpush1.msra.mxu0 0.0
        %2191 = vmatprep.subr.mxu0 0.0
        %2192 = vmatpush1.msra.mxu0 0.0
        %2193 = vmatprep.subr.mxu0 0.0
        %2194 = vmatpush1.msra.mxu0 0.0
        %2195 = vmatprep.subr.mxu0 0.0
        %2196 = vmatpush1.msra.mxu0 0.0
        %2197 = vmatprep.subr.mxu0 0.0
        %2198 = vmatpush1.msra.mxu0 0.0
        %2199 = vmatprep.subr.mxu0 0.0
        %2200 = vmatpush1.msra.mxu0 0.0
        %2201 = vmatprep.subr.mxu0 0.0
        %2202 = vmatpush1.msra.mxu0 0.0
        %2203 = vmatprep.subr.mxu0 0.0
        %2204 = vmatpush1.msra.mxu0 0.0
        %2205 = vmatprep.subr.mxu0 0.0
        %2206 = vmatpush1.msra.mxu0 0.0
        %2207 = vmatprep.subr.mxu0 0.0
        %2208 = vmatpush1.msra.mxu0 0.0
        %2209 = vmatprep.mubr.f32.mxu0 0.0
        %2210 = vmatmul.mubr.f32.gmra.mrb[0].mxu0 %v1149
        %v2211 = vpop.f32.mrb[0].mxu0
        %v2212 = vadd.f32 %v1102, %v2211
        %v2213 = vpop.f32.mrb[0].mxu0
        %v2214 = vadd.f32 %v1106, %v2213
        %2215 = vdwg.mxu0
        %2216 = vmatprep.subr.mxu0 %v754
        %2217 = vmatpush1.msra.mxu0 %v753
        %2218 = vmatprep.subr.mxu0 %v786
        %2219 = vmatpush1.msra.mxu0 %v785
        %2220 = vmatprep.subr.mxu0 %v818
        %2221 = vmatpush1.msra.mxu0 %v817
        %2222 = vmatprep.subr.mxu0 %v850
        %2223 = vmatpush1.msra.mxu0 %v849
        %2224 = vmatprep.subr.mxu0 %v882
        %2225 = vmatpush1.msra.mxu0 %v881
        %2226 = vmatprep.subr.mxu0 %v914
        %2227 = vmatpush1.msra.mxu0 %v913
        %2228 = vmatprep.subr.mxu0 %v946
        %2229 = vmatpush1.msra.mxu0 %v945
        %2230 = vmatprep.subr.mxu0 %v978
        %2231 = vmatpush1.msra.mxu0 %v977
        %2232 = vmatprep.subr.mxu0 0.0
        %2233 = vmatpush1.msra.mxu0 0.0
        %2234 = vmatprep.subr.mxu0 0.0
        %2235 = vmatpush1.msra.mxu0 0.0
        %2236 = vmatprep.subr.mxu0 0.0
        %2237 = vmatpush1.msra.mxu0 0.0
        %2238 = vmatprep.subr.mxu0 0.0
        %2239 = vmatpush1.msra.mxu0 0.0
        %2240 = vmatprep.subr.mxu0 0.0
        %2241 = vmatpush1.msra.mxu0 0.0
        %2242 = vmatprep.subr.mxu0 0.0
        %2243 = vmatpush1.msra.mxu0 0.0
        %2244 = vmatprep.subr.mxu0 0.0
        %2245 = vmatpush1.msra.mxu0 0.0
        %2246 = vmatprep.subr.mxu0 0.0
        %2247 = vmatpush1.msra.mxu0 0.0
        %2248 = vmatprep.subr.mxu0 0.0
        %2249 = vmatpush1.msra.mxu0 0.0
        %2250 = vmatprep.subr.mxu0 0.0
        %2251 = vmatpush1.msra.mxu0 0.0
        %2252 = vmatprep.subr.mxu0 0.0
        %2253 = vmatpush1.msra.mxu0 0.0
        %2254 = vmatprep.subr.mxu0 0.0
        %2255 = vmatpush1.msra.mxu0 0.0
        %2256 = vmatprep.subr.mxu0 0.0
        %2257 = vmatpush1.msra.mxu0 0.0
        %2258 = vmatprep.subr.mxu0 0.0
        %2259 = vmatpush1.msra.mxu0 0.0
        %2260 = vmatprep.subr.mxu0 0.0
        %2261 = vmatpush1.msra.mxu0 0.0
        %2262 = vmatprep.subr.mxu0 0.0
        %2263 = vmatpush1.msra.mxu0 0.0
        %2264 = vmatprep.subr.mxu0 0.0
        %2265 = vmatpush1.msra.mxu0 0.0
        %2266 = vmatprep.subr.mxu0 0.0
        %2267 = vmatpush1.msra.mxu0 0.0
        %2268 = vmatprep.subr.mxu0 0.0
        %2269 = vmatpush1.msra.mxu0 0.0
        %2270 = vmatprep.subr.mxu0 0.0
        %2271 = vmatpush1.msra.mxu0 0.0
        %2272 = vmatprep.subr.mxu0 0.0
        %2273 = vmatpush1.msra.mxu0 0.0
        %2274 = vmatprep.subr.mxu0 0.0
        %2275 = vmatpush1.msra.mxu0 0.0
        %2276 = vmatprep.subr.mxu0 0.0
        %2277 = vmatpush1.msra.mxu0 0.0
        %2278 = vmatprep.subr.mxu0 0.0
        %2279 = vmatpush1.msra.mxu0 0.0
        %2280 = vmatprep.mubr.f32.mxu0 0.0
        %2281 = vmatmul.mubr.f32.gmra.mrb[0].mxu0 %v1149
        %v2282 = vpop.f32.mrb[0].mxu0
        %v2283 = vadd.f32 %v1110, %v2282
        %v2284 = vpop.f32.mrb[0].mxu0
        %v2285 = vadd.f32 %v1114, %v2284
        %2286 = vdwg.mxu0
        %vm2287 = vcmp.gt.f32.partialorder %v1218, 0.0
        %vm2288 = vcmp.gt.f32.partialorder %v1220, 0.0
        %vm2289 = vcmp.gt.f32.partialorder %v1289, 0.0
        %vm2290 = vcmp.gt.f32.partialorder %v1291, 0.0
        %vm2291 = vcmp.gt.f32.partialorder %v1360, 0.0
        %vm2292 = vcmp.gt.f32.partialorder %v1362, 0.0
        %vm2293 = vcmp.gt.f32.partialorder %v1431, 0.0
        %vm2294 = vcmp.gt.f32.partialorder %v1433, 0.0
        %vm2295 = vcmp.gt.f32.partialorder %v1502, 0.0
        %vm2296 = vcmp.gt.f32.partialorder %v1504, 0.0
        %vm2297 = vcmp.gt.f32.partialorder %v1573, 0.0
        %vm2298 = vcmp.gt.f32.partialorder %v1575, 0.0
        %vm2299 = vcmp.gt.f32.partialorder %v1644, 0.0
        %vm2300 = vcmp.gt.f32.partialorder %v1646, 0.0
        %vm2301 = vcmp.gt.f32.partialorder %v1715, 0.0
        %vm2302 = vcmp.gt.f32.partialorder %v1717, 0.0
        %vm2303 = vcmp.gt.f32.partialorder %v1786, 0.0
        %vm2304 = vcmp.gt.f32.partialorder %v1788, 0.0
        %vm2305 = vcmp.gt.f32.partialorder %v1857, 0.0
        %vm2306 = vcmp.gt.f32.partialorder %v1859, 0.0
        %vm2307 = vcmp.gt.f32.partialorder %v1928, 0.0
        %vm2308 = vcmp.gt.f32.partialorder %v1930, 0.0
        %vm2309 = vcmp.gt.f32.partialorder %v1999, 0.0
        %vm2310 = vcmp.gt.f32.partialorder %v2001, 0.0
        %vm2311 = vcmp.gt.f32.partialorder %v2070, 0.0
        %vm2312 = vcmp.gt.f32.partialorder %v2072, 0.0
        %vm2313 = vcmp.gt.f32.partialorder %v2141, 0.0
        %vm2314 = vcmp.gt.f32.partialorder %v2143, 0.0
        %vm2315 = vcmp.gt.f32.partialorder %v2212, 0.0
        %vm2316 = vcmp.gt.f32.partialorder %v2214, 0.0
        %vm2317 = vcmp.gt.f32.partialorder %v2283, 0.0
        %vm2318 = vcmp.gt.f32.partialorder %v2285, 0.0
        %v2319 = vsel %vm2287, 1, 0
        %v2320 = vsel %vm2288, 1, 0
        %v2321 = vsel %vm2289, 1, 0
        %v2322 = vsel %vm2290, 1, 0
        %v2323 = vsel %vm2291, 1, 0
        %v2324 = vsel %vm2292, 1, 0
        %v2325 = vsel %vm2293, 1, 0
        %v2326 = vsel %vm2294, 1, 0
        %v2327 = vsel %vm2295, 1, 0
        %v2328 = vsel %vm2296, 1, 0
        %v2329 = vsel %vm2297, 1, 0
        %v2330 = vsel %vm2298, 1, 0
        %v2331 = vsel %vm2299, 1, 0
        %v2332 = vsel %vm2300, 1, 0
        %v2333 = vsel %vm2301, 1, 0
        %v2334 = vsel %vm2302, 1, 0
        %v2335 = vsel %vm2303, 1, 0
        %v2336 = vsel %vm2304, 1, 0
        %v2337 = vsel %vm2305, 1, 0
        %v2338 = vsel %vm2306, 1, 0
        %v2339 = vsel %vm2307, 1, 0
        %v2340 = vsel %vm2308, 1, 0
        %v2341 = vsel %vm2309, 1, 0
        %v2342 = vsel %vm2310, 1, 0
        %v2343 = vsel %vm2311, 1, 0
        %v2344 = vsel %vm2312, 1, 0
        %v2345 = vsel %vm2313, 1, 0
        %v2346 = vsel %vm2314, 1, 0
        %v2347 = vsel %vm2315, 1, 0
        %v2348 = vsel %vm2316, 1, 0
        %v2349 = vsel %vm2317, 1, 0
        %v2350 = vsel %vm2318, 1, 0
        %v2351 = vcvt.s32.f32 %v2319
        %v2352 = vcvt.s32.f32 %v2320
        %v2353 = vcvt.s32.f32 %v2321
        %v2354 = vcvt.s32.f32 %v2322
        %v2355 = vcvt.s32.f32 %v2323
        %v2356 = vcvt.s32.f32 %v2324
        %v2357 = vcvt.s32.f32 %v2325
        %v2358 = vcvt.s32.f32 %v2326
        %v2359 = vcvt.s32.f32 %v2327
        %v2360 = vcvt.s32.f32 %v2328
        %v2361 = vcvt.s32.f32 %v2329
        %v2362 = vcvt.s32.f32 %v2330
        %v2363 = vcvt.s32.f32 %v2331
        %v2364 = vcvt.s32.f32 %v2332
        %v2365 = vcvt.s32.f32 %v2333
        %v2366 = vcvt.s32.f32 %v2334
        %v2367 = vcvt.s32.f32 %v2335
        %v2368 = vcvt.s32.f32 %v2336
        %v2369 = vcvt.s32.f32 %v2337
        %v2370 = vcvt.s32.f32 %v2338
        %v2371 = vcvt.s32.f32 %v2339
        %v2372 = vcvt.s32.f32 %v2340
        %v2373 = vcvt.s32.f32 %v2341
        %v2374 = vcvt.s32.f32 %v2342
        %v2375 = vcvt.s32.f32 %v2343
        %v2376 = vcvt.s32.f32 %v2344
        %v2377 = vcvt.s32.f32 %v2345
        %v2378 = vcvt.s32.f32 %v2346
        %v2379 = vcvt.s32.f32 %v2347
        %v2380 = vcvt.s32.f32 %v2348
        %v2381 = vcvt.s32.f32 %v2349
        %v2382 = vcvt.s32.f32 %v2350
        %v2415 = vcombine.low %v2351, %v2352
        %v2416 = vcombine.low %v2353, %v2354
        %v2418 = vunpack.c.l.s4 1983009808
        %v2419 = vunpack.c.0.s8 %v2418
        %v2420 = vlaneseq
        %v2421 = vshrl.u32 %v2420, 7
        %v2422 = vsub.s32 %v2419, %v2421
        %v2423 = vrot.slane %v2415, %v2422
        %v2425 = vunpack.c.l.s4 1983009808
        %v2426 = vunpack.c.0.s8 %v2425
        %v2427 = vlaneseq
        %v2428 = vshrl.u32 %v2427, 7
        %v2429 = vsub.s32 %v2426, %v2428
        %v2430 = vrot.slane %v2416, %v2429
        %v2431 = vcombine.low %v2423, %v2430
        %v2432 = vcombine.low %v2355, %v2356
        %v2433 = vcombine.low %v2357, %v2358
        %v2435 = vunpack.c.l.s4 1983009808
        %v2436 = vunpack.c.0.s8 %v2435
        %v2437 = vlaneseq
        %v2438 = vshrl.u32 %v2437, 7
        %v2439 = vsub.s32 %v2436, %v2438
        %v2440 = vrot.slane %v2432, %v2439
        %v2442 = vunpack.c.l.s4 1983009808
        %v2443 = vunpack.c.0.s8 %v2442
        %v2444 = vlaneseq
        %v2445 = vshrl.u32 %v2444, 7
        %v2446 = vsub.s32 %v2443, %v2445
        %v2447 = vrot.slane %v2433, %v2446
        %v2448 = vcombine.low %v2440, %v2447
        %v2449 = vcombine.low %v2359, %v2360
        %v2450 = vcombine.low %v2361, %v2362
        %v2452 = vunpack.c.l.s4 1983009808
        %v2453 = vunpack.c.0.s8 %v2452
        %v2454 = vlaneseq
        %v2455 = vshrl.u32 %v2454, 7
        %v2456 = vsub.s32 %v2453, %v2455
        %v2457 = vrot.slane %v2449, %v2456
        %v2459 = vunpack.c.l.s4 1983009808
        %v2460 = vunpack.c.0.s8 %v2459
        %v2461 = vlaneseq
        %v2462 = vshrl.u32 %v2461, 7
        %v2463 = vsub.s32 %v2460, %v2462
        %v2464 = vrot.slane %v2450, %v2463
        %v2465 = vcombine.low %v2457, %v2464
        %v2466 = vcombine.low %v2363, %v2364
        %v2467 = vcombine.low %v2365, %v2366
        %v2469 = vunpack.c.l.s4 1983009808
        %v2470 = vunpack.c.0.s8 %v2469
        %v2471 = vlaneseq
        %v2472 = vshrl.u32 %v2471, 7
        %v2473 = vsub.s32 %v2470, %v2472
        %v2474 = vrot.slane %v2466, %v2473
        %v2476 = vunpack.c.l.s4 1983009808
        %v2477 = vunpack.c.0.s8 %v2476
        %v2478 = vlaneseq
        %v2479 = vshrl.u32 %v2478, 7
        %v2480 = vsub.s32 %v2477, %v2479
        %v2481 = vrot.slane %v2467, %v2480
        %v2482 = vcombine.low %v2474, %v2481
        %v2483 = vcombine.low %v2367, %v2368
        %v2484 = vcombine.low %v2369, %v2370
        %v2486 = vunpack.c.l.s4 1983009808
        %v2487 = vunpack.c.0.s8 %v2486
        %v2488 = vlaneseq
        %v2489 = vshrl.u32 %v2488, 7
        %v2490 = vsub.s32 %v2487, %v2489
        %v2491 = vrot.slane %v2483, %v2490
        %v2493 = vunpack.c.l.s4 1983009808
        %v2494 = vunpack.c.0.s8 %v2493
        %v2495 = vlaneseq
        %v2496 = vshrl.u32 %v2495, 7
        %v2497 = vsub.s32 %v2494, %v2496
        %v2498 = vrot.slane %v2484, %v2497
        %v2499 = vcombine.low %v2491, %v2498
        %v2500 = vcombine.low %v2371, %v2372
        %v2501 = vcombine.low %v2373, %v2374
        %v2503 = vunpack.c.l.s4 1983009808
        %v2504 = vunpack.c.0.s8 %v2503
        %v2505 = vlaneseq
        %v2506 = vshrl.u32 %v2505, 7
        %v2507 = vsub.s32 %v2504, %v2506
        %v2508 = vrot.slane %v2500, %v2507
        %v2510 = vunpack.c.l.s4 1983009808
        %v2511 = vunpack.c.0.s8 %v2510
        %v2512 = vlaneseq
        %v2513 = vshrl.u32 %v2512, 7
        %v2514 = vsub.s32 %v2511, %v2513
        %v2515 = vrot.slane %v2501, %v2514
        %v2516 = vcombine.low %v2508, %v2515
        %v2517 = vcombine.low %v2375, %v2376
        %v2518 = vcombine.low %v2377, %v2378
        %v2520 = vunpack.c.l.s4 1983009808
        %v2521 = vunpack.c.0.s8 %v2520
        %v2522 = vlaneseq
        %v2523 = vshrl.u32 %v2522, 7
        %v2524 = vsub.s32 %v2521, %v2523
        %v2525 = vrot.slane %v2517, %v2524
        %v2527 = vunpack.c.l.s4 1983009808
        %v2528 = vunpack.c.0.s8 %v2527
        %v2529 = vlaneseq
        %v2530 = vshrl.u32 %v2529, 7
        %v2531 = vsub.s32 %v2528, %v2530
        %v2532 = vrot.slane %v2518, %v2531
        %v2533 = vcombine.low %v2525, %v2532
        %v2534 = vcombine.low %v2379, %v2380
        %v2535 = vcombine.low %v2381, %v2382
        %v2537 = vunpack.c.l.s4 1983009808
        %v2538 = vunpack.c.0.s8 %v2537
        %v2539 = vlaneseq
        %v2540 = vshrl.u32 %v2539, 7
        %v2541 = vsub.s32 %v2538, %v2540
        %v2542 = vrot.slane %v2534, %v2541
        %v2544 = vunpack.c.l.s4 1983009808
        %v2545 = vunpack.c.0.s8 %v2544
        %v2546 = vlaneseq
        %v2547 = vshrl.u32 %v2546, 7
        %v2548 = vsub.s32 %v2545, %v2547
        %v2549 = vrot.slane %v2535, %v2548
        %v2550 = vcombine.low %v2542, %v2549
        %2559 = vst [vmem:[%s720] sm:$0xff] %v2431
        %2560 = vst [vmem:[%s720 + $0x8] sm:$0xff] %v2448
        %2561 = vst [vmem:[%s720 + $0x10] sm:$0xff] %v2465
        %2562 = vst [vmem:[%s720 + $0x18] sm:$0xff] %v2482
        %2563 = vst [vmem:[%s720 + $0x20] sm:$0xff] %v2499
        %2564 = vst [vmem:[%s720 + $0x28] sm:$0xff] %v2516
        %2565 = vst [vmem:[%s720 + $0x30] sm:$0xff] %v2533
        %2566 = vst [vmem:[%s720 + $0x38] sm:$0xff] %v2550
        %s2567 = smul.u32 32, %s14
        %p2568 = scmp.lt.s32.totalorder %s2567, 63
        %s2569 = scalar_select %p2568, %s2567, 63
        %s2570 = smul.addr %s2569, 2
        %s2571 = scalar_lea.vmem %s3, %s2570
        // Predicated region
        $region56: #{img_csnn_ae_v3_forward.3} parent=50 // pred_check
          %p2572 = pneg %p105
        $region57: #{img_csnn_ae_v3_forward.3} parent=50 // pred_check_branch
          %2574 = sbr.rel (%p2572) target = $region59
        $region58: #{img_csnn_ae_v3_forward.3} parent=50 // pred_region
          %s2575 = smul.u32 32, %s14
        $region59: #{img_csnn_ae_v3_forward.3} parent=50 // pred_fallthru
          _
      $region51: #{img_csnn_ae_v3_forward.3} parent=5 // pred_fallthru
        _
      %p2576 = scmp.le.s32.totalorder 2, %s9
      // Predicated region
      $region60: #{img_csnn_ae_v3_forward.3} parent=5 // pred_check
        %p2577 = pneg %p2576
      $region61: #{img_csnn_ae_v3_forward.3} parent=5 // pred_check_branch
        %2579 = sbr.rel (%p2577) target = $region63
      $region62: #{img_csnn_ae_v3_forward.3} parent=5 // pred_region
        %s2580 = ssub.s32 %s9, 2
        // Predicated region
        $region64: #{img_csnn_ae_v3_forward.3} parent=62 // pred_check
          %p2581 = pneg %p111
        $region65: #{img_csnn_ae_v3_forward.3} parent=62 // pred_check_branch
          %2583 = sbr.rel (%p2581) target = $region67
        $region66: #{img_csnn_ae_v3_forward.3} parent=62 // pred_region
          %s2584 = smul.u32 32, %s15
          %p2585 = scmp.lt.s32.totalorder %s2584, 63
          %s2586 = scalar_select %p2585, %s2584, 63
          %s2587 = smul.addr %s2586, 2
          %s2588 = scalar_lea.vmem %s3, %s2587
        $region67: #{img_csnn_ae_v3_forward.3} parent=62 // pred_fallthru
          _
      $region63: #{img_csnn_ae_v3_forward.3} parent=5 // pred_fallthru
        _
    $region6: #{img_csnn_ae_v3_forward.3} parent=1 // loop_footer
      %s13 = sadd.s32 1, %s9
    $region7: #{img_csnn_ae_v3_forward.3} parent=1 // loop_footer_branch
      %8 = sbr.rel target = $region3
    $region8: #{img_csnn_ae_v3_forward.3} parent=1 // loop_exit
      _

// kernel: img_csnn_ae_v3_forward.2
$region0: #{img_csnn_ae_v3_forward.2}
  #allocation0 [shape = 'u32[]', space=smem, size = 0x4, offset = 0x4, fixed_abs, tag = 'smem constant byte address 0x4 - core index']
  #allocation1 [shape = 'u32[144,128]{1,0:T(1,128)}', space=vmem, size = 0x12000, scoped, tag = 'internal scratch']
  #allocation2 [shape = 'f32[8,512]{1,0:T(8,128)}', space=vmem, size = 0x4000, scoped, tag = 'scratch operand']
  %s0 = inlined_call_operand.vmem [shape: f32[2,1,1024], index: 0, kind: input, shape index: {}]
  %s1 = inlined_call_operand.vmem [shape: f32[2,8,1024], index: 1, kind: input, shape index: {}]
  %s2 = inlined_call_operand.hbm [shape: f32[1024,512], index: 2, kind: input, shape index: {}]
  %s3 = inlined_call_operand.hbm [shape: f32[1,512], index: 3, kind: input, shape index: {}]
  %s4 = inlined_call_operand.vmem [shape: f32[512,64], index: 4, kind: input, shape index: {}]
  %s5 = inlined_call_operand.hbm [shape: f32[1,64], index: 5, kind: input, shape index: {}]
  %s6 = inlined_call_operand.vmem [shape: f32[2,8,1024], index: 6, kind: output, shape index: {0}]
  %s7 = inlined_call_operand.vmem [shape: f32[2,1,64], index: 7, kind: output, shape index: {1}]
  %8 = xla_tuple %s6, %s7
  %s9 = sld [smem:[#allocation0]]
  $region77: #{img_csnn_ae_v3_forward.2} parent=0
    _
  %s11 = ssub.s32 1, %s9
  %s12 = scalar_select 0, %s11, %s9
  $region1: #{img_csnn_ae_v3_forward.2} parent=0
    #allocation3 [shape = 'u8[2097152]{0}', space=vmem, size = 0x200000, scoped, tag = 'input window, operand 2, single buffered']
    #allocation4 [shape = 's32[2]{0}', space=sflag, size = 0x8, scoped, tag = 'scoped memory for img_csnn_ae_v3_forward.2']
    #allocation5 [shape = 'u8[2048]{0}', space=vmem, size = 0x800, scoped, tag = 'input window, operand 3, single buffered']
    #allocation6 [shape = 's32[1]{0}', space=sflag, size = 0x4, scoped, tag = 'scoped memory for img_csnn_ae_v3_forward.2']
    #allocation7 [shape = 'u8[512]{0}', space=vmem, size = 0x400, scoped, tag = 'input window, operand 5, single buffered']
    %13 = vsyncpa [#allocation4], 0
    %14 = vsyncpa [#allocation6], 0
    loop: start=0, step=1, limit=4
    $region2: #{img_csnn_ae_v3_forward.2} parent=1 // loop_pre_header
      _
    $region3: #{img_csnn_ae_v3_forward.2} parent=1 // loop_header
      %s16 = sphi 0, %s20
      %p17 = scmp.ge.s32.totalorder %s16, 4
      %s26 = sphi 0, %s28
      %s29 = sphi 0, %s26
      %s30 = sphi 0, %s29
      %s46 = sphi 0, %s30
      %s52 = sphi 0, %s54
      %s55 = sphi 0, %s52
      %s56 = sphi 0, %s55
      %s72 = sphi 0, %s56
      %s76 = sphi 0, %s76
      %s78 = sphi 0, %s76
      %s79 = sphi 0, %s78
      %s93 = sphi 0, %s79
      %s97 = sphi 0, %s97
      %s99 = sphi 0, %s97
      %s100 = sphi 0, %s99
      %s114 = sphi 0, %s100
      %s118 = sphi 0, %s118
      %s120 = sphi 0, %s118
      %s121 = sphi 0, %s120
      %s135 = sphi 0, %s121
      %s139 = sphi 0, %s139
      %s141 = sphi 0, %s139
      %s142 = sphi 0, %s141
      %s156 = sphi 0, %s142
      %s162 = sphi 0, %s164
      %s165 = sphi 0, %s162
      %s166 = sphi 0, %s165
      %s182 = sphi 0, %s166
      %s188 = sphi 0, %s190
      %s191 = sphi 0, %s188
      %s192 = sphi 0, %s191
      %s208 = sphi 0, %s192
    $region4: #{img_csnn_ae_v3_forward.2} parent=1 // loop_header_branch
      %19 = sbr.rel (%p17) target = $region8
    $region5: #{img_csnn_ae_v3_forward.2} parent=1 // loop_body
      %s21 = ssub.s32 %s16, 1
      %s22 = ssub.s32 %s16, 2
      %s23 = sadd.s32 %s16, 1
      %s24 = ssub.s32 %s16, %s23
      %p25 = scmp.eq.s32.totalorder %s24, 0
      %s27 = sadd.s32 %s26, 1
      %s28 = scalar_select %p25, %s26, %s27
      %p31 = pneg %p25
      %p32 = scmp.eq.s32.totalorder %s16, 1
      %p33 = por %p31, %p32
      %p34 = scmp.ne.s32.totalorder %s26, %s29
      %p35 = scmp.eq.s32.totalorder %s16, 0
      %p36 = por %p34, %p35
      %p37 = scmp.ne.s32.totalorder %s26, %s29
      %p38 = scmp.eq.s32.totalorder %s21, 1
      %p39 = por %p37, %p38
      %p40 = scmp.ne.s32.totalorder %s29, %s30
      %p41 = scmp.eq.s32.totalorder %s21, 0
      %p42 = por %p40, %p41
      %p43 = scmp.ne.s32.totalorder %s29, %s30
      %p44 = scmp.eq.s32.totalorder %s22, 1
      %p45 = por %p43, %p44
      %p47 = scmp.ne.s32.totalorder %s30, %s46
      %p48 = scmp.eq.s32.totalorder %s22, 0
      %p49 = por %p47, %p48
      %s50 = ssub.s32 %s16, %s23
      %p51 = scmp.eq.s32.totalorder %s50, 0
      %s53 = sadd.s32 %s52, 1
      %s54 = scalar_select %p51, %s52, %s53
      %p57 = pneg %p51
      %p58 = scmp.eq.s32.totalorder %s16, 1
      %p59 = por %p57, %p58
      %p60 = scmp.ne.s32.totalorder %s52, %s55
      %p61 = scmp.eq.s32.totalorder %s16, 0
      %p62 = por %p60, %p61
      %p63 = scmp.ne.s32.totalorder %s52, %s55
      %p64 = scmp.eq.s32.totalorder %s21, 1
      %p65 = por %p63, %p64
      %p66 = scmp.ne.s32.totalorder %s55, %s56
      %p67 = scmp.eq.s32.totalorder %s21, 0
      %p68 = por %p66, %p67
      %p69 = scmp.ne.s32.totalorder %s55, %s56
      %p70 = scmp.eq.s32.totalorder %s22, 1
      %p71 = por %p69, %p70
      %p73 = scmp.ne.s32.totalorder %s56, %s72
      %p74 = scmp.eq.s32.totalorder %s22, 0
      %p75 = por %p73, %p74
      %s77 = sadd.s32 %s76, 1
      %p80 = scmp.eq.s32.totalorder %s16, 1
      %p81 = scmp.ne.s32.totalorder %s76, %s78
      %p82 = scmp.eq.s32.totalorder %s16, 0
      %p83 = por %p81, %p82
      %p84 = scmp.ne.s32.totalorder %s76, %s78
      %p85 = scmp.eq.s32.totalorder %s21, 1
      %p86 = por %p84, %p85
      %p87 = scmp.ne.s32.totalorder %s78, %s79
      %p88 = scmp.eq.s32.totalorder %s21, 0
      %p89 = por %p87, %p88
      %p90 = scmp.ne.s32.totalorder %s78, %s79
      %p91 = scmp.eq.s32.totalorder %s22, 1
      %p92 = por %p90, %p91
      %p94 = scmp.ne.s32.totalorder %s79, %s93
      %p95 = scmp.eq.s32.totalorder %s22, 0
      %p96 = por %p94, %p95
      %s98 = sadd.s32 %s97, 1
      %p101 = scmp.eq.s32.totalorder %s16, 1
      %p102 = scmp.ne.s32.totalorder %s97, %s99
      %p103 = scmp.eq.s32.totalorder %s16, 0
      %p104 = por %p102, %p103
      %p105 = scmp.ne.s32.totalorder %s97, %s99
      %p106 = scmp.eq.s32.totalorder %s21, 1
      %p107 = por %p105, %p106
      %p108 = scmp.ne.s32.totalorder %s99, %s100
      %p109 = scmp.eq.s32.totalorder %s21, 0
      %p110 = por %p108, %p109
      %p111 = scmp.ne.s32.totalorder %s99, %s100
      %p112 = scmp.eq.s32.totalorder %s22, 1
      %p113 = por %p111, %p112
      %p115 = scmp.ne.s32.totalorder %s100, %s114
      %p116 = scmp.eq.s32.totalorder %s22, 0
      %p117 = por %p115, %p116
      %s119 = sadd.s32 %s118, 1
      %p122 = scmp.eq.s32.totalorder %s16, 1
      %p123 = scmp.ne.s32.totalorder %s118, %s120
      %p124 = scmp.eq.s32.totalorder %s16, 0
      %p125 = por %p123, %p124
      %p126 = scmp.ne.s32.totalorder %s118, %s120
      %p127 = scmp.eq.s32.totalorder %s21, 1
      %p128 = por %p126, %p127
      %p129 = scmp.ne.s32.totalorder %s120, %s121
      %p130 = scmp.eq.s32.totalorder %s21, 0
      %p131 = por %p129, %p130
      %p132 = scmp.ne.s32.totalorder %s120, %s121
      %p133 = scmp.eq.s32.totalorder %s22, 1
      %p134 = por %p132, %p133
      %p136 = scmp.ne.s32.totalorder %s121, %s135
      %p137 = scmp.eq.s32.totalorder %s22, 0
      %p138 = por %p136, %p137
      %s140 = sadd.s32 %s139, 1
      %p143 = scmp.eq.s32.totalorder %s16, 1
      %p144 = scmp.ne.s32.totalorder %s139, %s141
      %p145 = scmp.eq.s32.totalorder %s16, 0
      %p146 = por %p144, %p145
      %p147 = scmp.ne.s32.totalorder %s139, %s141
      %p148 = scmp.eq.s32.totalorder %s21, 1
      %p149 = por %p147, %p148
      %p150 = scmp.ne.s32.totalorder %s141, %s142
      %p151 = scmp.eq.s32.totalorder %s21, 0
      %p152 = por %p150, %p151
      %p153 = scmp.ne.s32.totalorder %s141, %s142
      %p154 = scmp.eq.s32.totalorder %s22, 1
      %p155 = por %p153, %p154
      %p157 = scmp.ne.s32.totalorder %s142, %s156
      %p158 = scmp.eq.s32.totalorder %s22, 0
      %p159 = por %p157, %p158
      %s160 = ssub.s32 %s16, %s23
      %p161 = scmp.eq.s32.totalorder %s160, 0
      %s163 = sadd.s32 %s162, 1
      %s164 = scalar_select %p161, %s162, %s163
      %p167 = pneg %p161
      %p168 = scmp.eq.s32.totalorder %s16, 1
      %p169 = por %p167, %p168
      %p170 = scmp.ne.s32.totalorder %s162, %s165
      %p171 = scmp.eq.s32.totalorder %s16, 0
      %p172 = por %p170, %p171
      %p173 = scmp.ne.s32.totalorder %s162, %s165
      %p174 = scmp.eq.s32.totalorder %s21, 1
      %p175 = por %p173, %p174
      %p176 = scmp.ne.s32.totalorder %s165, %s166
      %p177 = scmp.eq.s32.totalorder %s21, 0
      %p178 = por %p176, %p177
      %p179 = scmp.ne.s32.totalorder %s165, %s166
      %p180 = scmp.eq.s32.totalorder %s22, 1
      %p181 = por %p179, %p180
      %p183 = scmp.ne.s32.totalorder %s166, %s182
      %p184 = scmp.eq.s32.totalorder %s22, 0
      %p185 = por %p183, %p184
      %s186 = ssub.s32 %s16, %s23
      %p187 = scmp.eq.s32.totalorder %s186, 0
      %s189 = sadd.s32 %s188, 1
      %s190 = scalar_select %p187, %s188, %s189
      %p193 = pneg %p187
      %p194 = scmp.eq.s32.totalorder %s16, 1
      %p195 = por %p193, %p194
      %p196 = scmp.ne.s32.totalorder %s188, %s191
      %p197 = scmp.eq.s32.totalorder %s16, 0
      %p198 = por %p196, %p197
      %p199 = scmp.ne.s32.totalorder %s188, %s191
      %p200 = scmp.eq.s32.totalorder %s21, 1
      %p201 = por %p199, %p200
      %p202 = scmp.ne.s32.totalorder %s191, %s192
      %p203 = scmp.eq.s32.totalorder %s21, 0
      %p204 = por %p202, %p203
      %p205 = scmp.ne.s32.totalorder %s191, %s192
      %p206 = scmp.eq.s32.totalorder %s22, 1
      %p207 = por %p205, %p206
      %p209 = scmp.ne.s32.totalorder %s192, %s208
      %p210 = scmp.eq.s32.totalorder %s22, 0
      %p211 = por %p209, %p210
      %p212 = scmp.le.s32.totalorder 1, %s16
      %p213 = scmp.lt.s32.totalorder %s16, 3
      %p214 = pnand %p212, %p213
      %p215 = pneg %p214
      // Predicated region
      $region9: #{img_csnn_ae_v3_forward.2} parent=5 // pred_check
        _
      $region10: #{img_csnn_ae_v3_forward.2} parent=5 // pred_check_branch
        %217 = sbr.rel (%p214) target = $region12
      $region11: #{img_csnn_ae_v3_forward.2} parent=5 // pred_region
        %s218 = ssub.s32 %s16, 1
        // Predicated region
        $region13: #{img_csnn_ae_v3_forward.2} parent=11 // pred_check
          %p219 = pneg %p89
        $region14: #{img_csnn_ae_v3_forward.2} parent=11 // pred_check_branch
          %221 = sbr.rel (%p219) target = $region16
        $region15: #{img_csnn_ae_v3_forward.2} parent=11 // pred_region
          %s223 = ssub.s32 65536, 65536
          %224 = vsyncadd [#allocation4], %s223
          %s225 = sshll.u32 [#allocation3], 4
          %s226 = int_to_ptr.vmem [resolvable:$true] %s225
          %231 = dma.hbm_to_vmem [thread:$0]  %s2, 65536, %s226, [#allocation4], 512, 512, 32
        $region16: #{img_csnn_ae_v3_forward.2} parent=11 // pred_fallthru
          _
        // Predicated region
        $region17: #{img_csnn_ae_v3_forward.2} parent=11 // pred_check
          %p232 = pneg %p110
        $region18: #{img_csnn_ae_v3_forward.2} parent=11 // pred_check_branch
          %234 = sbr.rel (%p232) target = $region20
        $region19: #{img_csnn_ae_v3_forward.2} parent=11 // pred_region
          %s236 = ssub.s32 64, 64
          %237 = vsyncadd [#allocation6], %s236
          %s239 = sshll.u32 [#allocation5], 4
          %s240 = int_to_ptr.vmem [resolvable:$true] %s239
          %242 = dma.hbm_to_vmem [thread:$0]  %s3, 64, %s240, [#allocation6]
        $region20: #{img_csnn_ae_v3_forward.2} parent=11 // pred_fallthru
          _
        // Predicated region
        $region21: #{img_csnn_ae_v3_forward.2} parent=11 // pred_check
          %p243 = pneg %p131
        $region22: #{img_csnn_ae_v3_forward.2} parent=11 // pred_check_branch
          %245 = sbr.rel (%p243) target = $region24
        $region23: #{img_csnn_ae_v3_forward.2} parent=11 // pred_region
          _
        $region24: #{img_csnn_ae_v3_forward.2} parent=11 // pred_fallthru
          _
        // Predicated region
        $region25: #{img_csnn_ae_v3_forward.2} parent=11 // pred_check
          %p246 = pneg %p152
        $region26: #{img_csnn_ae_v3_forward.2} parent=11 // pred_check_branch
          %248 = sbr.rel (%p246) target = $region28
        $region27: #{img_csnn_ae_v3_forward.2} parent=11 // pred_region
          %s250 = ssub.s32 16, 16
          %251 = vsyncadd [#allocation6], %s250
          %s253 = sshll.u32 [#allocation7], 4
          %s254 = int_to_ptr.vmem [resolvable:$true] %s253
          %256 = dma.hbm_to_vmem [thread:$0]  %s5, 16, %s254, [#allocation6]
        $region28: #{img_csnn_ae_v3_forward.2} parent=11 // pred_fallthru
          _
      $region12: #{img_csnn_ae_v3_forward.2} parent=5 // pred_fallthru
        _
      %p257 = scmp.lt.s32.totalorder %s16, 2
      // Predicated region
      $region29: #{img_csnn_ae_v3_forward.2} parent=5 // pred_check
        %p258 = pneg %p257
      $region30: #{img_csnn_ae_v3_forward.2} parent=5 // pred_check_branch
        %260 = sbr.rel (%p258) target = $region32
      $region31: #{img_csnn_ae_v3_forward.2} parent=5 // pred_region
        // Predicated region
        $region33: #{img_csnn_ae_v3_forward.2} parent=31 // pred_check
          %p261 = pneg %p36
        $region34: #{img_csnn_ae_v3_forward.2} parent=31 // pred_check_branch
          %263 = sbr.rel (%p261) target = $region36
        $region35: #{img_csnn_ae_v3_forward.2} parent=31 // pred_region
          %p264 = scmp.lt.s32.totalorder %s16, 1
          %s265 = scalar_select %p264, %s16, 1
          %s266 = smul.addr %s265, 8
          %s267 = scalar_lea.vmem %s0, %s266
        $region36: #{img_csnn_ae_v3_forward.2} parent=31 // pred_fallthru
          _
        // Predicated region
        $region37: #{img_csnn_ae_v3_forward.2} parent=31 // pred_check
          %p268 = pneg %p62
        $region38: #{img_csnn_ae_v3_forward.2} parent=31 // pred_check_branch
          %270 = sbr.rel (%p268) target = $region40
        $region39: #{img_csnn_ae_v3_forward.2} parent=31 // pred_region
          %p271 = scmp.lt.s32.totalorder %s16, 1
          %s272 = scalar_select %p271, %s16, 1
          %s273 = smul.addr %s272, 8
          %s274 = smul.addr %s273, 8
          %s275 = scalar_lea.vmem %s1, %s274
        $region40: #{img_csnn_ae_v3_forward.2} parent=31 // pred_fallthru
          _
      $region32: #{img_csnn_ae_v3_forward.2} parent=5 // pred_fallthru
        _
      %p276 = scmp.le.s32.totalorder 1, %s16
      %p277 = scmp.lt.s32.totalorder %s16, 3
      %p278 = pnand %p276, %p277
      %p279 = pneg %p278
      // Predicated region
      $region41: #{img_csnn_ae_v3_forward.2} parent=5 // pred_check
        _
      $region42: #{img_csnn_ae_v3_forward.2} parent=5 // pred_check_branch
        %281 = sbr.rel (%p278) target = $region44
      $region43: #{img_csnn_ae_v3_forward.2} parent=5 // pred_region
        %s282 = ssub.s32 %s16, 1
        // Predicated region
        $region45: #{img_csnn_ae_v3_forward.2} parent=43 // pred_check
          %p283 = pneg %p89
        $region46: #{img_csnn_ae_v3_forward.2} parent=43 // pred_check_branch
          %285 = sbr.rel (%p283) target = $region48
        $region47: #{img_csnn_ae_v3_forward.2} parent=43 // pred_region
          %286 = dma.done [#allocation4], 65536
        $region48: #{img_csnn_ae_v3_forward.2} parent=43 // pred_fallthru
          _
        // Predicated region
        $region49: #{img_csnn_ae_v3_forward.2} parent=43 // pred_check
          %p287 = pneg %p110
        $region50: #{img_csnn_ae_v3_forward.2} parent=43 // pred_check_branch
          %289 = sbr.rel (%p287) target = $region52
        $region51: #{img_csnn_ae_v3_forward.2} parent=43 // pred_region
          %290 = dma.done [#allocation6], 64
        $region52: #{img_csnn_ae_v3_forward.2} parent=43 // pred_fallthru
          _
        // Predicated region
        $region53: #{img_csnn_ae_v3_forward.2} parent=43 // pred_check
          %p291 = pneg %p152
        $region54: #{img_csnn_ae_v3_forward.2} parent=43 // pred_check_branch
          %293 = sbr.rel (%p291) target = $region56
        $region55: #{img_csnn_ae_v3_forward.2} parent=43 // pred_region
          %294 = dma.done [#allocation6], 16
        $region56: #{img_csnn_ae_v3_forward.2} parent=43 // pred_fallthru
          _
        %p295 = scmp.lt.s32.totalorder %s21, 1
        %s296 = scalar_select %p295, %s21, 1
        %s297 = smul.addr %s296, 8
        %s298 = scalar_lea.vmem %s0, %s297
        %p299 = pneg %p42
        %p300 = pneg %p39
        %p301 = scmp.lt.s32.totalorder %s21, 1
        %s302 = scalar_select %p301, %s21, 1
        %s303 = smul.addr %s302, 8
        %s304 = smul.addr %s303, 8
        %s305 = scalar_lea.vmem %s1, %s304
        %p306 = pneg %p68
        %p307 = pneg %p65
        %p308 = pneg %p89
        %p309 = pneg %p86
        %p310 = pneg %p110
        %p311 = pneg %p107
        %p312 = pneg %p131
        %p313 = pneg %p128
        %p314 = pneg %p152
        %p315 = pneg %p149
        %p316 = pneg %p178
        %p317 = pneg %p175
        %p318 = scmp.lt.s32.totalorder %s21, 1
        %s319 = scalar_select %p318, %s21, 1
        %s320 = smul.addr %s319, 8
        %s321 = smul.addr %s320, 8
        %s322 = scalar_lea.vmem %s6, %s321
        %p323 = pneg %p204
        %p324 = pneg %p201
        %p325 = scmp.lt.s32.totalorder %s21, 1
        %s326 = scalar_select %p325, %s21, 1
        %s327 = scalar_lea.vmem %s7, %s326
        %p328 = scmp.lt.s32.totalorder %s21, 1
        %s329 = scalar_select %p328, %s21, 1
        %s330 = smul.addr %s329, 8
        %s331 = scalar_lea.vmem %s0, %s330
        %p332 = scmp.lt.s32.totalorder %s21, 1
        %s333 = scalar_select %p332, %s21, 1
        %s334 = smul.addr %s333, 8
        %s335 = smul.addr %s334, 8
        %s336 = scalar_lea.vmem %s1, %s335
        %p337 = scmp.lt.s32.totalorder %s21, 1
        %s338 = scalar_select %p337, %s21, 1
        %s339 = smul.addr %s338, 8
        %s340 = smul.addr %s339, 8
        %s341 = scalar_lea.vmem %s6, %s340
        %p342 = scmp.lt.s32.totalorder %s21, 1
        %s343 = scalar_select %p342, %s21, 1
        %s344 = scalar_lea.vmem %s7, %s343
        %v345 = vld [vmem:[%s336] sm:$0xff]
        %v346 = vld [vmem:[%s336 + $0x8] sm:$0xff]
        %v347 = vld [vmem:[%s336 + $0x10] sm:$0xff]
        %v348 = vld [vmem:[%s336 + $0x18] sm:$0xff]
        %v349 = vld [vmem:[%s336 + $0x20] sm:$0xff]
        %v350 = vld [vmem:[%s336 + $0x28] sm:$0xff]
        %v351 = vld [vmem:[%s336 + $0x30] sm:$0xff]
        %v352 = vld [vmem:[%s336 + $0x38] sm:$0xff]
        %v353 = vld [vmem:[%s331] sm:$0xff]
        %v355 = vlaneseq
        %v356 = vshrl.u32 %v355, 7
        %v357 = vsub.s32 0, %v356
        %v358 = vrot.slane %v353, %v357
        %v359 = vlaneseq
        %v360 = vshrl.u32 %v359, 7
        %v361 = vsub.s32 1, %v360
        %v362 = vrot.slane %v353, %v361
        %v363 = vlaneseq
        %v364 = vshrl.u32 %v363, 7
        %v365 = vsub.s32 2, %v364
        %v366 = vrot.slane %v353, %v365
        %v367 = vlaneseq
        %v368 = vshrl.u32 %v367, 7
        %v369 = vsub.s32 3, %v368
        %v370 = vrot.slane %v353, %v369
        %v371 = vlaneseq
        %v372 = vshrl.u32 %v371, 7
        %v373 = vsub.s32 4, %v372
        %v374 = vrot.slane %v353, %v373
        %v375 = vlaneseq
        %v376 = vshrl.u32 %v375, 7
        %v377 = vsub.s32 5, %v376
        %v378 = vrot.slane %v353, %v377
        %v379 = vlaneseq
        %v380 = vshrl.u32 %v379, 7
        %v381 = vsub.s32 6, %v380
        %v382 = vrot.slane %v353, %v381
        %v383 = vlaneseq
        %v384 = vshrl.u32 %v383, 7
        %v385 = vsub.s32 7, %v384
        %v386 = vrot.slane %v353, %v385
        %vm395 = vcmp.lt.f32.partialorder %v345, %v358
        %vm396 = vcmp.lt.f32.partialorder %v346, %v362
        %vm397 = vcmp.lt.f32.partialorder %v347, %v366
        %vm398 = vcmp.lt.f32.partialorder %v348, %v370
        %vm399 = vcmp.lt.f32.partialorder %v349, %v374
        %vm400 = vcmp.lt.f32.partialorder %v350, %v378
        %vm401 = vcmp.lt.f32.partialorder %v351, %v382
        %vm402 = vcmp.lt.f32.partialorder %v352, %v386
        %v403 = vsel %vm395, 1, 0
        %v404 = vsel %vm396, 1, 0
        %v405 = vsel %vm397, 1, 0
        %v406 = vsel %vm398, 1, 0
        %v407 = vsel %vm399, 1, 0
        %v408 = vsel %vm400, 1, 0
        %v409 = vsel %vm401, 1, 0
        %v410 = vsel %vm402, 1, 0
        %v411 = vcvt.s32.f32 %v403
        %v412 = vcvt.s32.f32 %v404
        %v413 = vcvt.s32.f32 %v405
        %v414 = vcvt.s32.f32 %v406
        %v415 = vcvt.s32.f32 %v407
        %v416 = vcvt.s32.f32 %v408
        %v417 = vcvt.s32.f32 %v409
        %v418 = vcvt.s32.f32 %v410
        %419 = vst [vmem:[%s341] sm:$0xff] %v411
        %420 = vst [vmem:[%s341 + $0x8] sm:$0xff] %v412
        %421 = vst [vmem:[%s341 + $0x10] sm:$0xff] %v413
        %422 = vst [vmem:[%s341 + $0x18] sm:$0xff] %v414
        %423 = vst [vmem:[%s341 + $0x20] sm:$0xff] %v415
        %424 = vst [vmem:[%s341 + $0x28] sm:$0xff] %v416
        %425 = vst [vmem:[%s341 + $0x30] sm:$0xff] %v417
        %426 = vst [vmem:[%s341 + $0x38] sm:$0xff] %v418
        %v427 = vld [vmem:[#allocation3] sm:$0xff]
        %v428 = vld [vmem:[#allocation3 + $0x8] sm:$0xff]
        %v429 = vld [vmem:[#allocation3 + $0x10] sm:$0xff]
        %v430 = vld [vmem:[#allocation3 + $0x18] sm:$0xff]
        %v431 = vld [vmem:[#allocation3 + $0x20] sm:$0xff]
        %v432 = vld [vmem:[#allocation3 + $0x28] sm:$0xff]
        %v433 = vld [vmem:[#allocation3 + $0x30] sm:$0xff]
        %v434 = vld [vmem:[#allocation3 + $0x38] sm:$0xff]
        %v435 = vld [vmem:[#allocation3 + $0x40] sm:$0xff]
        %v436 = vld [vmem:[#allocation3 + $0x48] sm:$0xff]
        %v437 = vld [vmem:[#allocation3 + $0x50] sm:$0xff]
        %v438 = vld [vmem:[#allocation3 + $0x58] sm:$0xff]
        %v439 = vld [vmem:[#allocation3 + $0x60] sm:$0xff]
        %v440 = vld [vmem:[#allocation3 + $0x68] sm:$0xff]
        %v441 = vld [vmem:[#allocation3 + $0x70] sm:$0xff]
        %v442 = vld [vmem:[#allocation3 + $0x78] sm:$0xff]
        %v443 = vld [vmem:[#allocation3 + $0x80] sm:$0xff]
        %v444 = vld [vmem:[#allocation3 + $0x88] sm:$0xff]
        %v445 = vld [vmem:[#allocation3 + $0x90] sm:$0xff]
        %v446 = vld [vmem:[#allocation3 + $0x98] sm:$0xff]
        %v447 = vld [vmem:[#allocation3 + $0xa0] sm:$0xff]
        %v448 = vld [vmem:[#allocation3 + $0xa8] sm:$0xff]
        %v449 = vld [vmem:[#allocation3 + $0xb0] sm:$0xff]
        %v450 = vld [vmem:[#allocation3 + $0xb8] sm:$0xff]
        %v451 = vld [vmem:[#allocation3 + $0xc0] sm:$0xff]
        %v452 = vld [vmem:[#allocation3 + $0xc8] sm:$0xff]
        %v453 = vld [vmem:[#allocation3 + $0xd0] sm:$0xff]
        %v454 = vld [vmem:[#allocation3 + $0xd8] sm:$0xff]
        %v455 = vld [vmem:[#allocation3 + $0xe0] sm:$0xff]
        %v456 = vld [vmem:[#allocation3 + $0xe8] sm:$0xff]
        %v457 = vld [vmem:[#allocation3 + $0xf0] sm:$0xff]
        %v458 = vld [vmem:[#allocation3 + $0xf8] sm:$0xff]
        %v459 = vld [vmem:[#allocation3 + $0x100] sm:$0xff]
        %v460 = vld [vmem:[#allocation3 + $0x108] sm:$0xff]
        %v461 = vld [vmem:[#allocation3 + $0x110] sm:$0xff]
        %v462 = vld [vmem:[#allocation3 + $0x118] sm:$0xff]
        %v463 = vld [vmem:[#allocation3 + $0x120] sm:$0xff]
        %v464 = vld [vmem:[#allocation3 + $0x128] sm:$0xff]
        %v465 = vld [vmem:[#allocation3 + $0x130] sm:$0xff]
        %v466 = vld [vmem:[#allocation3 + $0x138] sm:$0xff]
        %v467 = vld [vmem:[#allocation3 + $0x140] sm:$0xff]
        %v468 = vld [vmem:[#allocation3 + $0x148] sm:$0xff]
        %v469 = vld [vmem:[#allocation3 + $0x150] sm:$0xff]
        %v470 = vld [vmem:[#allocation3 + $0x158] sm:$0xff]
        %v471 = vld [vmem:[#allocation3 + $0x160] sm:$0xff]
        %v472 = vld [vmem:[#allocation3 + $0x168] sm:$0xff]
        %v473 = vld [vmem:[#allocation3 + $0x170] sm:$0xff]
        %v474 = vld [vmem:[#allocation3 + $0x178] sm:$0xff]
        %v475 = vld [vmem:[#allocation3 + $0x180] sm:$0xff]
        %v476 = vld [vmem:[#allocation3 + $0x188] sm:$0xff]
        %v477 = vld [vmem:[#allocation3 + $0x190] sm:$0xff]
        %v478 = vld [vmem:[#allocation3 + $0x198] sm:$0xff]
        %v479 = vld [vmem:[#allocation3 + $0x1a0] sm:$0xff]
        %v480 = vld [vmem:[#allocation3 + $0x1a8] sm:$0xff]
        %v481 = vld [vmem:[#allocation3 + $0x1b0] sm:$0xff]
        %v482 = vld [vmem:[#allocation3 + $0x1b8] sm:$0xff]
        %v483 = vld [vmem:[#allocation3 + $0x1c0] sm:$0xff]
        %v484 = vld [vmem:[#allocation3 + $0x1c8] sm:$0xff]
        %v485 = vld [vmem:[#allocation3 + $0x1d0] sm:$0xff]
        %v486 = vld [vmem:[#allocation3 + $0x1d8] sm:$0xff]
        %v487 = vld [vmem:[#allocation3 + $0x1e0] sm:$0xff]
        %v488 = vld [vmem:[#allocation3 + $0x1e8] sm:$0xff]
        %v489 = vld [vmem:[#allocation3 + $0x1f0] sm:$0xff]
        %v490 = vld [vmem:[#allocation3 + $0x1f8] sm:$0xff]
        %v491 = vld [vmem:[#allocation3 + $0x200] sm:$0xff]
        %v492 = vld [vmem:[#allocation3 + $0x208] sm:$0xff]
        %v493 = vld [vmem:[#allocation3 + $0x210] sm:$0xff]
        %v494 = vld [vmem:[#allocation3 + $0x218] sm:$0xff]
        %v495 = vld [vmem:[#allocation3 + $0x220] sm:$0xff]
        %v496 = vld [vmem:[#allocation3 + $0x228] sm:$0xff]
        %v497 = vld [vmem:[#allocation3 + $0x230] sm:$0xff]
        %v498 = vld [vmem:[#allocation3 + $0x238] sm:$0xff]
        %v499 = vld [vmem:[#allocation3 + $0x240] sm:$0xff]
        %v500 = vld [vmem:[#allocation3 + $0x248] sm:$0xff]
        %v501 = vld [vmem:[#allocation3 + $0x250] sm:$0xff]
        %v502 = vld [vmem:[#allocation3 + $0x258] sm:$0xff]
        %v503 = vld [vmem:[#allocation3 + $0x260] sm:$0xff]
        %v504 = vld [vmem:[#allocation3 + $0x268] sm:$0xff]
        %v505 = vld [vmem:[#allocation3 + $0x270] sm:$0xff]
        %v506 = vld [vmem:[#allocation3 + $0x278] sm:$0xff]
        %v507 = vld [vmem:[#allocation3 + $0x280] sm:$0xff]
        %v508 = vld [vmem:[#allocation3 + $0x288] sm:$0xff]
        %v509 = vld [vmem:[#allocation3 + $0x290] sm:$0xff]
        %v510 = vld [vmem:[#allocation3 + $0x298] sm:$0xff]
        %v511 = vld [vmem:[#allocation3 + $0x2a0] sm:$0xff]
        %v512 = vld [vmem:[#allocation3 + $0x2a8] sm:$0xff]
        %v513 = vld [vmem:[#allocation3 + $0x2b0] sm:$0xff]
        %v514 = vld [vmem:[#allocation3 + $0x2b8] sm:$0xff]
        %v515 = vld [vmem:[#allocation3 + $0x2c0] sm:$0xff]
        %v516 = vld [vmem:[#allocation3 + $0x2c8] sm:$0xff]
        %v517 = vld [vmem:[#allocation3 + $0x2d0] sm:$0xff]
        %v518 = vld [vmem:[#allocation3 + $0x2d8] sm:$0xff]
        %v519 = vld [vmem:[#allocation3 + $0x2e0] sm:$0xff]
        %v520 = vld [vmem:[#allocation3 + $0x2e8] sm:$0xff]
        %v521 = vld [vmem:[#allocation3 + $0x2f0] sm:$0xff]
        %v522 = vld [vmem:[#allocation3 + $0x2f8] sm:$0xff]
        %v523 = vld [vmem:[#allocation3 + $0x300] sm:$0xff]
        %v524 = vld [vmem:[#allocation3 + $0x308] sm:$0xff]
        %v525 = vld [vmem:[#allocation3 + $0x310] sm:$0xff]
        %v526 = vld [vmem:[#allocation3 + $0x318] sm:$0xff]
        %v527 = vld [vmem:[#allocation3 + $0x320] sm:$0xff]
        %v528 = vld [vmem:[#allocation3 + $0x328] sm:$0xff]
        %v529 = vld [vmem:[#allocation3 + $0x330] sm:$0xff]
        %v530 = vld [vmem:[#allocation3 + $0x338] sm:$0xff]
        %v531 = vld [vmem:[#allocation3 + $0x340] sm:$0xff]
        %v532 = vld [vmem:[#allocation3 + $0x348] sm:$0xff]
        %v533 = vld [vmem:[#allocation3 + $0x350] sm:$0xff]
        %v534 = vld [vmem:[#allocation3 + $0x358] sm:$0xff]
        %v535 = vld [vmem:[#allocation3 + $0x360] sm:$0xff]
        %v536 = vld [vmem:[#allocation3 + $0x368] sm:$0xff]
        %v537 = vld [vmem:[#allocation3 + $0x370] sm:$0xff]
        %v538 = vld [vmem:[#allocation3 + $0x378] sm:$0xff]
        %v539 = vld [vmem:[#allocation3 + $0x380] sm:$0xff]
        %v540 = vld [vmem:[#allocation3 + $0x388] sm:$0xff]
        %v541 = vld [vmem:[#allocation3 + $0x390] sm:$0xff]
        %v542 = vld [vmem:[#allocation3 + $0x398] sm:$0xff]
        %v543 = vld [vmem:[#allocation3 + $0x3a0] sm:$0xff]
        %v544 = vld [vmem:[#allocation3 + $0x3a8] sm:$0xff]
        %v545 = vld [vmem:[#allocation3 + $0x3b0] sm:$0xff]
        %v546 = vld [vmem:[#allocation3 + $0x3b8] sm:$0xff]
        %v547 = vld [vmem:[#allocation3 + $0x3c0] sm:$0xff]
        %v548 = vld [vmem:[#allocation3 + $0x3c8] sm:$0xff]
        %v549 = vld [vmem:[#allocation3 + $0x3d0] sm:$0xff]
        %v550 = vld [vmem:[#allocation3 + $0x3d8] sm:$0xff]
        %v551 = vld [vmem:[#allocation3 + $0x3e0] sm:$0xff]
        %v552 = vld [vmem:[#allocation3 + $0x3e8] sm:$0xff]
        %v553 = vld [vmem:[#allocation3 + $0x3f0] sm:$0xff]
        %v554 = vld [vmem:[#allocation3 + $0x3f8] sm:$0xff]
        %v555 = vld [vmem:[#allocation3 + $0x400] sm:$0xff]
        %v556 = vld [vmem:[#allocation3 + $0x408] sm:$0xff]
        %v557 = vld [vmem:[#allocation3 + $0x410] sm:$0xff]
        %v558 = vld [vmem:[#allocation3 + $0x418] sm:$0xff]
        %v559 = vld [vmem:[#allocation3 + $0x420] sm:$0xff]
        %v560 = vld [vmem:[#allocation3 + $0x428] sm:$0xff]
        %v561 = vld [vmem:[#allocation3 + $0x430] sm:$0xff]
        %v562 = vld [vmem:[#allocation3 + $0x438] sm:$0xff]
        %v563 = vld [vmem:[#allocation3 + $0x440] sm:$0xff]
        %v564 = vld [vmem:[#allocation3 + $0x448] sm:$0xff]
        %v565 = vld [vmem:[#allocation3 + $0x450] sm:$0xff]
        %v566 = vld [vmem:[#allocation3 + $0x458] sm:$0xff]
        %v567 = vld [vmem:[#allocation3 + $0x460] sm:$0xff]
        %v568 = vld [vmem:[#allocation3 + $0x468] sm:$0xff]
        %v569 = vld [vmem:[#allocation3 + $0x470] sm:$0xff]
        %v570 = vld [vmem:[#allocation3 + $0x478] sm:$0xff]
        %v571 = vld [vmem:[#allocation3 + $0x480] sm:$0xff]
        %v572 = vld [vmem:[#allocation3 + $0x488] sm:$0xff]
        %v573 = vld [vmem:[#allocation3 + $0x490] sm:$0xff]
        %v574 = vld [vmem:[#allocation3 + $0x498] sm:$0xff]
        %v575 = vld [vmem:[#allocation3 + $0x4a0] sm:$0xff]
        %v576 = vld [vmem:[#allocation3 + $0x4a8] sm:$0xff]
        %v577 = vld [vmem:[#allocation3 + $0x4b0] sm:$0xff]
        %v578 = vld [vmem:[#allocation3 + $0x4b8] sm:$0xff]
        %v579 = vld [vmem:[#allocation3 + $0x4c0] sm:$0xff]
        %v580 = vld [vmem:[#allocation3 + $0x4c8] sm:$0xff]
        %v581 = vld [vmem:[#allocation3 + $0x4d0] sm:$0xff]
        %v582 = vld [vmem:[#allocation3 + $0x4d8] sm:$0xff]
        %v583 = vld [vmem:[#allocation3 + $0x4e0] sm:$0xff]
        %v584 = vld [vmem:[#allocation3 + $0x4e8] sm:$0xff]
        %v585 = vld [vmem:[#allocation3 + $0x4f0] sm:$0xff]
        %v586 = vld [vmem:[#allocation3 + $0x4f8] sm:$0xff]
        %v587 = vld [vmem:[#allocation3 + $0x500] sm:$0xff]
        %v588 = vld [vmem:[#allocation3 + $0x508] sm:$0xff]
        %v589 = vld [vmem:[#allocation3 + $0x510] sm:$0xff]
        %v590 = vld [vmem:[#allocation3 + $0x518] sm:$0xff]
        %v591 = vld [vmem:[#allocation3 + $0x520] sm:$0xff]
        %v592 = vld [vmem:[#allocation3 + $0x528] sm:$0xff]
        %v593 = vld [vmem:[#allocation3 + $0x530] sm:$0xff]
        %v594 = vld [vmem:[#allocation3 + $0x538] sm:$0xff]
        %v595 = vld [vmem:[#allocation3 + $0x540] sm:$0xff]
        %v596 = vld [vmem:[#allocation3 + $0x548] sm:$0xff]
        %v597 = vld [vmem:[#allocation3 + $0x550] sm:$0xff]
        %v598 = vld [vmem:[#allocation3 + $0x558] sm:$0xff]
        %v599 = vld [vmem:[#allocation3 + $0x560] sm:$0xff]
        %v600 = vld [vmem:[#allocation3 + $0x568] sm:$0xff]
        %v601 = vld [vmem:[#allocation3 + $0x570] sm:$0xff]
        %v602 = vld [vmem:[#allocation3 + $0x578] sm:$0xff]
        %v603 = vld [vmem:[#allocation3 + $0x580] sm:$0xff]
        %v604 = vld [vmem:[#allocation3 + $0x588] sm:$0xff]
        %v605 = vld [vmem:[#allocation3 + $0x590] sm:$0xff]
        %v606 = vld [vmem:[#allocation3 + $0x598] sm:$0xff]
        %v607 = vld [vmem:[#allocation3 + $0x5a0] sm:$0xff]
        %v608 = vld [vmem:[#allocation3 + $0x5a8] sm:$0xff]
        %v609 = vld [vmem:[#allocation3 + $0x5b0] sm:$0xff]
        %v610 = vld [vmem:[#allocation3 + $0x5b8] sm:$0xff]
        %v611 = vld [vmem:[#allocation3 + $0x5c0] sm:$0xff]
        %v612 = vld [vmem:[#allocation3 + $0x5c8] sm:$0xff]
        %v613 = vld [vmem:[#allocation3 + $0x5d0] sm:$0xff]
        %v614 = vld [vmem:[#allocation3 + $0x5d8] sm:$0xff]
        %v615 = vld [vmem:[#allocation3 + $0x5e0] sm:$0xff]
        %v616 = vld [vmem:[#allocation3 + $0x5e8] sm:$0xff]
        %v617 = vld [vmem:[#allocation3 + $0x5f0] sm:$0xff]
        %v618 = vld [vmem:[#allocation3 + $0x5f8] sm:$0xff]
        %v619 = vld [vmem:[#allocation3 + $0x600] sm:$0xff]
        %v620 = vld [vmem:[#allocation3 + $0x608] sm:$0xff]
        %v621 = vld [vmem:[#allocation3 + $0x610] sm:$0xff]
        %v622 = vld [vmem:[#allocation3 + $0x618] sm:$0xff]
        %v623 = vld [vmem:[#allocation3 + $0x620] sm:$0xff]
        %v624 = vld [vmem:[#allocation3 + $0x628] sm:$0xff]
        %v625 = vld [vmem:[#allocation3 + $0x630] sm:$0xff]
        %v626 = vld [vmem:[#allocation3 + $0x638] sm:$0xff]
        %v627 = vld [vmem:[#allocation3 + $0x640] sm:$0xff]
        %v628 = vld [vmem:[#allocation3 + $0x648] sm:$0xff]
        %v629 = vld [vmem:[#allocation3 + $0x650] sm:$0xff]
        %v630 = vld [vmem:[#allocation3 + $0x658] sm:$0xff]
        %v631 = vld [vmem:[#allocation3 + $0x660] sm:$0xff]
        %v632 = vld [vmem:[#allocation3 + $0x668] sm:$0xff]
        %v633 = vld [vmem:[#allocation3 + $0x670] sm:$0xff]
        %v634 = vld [vmem:[#allocation3 + $0x678] sm:$0xff]
        %v635 = vld [vmem:[#allocation3 + $0x680] sm:$0xff]
        %v636 = vld [vmem:[#allocation3 + $0x688] sm:$0xff]
        %v637 = vld [vmem:[#allocation3 + $0x690] sm:$0xff]
        %v638 = vld [vmem:[#allocation3 + $0x698] sm:$0xff]
        %v639 = vld [vmem:[#allocation3 + $0x6a0] sm:$0xff]
        %v640 = vld [vmem:[#allocation3 + $0x6a8] sm:$0xff]
        %v641 = vld [vmem:[#allocation3 + $0x6b0] sm:$0xff]
        %v642 = vld [vmem:[#allocation3 + $0x6b8] sm:$0xff]
        %v643 = vld [vmem:[#allocation3 + $0x6c0] sm:$0xff]
        %v644 = vld [vmem:[#allocation3 + $0x6c8] sm:$0xff]
        %v645 = vld [vmem:[#allocation3 + $0x6d0] sm:$0xff]
        %v646 = vld [vmem:[#allocation3 + $0x6d8] sm:$0xff]
        %v647 = vld [vmem:[#allocation3 + $0x6e0] sm:$0xff]
        %v648 = vld [vmem:[#allocation3 + $0x6e8] sm:$0xff]
        %v649 = vld [vmem:[#allocation3 + $0x6f0] sm:$0xff]
        %v650 = vld [vmem:[#allocation3 + $0x6f8] sm:$0xff]
        %v651 = vld [vmem:[#allocation3 + $0x700] sm:$0xff]
        %v652 = vld [vmem:[#allocation3 + $0x708] sm:$0xff]
        %v653 = vld [vmem:[#allocation3 + $0x710] sm:$0xff]
        %v654 = vld [vmem:[#allocation3 + $0x718] sm:$0xff]
        %v655 = vld [vmem:[#allocation3 + $0x720] sm:$0xff]
        %v656 = vld [vmem:[#allocation3 + $0x728] sm:$0xff]
        %v657 = vld [vmem:[#allocation3 + $0x730] sm:$0xff]
        %v658 = vld [vmem:[#allocation3 + $0x738] sm:$0xff]
        %v659 = vld [vmem:[#allocation3 + $0x740] sm:$0xff]
        %v660 = vld [vmem:[#allocation3 + $0x748] sm:$0xff]
        %v661 = vld [vmem:[#allocation3 + $0x750] sm:$0xff]
        %v662 = vld [vmem:[#allocation3 + $0x758] sm:$0xff]
        %v663 = vld [vmem:[#allocation3 + $0x760] sm:$0xff]
        %v664 = vld [vmem:[#allocation3 + $0x768] sm:$0xff]
        %v665 = vld [vmem:[#allocation3 + $0x770] sm:$0xff]
        %v666 = vld [vmem:[#allocation3 + $0x778] sm:$0xff]
        %v667 = vld [vmem:[#allocation3 + $0x780] sm:$0xff]
        %v668 = vld [vmem:[#allocation3 + $0x788] sm:$0xff]
        %v669 = vld [vmem:[#allocation3 + $0x790] sm:$0xff]
        %v670 = vld [vmem:[#allocation3 + $0x798] sm:$0xff]
        %v671 = vld [vmem:[#allocation3 + $0x7a0] sm:$0xff]
        %v672 = vld [vmem:[#allocation3 + $0x7a8] sm:$0xff]
        %v673 = vld [vmem:[#allocation3 + $0x7b0] sm:$0xff]
        %v674 = vld [vmem:[#allocation3 + $0x7b8] sm:$0xff]
        %v675 = vld [vmem:[#allocation3 + $0x7c0] sm:$0xff]
        %v676 = vld [vmem:[#allocation3 + $0x7c8] sm:$0xff]
        %v677 = vld [vmem:[#allocation3 + $0x7d0] sm:$0xff]
        %v678 = vld [vmem:[#allocation3 + $0x7d8] sm:$0xff]
        %v679 = vld [vmem:[#allocation3 + $0x7e0] sm:$0xff]
        %v680 = vld [vmem:[#allocation3 + $0x7e8] sm:$0xff]
        %v681 = vld [vmem:[#allocation3 + $0x7f0] sm:$0xff]
        %v682 = vld [vmem:[#allocation3 + $0x7f8] sm:$0xff]
        %v683 = vld [vmem:[#allocation3 + $0x800] sm:$0xff]
        %v684 = vld [vmem:[#allocation3 + $0x808] sm:$0xff]
        %v685 = vld [vmem:[#allocation3 + $0x810] sm:$0xff]
        %v686 = vld [vmem:[#allocation3 + $0x818] sm:$0xff]
        %v687 = vld [vmem:[#allocation3 + $0x820] sm:$0xff]
        %v688 = vld [vmem:[#allocation3 + $0x828] sm:$0xff]
        %v689 = vld [vmem:[#allocation3 + $0x830] sm:$0xff]
        %v690 = vld [vmem:[#allocation3 + $0x838] sm:$0xff]
        %v691 = vld [vmem:[#allocation3 + $0x840] sm:$0xff]
        %v692 = vld [vmem:[#allocation3 + $0x848] sm:$0xff]
        %v693 = vld [vmem:[#allocation3 + $0x850] sm:$0xff]
        %v694 = vld [vmem:[#allocation3 + $0x858] sm:$0xff]
        %v695 = vld [vmem:[#allocation3 + $0x860] sm:$0xff]
        %v696 = vld [vmem:[#allocation3 + $0x868] sm:$0xff]
        %v697 = vld [vmem:[#allocation3 + $0x870] sm:$0xff]
        %v698 = vld [vmem:[#allocation3 + $0x878] sm:$0xff]
        %v699 = vld [vmem:[#allocation3 + $0x880] sm:$0xff]
        %v700 = vld [vmem:[#allocation3 + $0x888] sm:$0xff]
        %v701 = vld [vmem:[#allocation3 + $0x890] sm:$0xff]
        %v702 = vld [vmem:[#allocation3 + $0x898] sm:$0xff]
        %v703 = vld [vmem:[#allocation3 + $0x8a0] sm:$0xff]
        %v704 = vld [vmem:[#allocation3 + $0x8a8] sm:$0xff]
        %v705 = vld [vmem:[#allocation3 + $0x8b0] sm:$0xff]
        %v706 = vld [vmem:[#allocation3 + $0x8b8] sm:$0xff]
        %v707 = vld [vmem:[#allocation3 + $0x8c0] sm:$0xff]
        %v708 = vld [vmem:[#allocation3 + $0x8c8] sm:$0xff]
        %v709 = vld [vmem:[#allocation3 + $0x8d0] sm:$0xff]
        %v710 = vld [vmem:[#allocation3 + $0x8d8] sm:$0xff]
        %v711 = vld [vmem:[#allocation3 + $0x8e0] sm:$0xff]
        %v712 = vld [vmem:[#allocation3 + $0x8e8] sm:$0xff]
        %v713 = vld [vmem:[#allocation3 + $0x8f0] sm:$0xff]
        %v714 = vld [vmem:[#allocation3 + $0x8f8] sm:$0xff]
        %v715 = vld [vmem:[#allocation3 + $0x900] sm:$0xff]
        %v716 = vld [vmem:[#allocation3 + $0x908] sm:$0xff]
        %v717 = vld [vmem:[#allocation3 + $0x910] sm:$0xff]
        %v718 = vld [vmem:[#allocation3 + $0x918] sm:$0xff]
        %v719 = vld [vmem:[#allocation3 + $0x920] sm:$0xff]
        %v720 = vld [vmem:[#allocation3 + $0x928] sm:$0xff]
        %v721 = vld [vmem:[#allocation3 + $0x930] sm:$0xff]
        %v722 = vld [vmem:[#allocation3 + $0x938] sm:$0xff]
        %v723 = vld [vmem:[#allocation3 + $0x940] sm:$0xff]
        %v724 = vld [vmem:[#allocation3 + $0x948] sm:$0xff]
        %v725 = vld [vmem:[#allocation3 + $0x950] sm:$0xff]
        %v726 = vld [vmem:[#allocation3 + $0x958] sm:$0xff]
        %v727 = vld [vmem:[#allocation3 + $0x960] sm:$0xff]
        %v728 = vld [vmem:[#allocation3 + $0x968] sm:$0xff]
        %v729 = vld [vmem:[#allocation3 + $0x970] sm:$0xff]
        %v730 = vld [vmem:[#allocation3 + $0x978] sm:$0xff]
        %v731 = vld [vmem:[#allocation3 + $0x980] sm:$0xff]
        %v732 = vld [vmem:[#allocation3 + $0x988] sm:$0xff]
        %v733 = vld [vmem:[#allocation3 + $0x990] sm:$0xff]
        %v734 = vld [vmem:[#allocation3 + $0x998] sm:$0xff]
        %v735 = vld [vmem:[#allocation3 + $0x9a0] sm:$0xff]
        %v736 = vld [vmem:[#allocation3 + $0x9a8] sm:$0xff]
        %v737 = vld [vmem:[#allocation3 + $0x9b0] sm:$0xff]
        %v738 = vld [vmem:[#allocation3 + $0x9b8] sm:$0xff]
        %v739 = vld [vmem:[#allocation3 + $0x9c0] sm:$0xff]
        %v740 = vld [vmem:[#allocation3 + $0x9c8] sm:$0xff]
        %v741 = vld [vmem:[#allocation3 + $0x9d0] sm:$0xff]
        %v742 = vld [vmem:[#allocation3 + $0x9d8] sm:$0xff]
        %v743 = vld [vmem:[#allocation3 + $0x9e0] sm:$0xff]
        %v744 = vld [vmem:[#allocation3 + $0x9e8] sm:$0xff]
        %v745 = vld [vmem:[#allocation3 + $0x9f0] sm:$0xff]
        %v746 = vld [vmem:[#allocation3 + $0x9f8] sm:$0xff]
        %v747 = vld [vmem:[#allocation3 + $0xa00] sm:$0xff]
        %v748 = vld [vmem:[#allocation3 + $0xa08] sm:$0xff]
        %v749 = vld [vmem:[#allocation3 + $0xa10] sm:$0xff]
        %v750 = vld [vmem:[#allocation3 + $0xa18] sm:$0xff]
        %v751 = vld [vmem:[#allocation3 + $0xa20] sm:$0xff]
        %v752 = vld [vmem:[#allocation3 + $0xa28] sm:$0xff]
        %v753 = vld [vmem:[#allocation3 + $0xa30] sm:$0xff]
        %v754 = vld [vmem:[#allocation3 + $0xa38] sm:$0xff]
        %v755 = vld [vmem:[#allocation3 + $0xa40] sm:$0xff]
        %v756 = vld [vmem:[#allocation3 + $0xa48] sm:$0xff]
        %v757 = vld [vmem:[#allocation3 + $0xa50] sm:$0xff]
        %v758 = vld [vmem:[#allocation3 + $0xa58] sm:$0xff]
        %v759 = vld [vmem:[#allocation3 + $0xa60] sm:$0xff]
        %v760 = vld [vmem:[#allocation3 + $0xa68] sm:$0xff]
        %v761 = vld [vmem:[#allocation3 + $0xa70] sm:$0xff]
        %v762 = vld [vmem:[#allocation3 + $0xa78] sm:$0xff]
        %v763 = vld [vmem:[#allocation3 + $0xa80] sm:$0xff]
        %v764 = vld [vmem:[#allocation3 + $0xa88] sm:$0xff]
        %v765 = vld [vmem:[#allocation3 + $0xa90] sm:$0xff]
        %v766 = vld [vmem:[#allocation3 + $0xa98] sm:$0xff]
        %v767 = vld [vmem:[#allocation3 + $0xaa0] sm:$0xff]
        %v768 = vld [vmem:[#allocation3 + $0xaa8] sm:$0xff]
        %v769 = vld [vmem:[#allocation3 + $0xab0] sm:$0xff]
        %v770 = vld [vmem:[#allocation3 + $0xab8] sm:$0xff]
        %v771 = vld [vmem:[#allocation3 + $0xac0] sm:$0xff]
        %v772 = vld [vmem:[#allocation3 + $0xac8] sm:$0xff]
        %v773 = vld [vmem:[#allocation3 + $0xad0] sm:$0xff]
        %v774 = vld [vmem:[#allocation3 + $0xad8] sm:$0xff]
        %v775 = vld [vmem:[#allocation3 + $0xae0] sm:$0xff]
        %v776 = vld [vmem:[#allocation3 + $0xae8] sm:$0xff]
        %v777 = vld [vmem:[#allocation3 + $0xaf0] sm:$0xff]
        %v778 = vld [vmem:[#allocation3 + $0xaf8] sm:$0xff]
        %v779 = vld [vmem:[#allocation3 + $0xb00] sm:$0xff]
        %v780 = vld [vmem:[#allocation3 + $0xb08] sm:$0xff]
        %v781 = vld [vmem:[#allocation3 + $0xb10] sm:$0xff]
        %v782 = vld [vmem:[#allocation3 + $0xb18] sm:$0xff]
        %v783 = vld [vmem:[#allocation3 + $0xb20] sm:$0xff]
        %v784 = vld [vmem:[#allocation3 + $0xb28] sm:$0xff]
        %v785 = vld [vmem:[#allocation3 + $0xb30] sm:$0xff]
        %v786 = vld [vmem:[#allocation3 + $0xb38] sm:$0xff]
        %v787 = vld [vmem:[#allocation3 + $0xb40] sm:$0xff]
        %v788 = vld [vmem:[#allocation3 + $0xb48] sm:$0xff]
        %v789 = vld [vmem:[#allocation3 + $0xb50] sm:$0xff]
        %v790 = vld [vmem:[#allocation3 + $0xb58] sm:$0xff]
        %v791 = vld [vmem:[#allocation3 + $0xb60] sm:$0xff]
        %v792 = vld [vmem:[#allocation3 + $0xb68] sm:$0xff]
        %v793 = vld [vmem:[#allocation3 + $0xb70] sm:$0xff]
        %v794 = vld [vmem:[#allocation3 + $0xb78] sm:$0xff]
        %v795 = vld [vmem:[#allocation3 + $0xb80] sm:$0xff]
        %v796 = vld [vmem:[#allocation3 + $0xb88] sm:$0xff]
        %v797 = vld [vmem:[#allocation3 + $0xb90] sm:$0xff]
        %v798 = vld [vmem:[#allocation3 + $0xb98] sm:$0xff]
        %v799 = vld [vmem:[#allocation3 + $0xba0] sm:$0xff]
        %v800 = vld [vmem:[#allocation3 + $0xba8] sm:$0xff]
        %v801 = vld [vmem:[#allocation3 + $0xbb0] sm:$0xff]
        %v802 = vld [vmem:[#allocation3 + $0xbb8] sm:$0xff]
        %v803 = vld [vmem:[#allocation3 + $0xbc0] sm:$0xff]
        %v804 = vld [vmem:[#allocation3 + $0xbc8] sm:$0xff]
        %v805 = vld [vmem:[#allocation3 + $0xbd0] sm:$0xff]
        %v806 = vld [vmem:[#allocation3 + $0xbd8] sm:$0xff]
        %v807 = vld [vmem:[#allocation3 + $0xbe0] sm:$0xff]
        %v808 = vld [vmem:[#allocation3 + $0xbe8] sm:$0xff]
        %v809 = vld [vmem:[#allocation3 + $0xbf0] sm:$0xff]
        %v810 = vld [vmem:[#allocation3 + $0xbf8] sm:$0xff]
        %v811 = vld [vmem:[#allocation3 + $0xc00] sm:$0xff]
        %v812 = vld [vmem:[#allocation3 + $0xc08] sm:$0xff]
        %v813 = vld [vmem:[#allocation3 + $0xc10] sm:$0xff]
        %v814 = vld [vmem:[#allocation3 + $0xc18] sm:$0xff]
        %v815 = vld [vmem:[#allocation3 + $0xc20] sm:$0xff]
        %v816 = vld [vmem:[#allocation3 + $0xc28] sm:$0xff]
        %v817 = vld [vmem:[#allocation3 + $0xc30] sm:$0xff]
        %v818 = vld [vmem:[#allocation3 + $0xc38] sm:$0xff]
        %v819 = vld [vmem:[#allocation3 + $0xc40] sm:$0xff]
        %v820 = vld [vmem:[#allocation3 + $0xc48] sm:$0xff]
        %v821 = vld [vmem:[#allocation3 + $0xc50] sm:$0xff]
        %v822 = vld [vmem:[#allocation3 + $0xc58] sm:$0xff]
        %v823 = vld [vmem:[#allocation3 + $0xc60] sm:$0xff]
        %v824 = vld [vmem:[#allocation3 + $0xc68] sm:$0xff]
        %v825 = vld [vmem:[#allocation3 + $0xc70] sm:$0xff]
        %v826 = vld [vmem:[#allocation3 + $0xc78] sm:$0xff]
        %v827 = vld [vmem:[#allocation3 + $0xc80] sm:$0xff]
        %v828 = vld [vmem:[#allocation3 + $0xc88] sm:$0xff]
        %v829 = vld [vmem:[#allocation3 + $0xc90] sm:$0xff]
        %v830 = vld [vmem:[#allocation3 + $0xc98] sm:$0xff]
        %v831 = vld [vmem:[#allocation3 + $0xca0] sm:$0xff]
        %v832 = vld [vmem:[#allocation3 + $0xca8] sm:$0xff]
        %v833 = vld [vmem:[#allocation3 + $0xcb0] sm:$0xff]
        %v834 = vld [vmem:[#allocation3 + $0xcb8] sm:$0xff]
        %v835 = vld [vmem:[#allocation3 + $0xcc0] sm:$0xff]
        %v836 = vld [vmem:[#allocation3 + $0xcc8] sm:$0xff]
        %v837 = vld [vmem:[#allocation3 + $0xcd0] sm:$0xff]
        %v838 = vld [vmem:[#allocation3 + $0xcd8] sm:$0xff]
        %v839 = vld [vmem:[#allocation3 + $0xce0] sm:$0xff]
        %v840 = vld [vmem:[#allocation3 + $0xce8] sm:$0xff]
        %v841 = vld [vmem:[#allocation3 + $0xcf0] sm:$0xff]
        %v842 = vld [vmem:[#allocation3 + $0xcf8] sm:$0xff]
        %v843 = vld [vmem:[#allocation3 + $0xd00] sm:$0xff]
        %v844 = vld [vmem:[#allocation3 + $0xd08] sm:$0xff]
        %v845 = vld [vmem:[#allocation3 + $0xd10] sm:$0xff]
        %v846 = vld [vmem:[#allocation3 + $0xd18] sm:$0xff]
        %v847 = vld [vmem:[#allocation3 + $0xd20] sm:$0xff]
        %v848 = vld [vmem:[#allocation3 + $0xd28] sm:$0xff]
        %v849 = vld [vmem:[#allocation3 + $0xd30] sm:$0xff]
        %v850 = vld [vmem:[#allocation3 + $0xd38] sm:$0xff]
        %v851 = vld [vmem:[#allocation3 + $0xd40] sm:$0xff]
        %v852 = vld [vmem:[#allocation3 + $0xd48] sm:$0xff]
        %v853 = vld [vmem:[#allocation3 + $0xd50] sm:$0xff]
        %v854 = vld [vmem:[#allocation3 + $0xd58] sm:$0xff]
        %v855 = vld [vmem:[#allocation3 + $0xd60] sm:$0xff]
        %v856 = vld [vmem:[#allocation3 + $0xd68] sm:$0xff]
        %v857 = vld [vmem:[#allocation3 + $0xd70] sm:$0xff]
        %v858 = vld [vmem:[#allocation3 + $0xd78] sm:$0xff]
        %v859 = vld [vmem:[#allocation3 + $0xd80] sm:$0xff]
        %v860 = vld [vmem:[#allocation3 + $0xd88] sm:$0xff]
        %v861 = vld [vmem:[#allocation3 + $0xd90] sm:$0xff]
        %v862 = vld [vmem:[#allocation3 + $0xd98] sm:$0xff]
        %v863 = vld [vmem:[#allocation3 + $0xda0] sm:$0xff]
        %v864 = vld [vmem:[#allocation3 + $0xda8] sm:$0xff]
        %v865 = vld [vmem:[#allocation3 + $0xdb0] sm:$0xff]
        %v866 = vld [vmem:[#allocation3 + $0xdb8] sm:$0xff]
        %v867 = vld [vmem:[#allocation3 + $0xdc0] sm:$0xff]
        %v868 = vld [vmem:[#allocation3 + $0xdc8] sm:$0xff]
        %v869 = vld [vmem:[#allocation3 + $0xdd0] sm:$0xff]
        %v870 = vld [vmem:[#allocation3 + $0xdd8] sm:$0xff]
        %v871 = vld [vmem:[#allocation3 + $0xde0] sm:$0xff]
        %v872 = vld [vmem:[#allocation3 + $0xde8] sm:$0xff]
        %v873 = vld [vmem:[#allocation3 + $0xdf0] sm:$0xff]
        %v874 = vld [vmem:[#allocation3 + $0xdf8] sm:$0xff]
        %v875 = vld [vmem:[#allocation3 + $0xe00] sm:$0xff]
        %v876 = vld [vmem:[#allocation3 + $0xe08] sm:$0xff]
        %v877 = vld [vmem:[#allocation3 + $0xe10] sm:$0xff]
        %v878 = vld [vmem:[#allocation3 + $0xe18] sm:$0xff]
        %v879 = vld [vmem:[#allocation3 + $0xe20] sm:$0xff]
        %v880 = vld [vmem:[#allocation3 + $0xe28] sm:$0xff]
        %v881 = vld [vmem:[#allocation3 + $0xe30] sm:$0xff]
        %v882 = vld [vmem:[#allocation3 + $0xe38] sm:$0xff]
        %v883 = vld [vmem:[#allocation3 + $0xe40] sm:$0xff]
        %v884 = vld [vmem:[#allocation3 + $0xe48] sm:$0xff]
        %v885 = vld [vmem:[#allocation3 + $0xe50] sm:$0xff]
        %v886 = vld [vmem:[#allocation3 + $0xe58] sm:$0xff]
        %v887 = vld [vmem:[#allocation3 + $0xe60] sm:$0xff]
        %v888 = vld [vmem:[#allocation3 + $0xe68] sm:$0xff]
        %v889 = vld [vmem:[#allocation3 + $0xe70] sm:$0xff]
        %v890 = vld [vmem:[#allocation3 + $0xe78] sm:$0xff]
        %v891 = vld [vmem:[#allocation3 + $0xe80] sm:$0xff]
        %v892 = vld [vmem:[#allocation3 + $0xe88] sm:$0xff]
        %v893 = vld [vmem:[#allocation3 + $0xe90] sm:$0xff]
        %v894 = vld [vmem:[#allocation3 + $0xe98] sm:$0xff]
        %v895 = vld [vmem:[#allocation3 + $0xea0] sm:$0xff]
        %v896 = vld [vmem:[#allocation3 + $0xea8] sm:$0xff]
        %v897 = vld [vmem:[#allocation3 + $0xeb0] sm:$0xff]
        %v898 = vld [vmem:[#allocation3 + $0xeb8] sm:$0xff]
        %v899 = vld [vmem:[#allocation3 + $0xec0] sm:$0xff]
        %v900 = vld [vmem:[#allocation3 + $0xec8] sm:$0xff]
        %v901 = vld [vmem:[#allocation3 + $0xed0] sm:$0xff]
        %v902 = vld [vmem:[#allocation3 + $0xed8] sm:$0xff]
        %v903 = vld [vmem:[#allocation3 + $0xee0] sm:$0xff]
        %v904 = vld [vmem:[#allocation3 + $0xee8] sm:$0xff]
        %v905 = vld [vmem:[#allocation3 + $0xef0] sm:$0xff]
        %v906 = vld [vmem:[#allocation3 + $0xef8] sm:$0xff]
        %v907 = vld [vmem:[#allocation3 + $0xf00] sm:$0xff]
        %v908 = vld [vmem:[#allocation3 + $0xf08] sm:$0xff]
        %v909 = vld [vmem:[#allocation3 + $0xf10] sm:$0xff]
        %v910 = vld [vmem:[#allocation3 + $0xf18] sm:$0xff]
        %v911 = vld [vmem:[#allocation3 + $0xf20] sm:$0xff]
        %v912 = vld [vmem:[#allocation3 + $0xf28] sm:$0xff]
        %v913 = vld [vmem:[#allocation3 + $0xf30] sm:$0xff]
        %v914 = vld [vmem:[#allocation3 + $0xf38] sm:$0xff]
        %v915 = vld [vmem:[#allocation3 + $0xf40] sm:$0xff]
        %v916 = vld [vmem:[#allocation3 + $0xf48] sm:$0xff]
        %v917 = vld [vmem:[#allocation3 + $0xf50] sm:$0xff]
        %v918 = vld [vmem:[#allocation3 + $0xf58] sm:$0xff]
        %v919 = vld [vmem:[#allocation3 + $0xf60] sm:$0xff]
        %v920 = vld [vmem:[#allocation3 + $0xf68] sm:$0xff]
        %v921 = vld [vmem:[#allocation3 + $0xf70] sm:$0xff]
        %v922 = vld [vmem:[#allocation3 + $0xf78] sm:$0xff]
        %v923 = vld [vmem:[#allocation3 + $0xf80] sm:$0xff]
        %v924 = vld [vmem:[#allocation3 + $0xf88] sm:$0xff]
        %v925 = vld [vmem:[#allocation3 + $0xf90] sm:$0xff]
        %v926 = vld [vmem:[#allocation3 + $0xf98] sm:$0xff]
        %v927 = vld [vmem:[#allocation3 + $0xfa0] sm:$0xff]
        %v928 = vld [vmem:[#allocation3 + $0xfa8] sm:$0xff]
        %v929 = vld [vmem:[#allocation3 + $0xfb0] sm:$0xff]
        %v930 = vld [vmem:[#allocation3 + $0xfb8] sm:$0xff]
        %v931 = vld [vmem:[#allocation3 + $0xfc0] sm:$0xff]
        %v932 = vld [vmem:[#allocation3 + $0xfc8] sm:$0xff]
        %v933 = vld [vmem:[#allocation3 + $0xfd0] sm:$0xff]
        %v934 = vld [vmem:[#allocation3 + $0xfd8] sm:$0xff]
        %v935 = vld [vmem:[#allocation3 + $0xfe0] sm:$0xff]
        %v936 = vld [vmem:[#allocation3 + $0xfe8] sm:$0xff]
        %v937 = vld [vmem:[#allocation3 + $0xff0] sm:$0xff]
        %v938 = vld [vmem:[#allocation3 + $0xff8] sm:$0xff]
        %v939 = vld [vmem:[#allocation5] sm:$0xf]
        %v941 = vlaneseq
        %v942 = vshrl.u32 %v941, 7
        %v943 = vsub.s32 0, %v942
        %v944 = vrot.slane %v939, %v943
        %v945 = vlaneseq
        %v946 = vshrl.u32 %v945, 7
        %v947 = vsub.s32 1, %v946
        %v948 = vrot.slane %v939, %v947
        %v949 = vlaneseq
        %v950 = vshrl.u32 %v949, 7
        %v951 = vsub.s32 2, %v950
        %v952 = vrot.slane %v939, %v951
        %v953 = vlaneseq
        %v954 = vshrl.u32 %v953, 7
        %v955 = vsub.s32 3, %v954
        %v956 = vrot.slane %v939, %v955
        %961 = vmatprep.subr.mxu0 %v428
        %962 = vmatpush1.msra.mxu0 %v427
        %963 = vmatprep.subr.mxu0 %v432
        %964 = vmatpush1.msra.mxu0 %v431
        %965 = vmatprep.subr.mxu0 %v436
        %966 = vmatpush1.msra.mxu0 %v435
        %967 = vmatprep.subr.mxu0 %v440
        %968 = vmatpush1.msra.mxu0 %v439
        %969 = vmatprep.subr.mxu0 %v444
        %970 = vmatpush1.msra.mxu0 %v443
        %971 = vmatprep.subr.mxu0 %v448
        %972 = vmatpush1.msra.mxu0 %v447
        %973 = vmatprep.subr.mxu0 %v452
        %974 = vmatpush1.msra.mxu0 %v451
        %975 = vmatprep.subr.mxu0 %v456
        %976 = vmatpush1.msra.mxu0 %v455
        %977 = vmatprep.subr.mxu0 %v460
        %978 = vmatpush1.msra.mxu0 %v459
        %979 = vmatprep.subr.mxu0 %v464
        %980 = vmatpush1.msra.mxu0 %v463
        %981 = vmatprep.subr.mxu0 %v468
        %982 = vmatpush1.msra.mxu0 %v467
        %983 = vmatprep.subr.mxu0 %v472
        %984 = vmatpush1.msra.mxu0 %v471
        %985 = vmatprep.subr.mxu0 %v476
        %986 = vmatpush1.msra.mxu0 %v475
        %987 = vmatprep.subr.mxu0 %v480
        %988 = vmatpush1.msra.mxu0 %v479
        %989 = vmatprep.subr.mxu0 %v484
        %990 = vmatpush1.msra.mxu0 %v483
        %991 = vmatprep.subr.mxu0 %v488
        %992 = vmatpush1.msra.mxu0 %v487
        %993 = vmatprep.subr.mxu0 %v492
        %994 = vmatpush1.msra.mxu0 %v491
        %995 = vmatprep.subr.mxu0 %v496
        %996 = vmatpush1.msra.mxu0 %v495
        %997 = vmatprep.subr.mxu0 %v500
        %998 = vmatpush1.msra.mxu0 %v499
        %999 = vmatprep.subr.mxu0 %v504
        %1000 = vmatpush1.msra.mxu0 %v503
        %1001 = vmatprep.subr.mxu0 %v508
        %1002 = vmatpush1.msra.mxu0 %v507
        %1003 = vmatprep.subr.mxu0 %v512
        %1004 = vmatpush1.msra.mxu0 %v511
        %1005 = vmatprep.subr.mxu0 %v516
        %1006 = vmatpush1.msra.mxu0 %v515
        %1007 = vmatprep.subr.mxu0 %v520
        %1008 = vmatpush1.msra.mxu0 %v519
        %1009 = vmatprep.subr.mxu0 %v524
        %1010 = vmatpush1.msra.mxu0 %v523
        %1011 = vmatprep.subr.mxu0 %v528
        %1012 = vmatpush1.msra.mxu0 %v527
        %1013 = vmatprep.subr.mxu0 %v532
        %1014 = vmatpush1.msra.mxu0 %v531
        %1015 = vmatprep.subr.mxu0 %v536
        %1016 = vmatpush1.msra.mxu0 %v535
        %1017 = vmatprep.subr.mxu0 %v540
        %1018 = vmatpush1.msra.mxu0 %v539
        %1019 = vmatprep.subr.mxu0 %v544
        %1020 = vmatpush1.msra.mxu0 %v543
        %1021 = vmatprep.subr.mxu0 %v548
        %1022 = vmatpush1.msra.mxu0 %v547
        %1023 = vmatprep.subr.mxu0 %v552
        %1024 = vmatpush1.msra.mxu0 %v551
        %1025 = vmatprep.mubr.f32.mxu0 %v412
        %1026 = vmatmul.mubr.f32.gmra.mrb[0].mxu0 %v411
        %v1027 = vpop.f32.mrb[0].mxu0
        %v1028 = vadd.f32 %v944, %v1027
        %v1029 = vpop.f32.mrb[0].mxu0
        %v1030 = vadd.f32 %v948, %v1029
        %1031 = vdwg.mxu0
        %1032 = vmatprep.subr.mxu0 %v556
        %1033 = vmatpush1.msra.mxu0 %v555
        %1034 = vmatprep.subr.mxu0 %v560
        %1035 = vmatpush1.msra.mxu0 %v559
        %1036 = vmatprep.subr.mxu0 %v564
        %1037 = vmatpush1.msra.mxu0 %v563
        %1038 = vmatprep.subr.mxu0 %v568
        %1039 = vmatpush1.msra.mxu0 %v567
        %1040 = vmatprep.subr.mxu0 %v572
        %1041 = vmatpush1.msra.mxu0 %v571
        %1042 = vmatprep.subr.mxu0 %v576
        %1043 = vmatpush1.msra.mxu0 %v575
        %1044 = vmatprep.subr.mxu0 %v580
        %1045 = vmatpush1.msra.mxu0 %v579
        %1046 = vmatprep.subr.mxu0 %v584
        %1047 = vmatpush1.msra.mxu0 %v583
        %1048 = vmatprep.subr.mxu0 %v588
        %1049 = vmatpush1.msra.mxu0 %v587
        %1050 = vmatprep.subr.mxu0 %v592
        %1051 = vmatpush1.msra.mxu0 %v591
        %1052 = vmatprep.subr.mxu0 %v596
        %1053 = vmatpush1.msra.mxu0 %v595
        %1054 = vmatprep.subr.mxu0 %v600
        %1055 = vmatpush1.msra.mxu0 %v599
        %1056 = vmatprep.subr.mxu0 %v604
        %1057 = vmatpush1.msra.mxu0 %v603
        %1058 = vmatprep.subr.mxu0 %v608
        %1059 = vmatpush1.msra.mxu0 %v607
        %1060 = vmatprep.subr.mxu0 %v612
        %1061 = vmatpush1.msra.mxu0 %v611
        %1062 = vmatprep.subr.mxu0 %v616
        %1063 = vmatpush1.msra.mxu0 %v615
        %1064 = vmatprep.subr.mxu0 %v620
        %1065 = vmatpush1.msra.mxu0 %v619
        %1066 = vmatprep.subr.mxu0 %v624
        %1067 = vmatpush1.msra.mxu0 %v623
        %1068 = vmatprep.subr.mxu0 %v628
        %1069 = vmatpush1.msra.mxu0 %v627
        %1070 = vmatprep.subr.mxu0 %v632
        %1071 = vmatpush1.msra.mxu0 %v631
        %1072 = vmatprep.subr.mxu0 %v636
        %1073 = vmatpush1.msra.mxu0 %v635
        %1074 = vmatprep.subr.mxu0 %v640
        %1075 = vmatpush1.msra.mxu0 %v639
        %1076 = vmatprep.subr.mxu0 %v644
        %1077 = vmatpush1.msra.mxu0 %v643
        %1078 = vmatprep.subr.mxu0 %v648
        %1079 = vmatpush1.msra.mxu0 %v647
        %1080 = vmatprep.subr.mxu0 %v652
        %1081 = vmatpush1.msra.mxu0 %v651
        %1082 = vmatprep.subr.mxu0 %v656
        %1083 = vmatpush1.msra.mxu0 %v655
        %1084 = vmatprep.subr.mxu0 %v660
        %1085 = vmatpush1.msra.mxu0 %v659
        %1086 = vmatprep.subr.mxu0 %v664
        %1087 = vmatpush1.msra.mxu0 %v663
        %1088 = vmatprep.subr.mxu0 %v668
        %1089 = vmatpush1.msra.mxu0 %v667
        %1090 = vmatprep.subr.mxu0 %v672
        %1091 = vmatpush1.msra.mxu0 %v671
        %1092 = vmatprep.subr.mxu0 %v676
        %1093 = vmatpush1.msra.mxu0 %v675
        %1094 = vmatprep.subr.mxu0 %v680
        %1095 = vmatpush1.msra.mxu0 %v679
        %1096 = vmatprep.mubr.f32.mxu0 %v414
        %1097 = vmatmul.mubr.f32.gmra.mrb[0].mxu0 %v413
        %v1098 = vpop.f32.mrb[0].mxu0
        %v1099 = vadd.f32 %v1028, %v1098
        %v1100 = vpop.f32.mrb[0].mxu0
        %v1101 = vadd.f32 %v1030, %v1100
        %1102 = vdwg.mxu0
        %1103 = vmatprep.subr.mxu0 %v684
        %1104 = vmatpush1.msra.mxu0 %v683
        %1105 = vmatprep.subr.mxu0 %v688
        %1106 = vmatpush1.msra.mxu0 %v687
        %1107 = vmatprep.subr.mxu0 %v692
        %1108 = vmatpush1.msra.mxu0 %v691
        %1109 = vmatprep.subr.mxu0 %v696
        %1110 = vmatpush1.msra.mxu0 %v695
        %1111 = vmatprep.subr.mxu0 %v700
        %1112 = vmatpush1.msra.mxu0 %v699
        %1113 = vmatprep.subr.mxu0 %v704
        %1114 = vmatpush1.msra.mxu0 %v703
        %1115 = vmatprep.subr.mxu0 %v708
        %1116 = vmatpush1.msra.mxu0 %v707
        %1117 = vmatprep.subr.mxu0 %v712
        %1118 = vmatpush1.msra.mxu0 %v711
        %1119 = vmatprep.subr.mxu0 %v716
        %1120 = vmatpush1.msra.mxu0 %v715
        %1121 = vmatprep.subr.mxu0 %v720
        %1122 = vmatpush1.msra.mxu0 %v719
        %1123 = vmatprep.subr.mxu0 %v724
        %1124 = vmatpush1.msra.mxu0 %v723
        %1125 = vmatprep.subr.mxu0 %v728
        %1126 = vmatpush1.msra.mxu0 %v727
        %1127 = vmatprep.subr.mxu0 %v732
        %1128 = vmatpush1.msra.mxu0 %v731
        %1129 = vmatprep.subr.mxu0 %v736
        %1130 = vmatpush1.msra.mxu0 %v735
        %1131 = vmatprep.subr.mxu0 %v740
        %1132 = vmatpush1.msra.mxu0 %v739
        %1133 = vmatprep.subr.mxu0 %v744
        %1134 = vmatpush1.msra.mxu0 %v743
        %1135 = vmatprep.subr.mxu0 %v748
        %1136 = vmatpush1.msra.mxu0 %v747
        %1137 = vmatprep.subr.mxu0 %v752
        %1138 = vmatpush1.msra.mxu0 %v751
        %1139 = vmatprep.subr.mxu0 %v756
        %1140 = vmatpush1.msra.mxu0 %v755
        %1141 = vmatprep.subr.mxu0 %v760
        %1142 = vmatpush1.msra.mxu0 %v759
        %1143 = vmatprep.subr.mxu0 %v764
        %1144 = vmatpush1.msra.mxu0 %v763
        %1145 = vmatprep.subr.mxu0 %v768
        %1146 = vmatpush1.msra.mxu0 %v767
        %1147 = vmatprep.subr.mxu0 %v772
        %1148 = vmatpush1.msra.mxu0 %v771
        %1149 = vmatprep.subr.mxu0 %v776
        %1150 = vmatpush1.msra.mxu0 %v775
        %1151 = vmatprep.subr.mxu0 %v780
        %1152 = vmatpush1.msra.mxu0 %v779
        %1153 = vmatprep.subr.mxu0 %v784
        %1154 = vmatpush1.msra.mxu0 %v783
        %1155 = vmatprep.subr.mxu0 %v788
        %1156 = vmatpush1.msra.mxu0 %v787
        %1157 = vmatprep.subr.mxu0 %v792
        %1158 = vmatpush1.msra.mxu0 %v791
        %1159 = vmatprep.subr.mxu0 %v796
        %1160 = vmatpush1.msra.mxu0 %v795
        %1161 = vmatprep.subr.mxu0 %v800
        %1162 = vmatpush1.msra.mxu0 %v799
        %1163 = vmatprep.subr.mxu0 %v804
        %1164 = vmatpush1.msra.mxu0 %v803
        %1165 = vmatprep.subr.mxu0 %v808
        %1166 = vmatpush1.msra.mxu0 %v807
        %1167 = vmatprep.mubr.f32.mxu0 %v416
        %1168 = vmatmul.mubr.f32.gmra.mrb[0].mxu0 %v415
        %v1169 = vpop.f32.mrb[0].mxu0
        %v1170 = vadd.f32 %v1099, %v1169
        %v1171 = vpop.f32.mrb[0].mxu0
        %v1172 = vadd.f32 %v1101, %v1171
        %1173 = vdwg.mxu0
        %1174 = vmatprep.subr.mxu0 %v812
        %1175 = vmatpush1.msra.mxu0 %v811
        %1176 = vmatprep.subr.mxu0 %v816
        %1177 = vmatpush1.msra.mxu0 %v815
        %1178 = vmatprep.subr.mxu0 %v820
        %1179 = vmatpush1.msra.mxu0 %v819
        %1180 = vmatprep.subr.mxu0 %v824
        %1181 = vmatpush1.msra.mxu0 %v823
        %1182 = vmatprep.subr.mxu0 %v828
        %1183 = vmatpush1.msra.mxu0 %v827
        %1184 = vmatprep.subr.mxu0 %v832
        %1185 = vmatpush1.msra.mxu0 %v831
        %1186 = vmatprep.subr.mxu0 %v836
        %1187 = vmatpush1.msra.mxu0 %v835
        %1188 = vmatprep.subr.mxu0 %v840
        %1189 = vmatpush1.msra.mxu0 %v839
        %1190 = vmatprep.subr.mxu0 %v844
        %1191 = vmatpush1.msra.mxu0 %v843
        %1192 = vmatprep.subr.mxu0 %v848
        %1193 = vmatpush1.msra.mxu0 %v847
        %1194 = vmatprep.subr.mxu0 %v852
        %1195 = vmatpush1.msra.mxu0 %v851
        %1196 = vmatprep.subr.mxu0 %v856
        %1197 = vmatpush1.msra.mxu0 %v855
        %1198 = vmatprep.subr.mxu0 %v860
        %1199 = vmatpush1.msra.mxu0 %v859
        %1200 = vmatprep.subr.mxu0 %v864
        %1201 = vmatpush1.msra.mxu0 %v863
        %1202 = vmatprep.subr.mxu0 %v868
        %1203 = vmatpush1.msra.mxu0 %v867
        %1204 = vmatprep.subr.mxu0 %v872
        %1205 = vmatpush1.msra.mxu0 %v871
        %1206 = vmatprep.subr.mxu0 %v876
        %1207 = vmatpush1.msra.mxu0 %v875
        %1208 = vmatprep.subr.mxu0 %v880
        %1209 = vmatpush1.msra.mxu0 %v879
        %1210 = vmatprep.subr.mxu0 %v884
        %1211 = vmatpush1.msra.mxu0 %v883
        %1212 = vmatprep.subr.mxu0 %v888
        %1213 = vmatpush1.msra.mxu0 %v887
        %1214 = vmatprep.subr.mxu0 %v892
        %1215 = vmatpush1.msra.mxu0 %v891
        %1216 = vmatprep.subr.mxu0 %v896
        %1217 = vmatpush1.msra.mxu0 %v895
        %1218 = vmatprep.subr.mxu0 %v900
        %1219 = vmatpush1.msra.mxu0 %v899
        %1220 = vmatprep.subr.mxu0 %v904
        %1221 = vmatpush1.msra.mxu0 %v903
        %1222 = vmatprep.subr.mxu0 %v908
        %1223 = vmatpush1.msra.mxu0 %v907
        %1224 = vmatprep.subr.mxu0 %v912
        %1225 = vmatpush1.msra.mxu0 %v911
        %1226 = vmatprep.subr.mxu0 %v916
        %1227 = vmatpush1.msra.mxu0 %v915
        %1228 = vmatprep.subr.mxu0 %v920
        %1229 = vmatpush1.msra.mxu0 %v919
        %1230 = vmatprep.subr.mxu0 %v924
        %1231 = vmatpush1.msra.mxu0 %v923
        %1232 = vmatprep.subr.mxu0 %v928
        %1233 = vmatpush1.msra.mxu0 %v927
        %1234 = vmatprep.subr.mxu0 %v932
        %1235 = vmatpush1.msra.mxu0 %v931
        %1236 = vmatprep.subr.mxu0 %v936
        %1237 = vmatpush1.msra.mxu0 %v935
        %1238 = vmatprep.mubr.f32.mxu0 %v418
        %1239 = vmatmul.mubr.f32.gmra.mrb[0].mxu0 %v417
        %v1240 = vpop.f32.mrb[0].mxu0
        %v1241 = vadd.f32 %v1170, %v1240
        %v1242 = vpop.f32.mrb[0].mxu0
        %v1243 = vadd.f32 %v1172, %v1242
        %1244 = vdwg.mxu0
        %1245 = vmatprep.subr.mxu0 %v430
        %1246 = vmatpush1.msra.mxu0 %v429
        %1247 = vmatprep.subr.mxu0 %v434
        %1248 = vmatpush1.msra.mxu0 %v433
        %1249 = vmatprep.subr.mxu0 %v438
        %1250 = vmatpush1.msra.mxu0 %v437
        %1251 = vmatprep.subr.mxu0 %v442
        %1252 = vmatpush1.msra.mxu0 %v441
        %1253 = vmatprep.subr.mxu0 %v446
        %1254 = vmatpush1.msra.mxu0 %v445
        %1255 = vmatprep.subr.mxu0 %v450
        %1256 = vmatpush1.msra.mxu0 %v449
        %1257 = vmatprep.subr.mxu0 %v454
        %1258 = vmatpush1.msra.mxu0 %v453
        %1259 = vmatprep.subr.mxu0 %v458
        %1260 = vmatpush1.msra.mxu0 %v457
        %1261 = vmatprep.subr.mxu0 %v462
        %1262 = vmatpush1.msra.mxu0 %v461
        %1263 = vmatprep.subr.mxu0 %v466
        %1264 = vmatpush1.msra.mxu0 %v465
        %1265 = vmatprep.subr.mxu0 %v470
        %1266 = vmatpush1.msra.mxu0 %v469
        %1267 = vmatprep.subr.mxu0 %v474
        %1268 = vmatpush1.msra.mxu0 %v473
        %1269 = vmatprep.subr.mxu0 %v478
        %1270 = vmatpush1.msra.mxu0 %v477
        %1271 = vmatprep.subr.mxu0 %v482
        %1272 = vmatpush1.msra.mxu0 %v481
        %1273 = vmatprep.subr.mxu0 %v486
        %1274 = vmatpush1.msra.mxu0 %v485
        %1275 = vmatprep.subr.mxu0 %v490
        %1276 = vmatpush1.msra.mxu0 %v489
        %1277 = vmatprep.subr.mxu0 %v494
        %1278 = vmatpush1.msra.mxu0 %v493
        %1279 = vmatprep.subr.mxu0 %v498
        %1280 = vmatpush1.msra.mxu0 %v497
        %1281 = vmatprep.subr.mxu0 %v502
        %1282 = vmatpush1.msra.mxu0 %v501
        %1283 = vmatprep.subr.mxu0 %v506
        %1284 = vmatpush1.msra.mxu0 %v505
        %1285 = vmatprep.subr.mxu0 %v510
        %1286 = vmatpush1.msra.mxu0 %v509
        %1287 = vmatprep.subr.mxu0 %v514
        %1288 = vmatpush1.msra.mxu0 %v513
        %1289 = vmatprep.subr.mxu0 %v518
        %1290 = vmatpush1.msra.mxu0 %v517
        %1291 = vmatprep.subr.mxu0 %v522
        %1292 = vmatpush1.msra.mxu0 %v521
        %1293 = vmatprep.subr.mxu0 %v526
        %1294 = vmatpush1.msra.mxu0 %v525
        %1295 = vmatprep.subr.mxu0 %v530
        %1296 = vmatpush1.msra.mxu0 %v529
        %1297 = vmatprep.subr.mxu0 %v534
        %1298 = vmatpush1.msra.mxu0 %v533
        %1299 = vmatprep.subr.mxu0 %v538
        %1300 = vmatpush1.msra.mxu0 %v537
        %1301 = vmatprep.subr.mxu0 %v542
        %1302 = vmatpush1.msra.mxu0 %v541
        %1303 = vmatprep.subr.mxu0 %v546
        %1304 = vmatpush1.msra.mxu0 %v545
        %1305 = vmatprep.subr.mxu0 %v550
        %1306 = vmatpush1.msra.mxu0 %v549
        %1307 = vmatprep.subr.mxu0 %v554
        %1308 = vmatpush1.msra.mxu0 %v553
        %1309 = vmatprep.mubr.f32.mxu0 %v412
        %1310 = vmatmul.mubr.f32.gmra.mrb[0].mxu0 %v411
        %v1311 = vpop.f32.mrb[0].mxu0
        %v1312 = vadd.f32 %v952, %v1311
        %v1313 = vpop.f32.mrb[0].mxu0
        %v1314 = vadd.f32 %v956, %v1313
        %1315 = vdwg.mxu0
        %1316 = vmatprep.subr.mxu0 %v558
        %1317 = vmatpush1.msra.mxu0 %v557
        %1318 = vmatprep.subr.mxu0 %v562
        %1319 = vmatpush1.msra.mxu0 %v561
        %1320 = vmatprep.subr.mxu0 %v566
        %1321 = vmatpush1.msra.mxu0 %v565
        %1322 = vmatprep.subr.mxu0 %v570
        %1323 = vmatpush1.msra.mxu0 %v569
        %1324 = vmatprep.subr.mxu0 %v574
        %1325 = vmatpush1.msra.mxu0 %v573
        %1326 = vmatprep.subr.mxu0 %v578
        %1327 = vmatpush1.msra.mxu0 %v577
        %1328 = vmatprep.subr.mxu0 %v582
        %1329 = vmatpush1.msra.mxu0 %v581
        %1330 = vmatprep.subr.mxu0 %v586
        %1331 = vmatpush1.msra.mxu0 %v585
        %1332 = vmatprep.subr.mxu0 %v590
        %1333 = vmatpush1.msra.mxu0 %v589
        %1334 = vmatprep.subr.mxu0 %v594
        %1335 = vmatpush1.msra.mxu0 %v593
        %1336 = vmatprep.subr.mxu0 %v598
        %1337 = vmatpush1.msra.mxu0 %v597
        %1338 = vmatprep.subr.mxu0 %v602
        %1339 = vmatpush1.msra.mxu0 %v601
        %1340 = vmatprep.subr.mxu0 %v606
        %1341 = vmatpush1.msra.mxu0 %v605
        %1342 = vmatprep.subr.mxu0 %v610
        %1343 = vmatpush1.msra.mxu0 %v609
        %1344 = vmatprep.subr.mxu0 %v614
        %1345 = vmatpush1.msra.mxu0 %v613
        %1346 = vmatprep.subr.mxu0 %v618
        %1347 = vmatpush1.msra.mxu0 %v617
        %1348 = vmatprep.subr.mxu0 %v622
        %1349 = vmatpush1.msra.mxu0 %v621
        %1350 = vmatprep.subr.mxu0 %v626
        %1351 = vmatpush1.msra.mxu0 %v625
        %1352 = vmatprep.subr.mxu0 %v630
        %1353 = vmatpush1.msra.mxu0 %v629
        %1354 = vmatprep.subr.mxu0 %v634
        %1355 = vmatpush1.msra.mxu0 %v633
        %1356 = vmatprep.subr.mxu0 %v638
        %1357 = vmatpush1.msra.mxu0 %v637
        %1358 = vmatprep.subr.mxu0 %v642
        %1359 = vmatpush1.msra.mxu0 %v641
        %1360 = vmatprep.subr.mxu0 %v646
        %1361 = vmatpush1.msra.mxu0 %v645
        %1362 = vmatprep.subr.mxu0 %v650
        %1363 = vmatpush1.msra.mxu0 %v649
        %1364 = vmatprep.subr.mxu0 %v654
        %1365 = vmatpush1.msra.mxu0 %v653
        %1366 = vmatprep.subr.mxu0 %v658
        %1367 = vmatpush1.msra.mxu0 %v657
        %1368 = vmatprep.subr.mxu0 %v662
        %1369 = vmatpush1.msra.mxu0 %v661
        %1370 = vmatprep.subr.mxu0 %v666
        %1371 = vmatpush1.msra.mxu0 %v665
        %1372 = vmatprep.subr.mxu0 %v670
        %1373 = vmatpush1.msra.mxu0 %v669
        %1374 = vmatprep.subr.mxu0 %v674
        %1375 = vmatpush1.msra.mxu0 %v673
        %1376 = vmatprep.subr.mxu0 %v678
        %1377 = vmatpush1.msra.mxu0 %v677
        %1378 = vmatprep.subr.mxu0 %v682
        %1379 = vmatpush1.msra.mxu0 %v681
        %1380 = vmatprep.mubr.f32.mxu0 %v414
        %1381 = vmatmul.mubr.f32.gmra.mrb[0].mxu0 %v413
        %v1382 = vpop.f32.mrb[0].mxu0
        %v1383 = vadd.f32 %v1312, %v1382
        %v1384 = vpop.f32.mrb[0].mxu0
        %v1385 = vadd.f32 %v1314, %v1384
        %1386 = vdwg.mxu0
        %1387 = vmatprep.subr.mxu0 %v686
        %1388 = vmatpush1.msra.mxu0 %v685
        %1389 = vmatprep.subr.mxu0 %v690
        %1390 = vmatpush1.msra.mxu0 %v689
        %1391 = vmatprep.subr.mxu0 %v694
        %1392 = vmatpush1.msra.mxu0 %v693
        %1393 = vmatprep.subr.mxu0 %v698
        %1394 = vmatpush1.msra.mxu0 %v697
        %1395 = vmatprep.subr.mxu0 %v702
        %1396 = vmatpush1.msra.mxu0 %v701
        %1397 = vmatprep.subr.mxu0 %v706
        %1398 = vmatpush1.msra.mxu0 %v705
        %1399 = vmatprep.subr.mxu0 %v710
        %1400 = vmatpush1.msra.mxu0 %v709
        %1401 = vmatprep.subr.mxu0 %v714
        %1402 = vmatpush1.msra.mxu0 %v713
        %1403 = vmatprep.subr.mxu0 %v718
        %1404 = vmatpush1.msra.mxu0 %v717
        %1405 = vmatprep.subr.mxu0 %v722
        %1406 = vmatpush1.msra.mxu0 %v721
        %1407 = vmatprep.subr.mxu0 %v726
        %1408 = vmatpush1.msra.mxu0 %v725
        %1409 = vmatprep.subr.mxu0 %v730
        %1410 = vmatpush1.msra.mxu0 %v729
        %1411 = vmatprep.subr.mxu0 %v734
        %1412 = vmatpush1.msra.mxu0 %v733
        %1413 = vmatprep.subr.mxu0 %v738
        %1414 = vmatpush1.msra.mxu0 %v737
        %1415 = vmatprep.subr.mxu0 %v742
        %1416 = vmatpush1.msra.mxu0 %v741
        %1417 = vmatprep.subr.mxu0 %v746
        %1418 = vmatpush1.msra.mxu0 %v745
        %1419 = vmatprep.subr.mxu0 %v750
        %1420 = vmatpush1.msra.mxu0 %v749
        %1421 = vmatprep.subr.mxu0 %v754
        %1422 = vmatpush1.msra.mxu0 %v753
        %1423 = vmatprep.subr.mxu0 %v758
        %1424 = vmatpush1.msra.mxu0 %v757
        %1425 = vmatprep.subr.mxu0 %v762
        %1426 = vmatpush1.msra.mxu0 %v761
        %1427 = vmatprep.subr.mxu0 %v766
        %1428 = vmatpush1.msra.mxu0 %v765
        %1429 = vmatprep.subr.mxu0 %v770
        %1430 = vmatpush1.msra.mxu0 %v769
        %1431 = vmatprep.subr.mxu0 %v774
        %1432 = vmatpush1.msra.mxu0 %v773
        %1433 = vmatprep.subr.mxu0 %v778
        %1434 = vmatpush1.msra.mxu0 %v777
        %1435 = vmatprep.subr.mxu0 %v782
        %1436 = vmatpush1.msra.mxu0 %v781
        %1437 = vmatprep.subr.mxu0 %v786
        %1438 = vmatpush1.msra.mxu0 %v785
        %1439 = vmatprep.subr.mxu0 %v790
        %1440 = vmatpush1.msra.mxu0 %v789
        %1441 = vmatprep.subr.mxu0 %v794
        %1442 = vmatpush1.msra.mxu0 %v793
        %1443 = vmatprep.subr.mxu0 %v798
        %1444 = vmatpush1.msra.mxu0 %v797
        %1445 = vmatprep.subr.mxu0 %v802
        %1446 = vmatpush1.msra.mxu0 %v801
        %1447 = vmatprep.subr.mxu0 %v806
        %1448 = vmatpush1.msra.mxu0 %v805
        %1449 = vmatprep.subr.mxu0 %v810
        %1450 = vmatpush1.msra.mxu0 %v809
        %1451 = vmatprep.mubr.f32.mxu0 %v416
        %1452 = vmatmul.mubr.f32.gmra.mrb[0].mxu0 %v415
        %v1453 = vpop.f32.mrb[0].mxu0
        %v1454 = vadd.f32 %v1383, %v1453
        %v1455 = vpop.f32.mrb[0].mxu0
        %v1456 = vadd.f32 %v1385, %v1455
        %1457 = vdwg.mxu0
        %1458 = vmatprep.subr.mxu0 %v814
        %1459 = vmatpush1.msra.mxu0 %v813
        %1460 = vmatprep.subr.mxu0 %v818
        %1461 = vmatpush1.msra.mxu0 %v817
        %1462 = vmatprep.subr.mxu0 %v822
        %1463 = vmatpush1.msra.mxu0 %v821
        %1464 = vmatprep.subr.mxu0 %v826
        %1465 = vmatpush1.msra.mxu0 %v825
        %1466 = vmatprep.subr.mxu0 %v830
        %1467 = vmatpush1.msra.mxu0 %v829
        %1468 = vmatprep.subr.mxu0 %v834
        %1469 = vmatpush1.msra.mxu0 %v833
        %1470 = vmatprep.subr.mxu0 %v838
        %1471 = vmatpush1.msra.mxu0 %v837
        %1472 = vmatprep.subr.mxu0 %v842
        %1473 = vmatpush1.msra.mxu0 %v841
        %1474 = vmatprep.subr.mxu0 %v846
        %1475 = vmatpush1.msra.mxu0 %v845
        %1476 = vmatprep.subr.mxu0 %v850
        %1477 = vmatpush1.msra.mxu0 %v849
        %1478 = vmatprep.subr.mxu0 %v854
        %1479 = vmatpush1.msra.mxu0 %v853
        %1480 = vmatprep.subr.mxu0 %v858
        %1481 = vmatpush1.msra.mxu0 %v857
        %1482 = vmatprep.subr.mxu0 %v862
        %1483 = vmatpush1.msra.mxu0 %v861
        %1484 = vmatprep.subr.mxu0 %v866
        %1485 = vmatpush1.msra.mxu0 %v865
        %1486 = vmatprep.subr.mxu0 %v870
        %1487 = vmatpush1.msra.mxu0 %v869
        %1488 = vmatprep.subr.mxu0 %v874
        %1489 = vmatpush1.msra.mxu0 %v873
        %1490 = vmatprep.subr.mxu0 %v878
        %1491 = vmatpush1.msra.mxu0 %v877
        %1492 = vmatprep.subr.mxu0 %v882
        %1493 = vmatpush1.msra.mxu0 %v881
        %1494 = vmatprep.subr.mxu0 %v886
        %1495 = vmatpush1.msra.mxu0 %v885
        %1496 = vmatprep.subr.mxu0 %v890
        %1497 = vmatpush1.msra.mxu0 %v889
        %1498 = vmatprep.subr.mxu0 %v894
        %1499 = vmatpush1.msra.mxu0 %v893
        %1500 = vmatprep.subr.mxu0 %v898
        %1501 = vmatpush1.msra.mxu0 %v897
        %1502 = vmatprep.subr.mxu0 %v902
        %1503 = vmatpush1.msra.mxu0 %v901
        %1504 = vmatprep.subr.mxu0 %v906
        %1505 = vmatpush1.msra.mxu0 %v905
        %1506 = vmatprep.subr.mxu0 %v910
        %1507 = vmatpush1.msra.mxu0 %v909
        %1508 = vmatprep.subr.mxu0 %v914
        %1509 = vmatpush1.msra.mxu0 %v913
        %1510 = vmatprep.subr.mxu0 %v918
        %1511 = vmatpush1.msra.mxu0 %v917
        %1512 = vmatprep.subr.mxu0 %v922
        %1513 = vmatpush1.msra.mxu0 %v921
        %1514 = vmatprep.subr.mxu0 %v926
        %1515 = vmatpush1.msra.mxu0 %v925
        %1516 = vmatprep.subr.mxu0 %v930
        %1517 = vmatpush1.msra.mxu0 %v929
        %1518 = vmatprep.subr.mxu0 %v934
        %1519 = vmatpush1.msra.mxu0 %v933
        %1520 = vmatprep.subr.mxu0 %v938
        %1521 = vmatpush1.msra.mxu0 %v937
        %1522 = vmatprep.mubr.f32.mxu0 %v418
        %1523 = vmatmul.mubr.f32.gmra.mrb[0].mxu0 %v417
        %v1524 = vpop.f32.mrb[0].mxu0
        %v1525 = vadd.f32 %v1454, %v1524
        %v1526 = vpop.f32.mrb[0].mxu0
        %v1527 = vadd.f32 %v1456, %v1526
        %1528 = vdwg.mxu0
        %v1529 = vadd.f32 %v1241, 0.0
        %v1530 = vadd.f32 %v1243, 0.0
        %v1531 = vadd.f32 %v1525, 0.0
        %v1532 = vadd.f32 %v1527, 0.0
        %vm1533 = vcmp.ge.f32.partialorder %v1529, 0.5
        %vm1534 = vcmp.ge.f32.partialorder %v1530, 0.5
        %vm1535 = vcmp.ge.f32.partialorder %v1531, 0.5
        %vm1536 = vcmp.ge.f32.partialorder %v1532, 0.5
        %v1537 = vsel %vm1533, 1, 0
        %v1538 = vsel %vm1534, 1, 0
        %v1539 = vsel %vm1535, 1, 0
        %v1540 = vsel %vm1536, 1, 0
        %v1541 = vcvt.s32.f32 %v1537
        %v1542 = vcvt.s32.f32 %v1538
        %v1543 = vcvt.s32.f32 %v1539
        %v1544 = vcvt.s32.f32 %v1540
        %v1545 = vsub.f32 1.0, %v1541
        %v1546 = vsub.f32 1.0, %v1542
        %v1547 = vsub.f32 1.0, %v1543
        %v1548 = vsub.f32 1.0, %v1544
        %v1549 = vmul.f32 %v1529, %v1545
        %v1550 = vmul.f32 %v1530, %v1546
        %v1551 = vmul.f32 %v1531, %v1547
        %v1552 = vmul.f32 %v1532, %v1548
        %v1557 = vcombine.low %v1541, %v1542
        %v1558 = vcombine.low %v1543, %v1544
        %v1560 = vunpack.c.l.s4 1966171168
        %v1561 = vunpack.c.0.s8 %v1560
        %v1562 = vlaneseq
        %v1563 = vshrl.u32 %v1562, 7
        %v1564 = vsub.s32 %v1561, %v1563
        %v1565 = vrot.slane %v1557, %v1564
        %v1567 = vunpack.c.l.s4 1966171168
        %v1568 = vunpack.c.0.s8 %v1567
        %v1569 = vlaneseq
        %v1570 = vshrl.u32 %v1569, 7
        %v1571 = vsub.s32 %v1568, %v1570
        %v1572 = vrot.slane %v1558, %v1571
        %v1573 = vcombine.low %v1565, %v1572
        %v1575 = vunpack.c.l.s4 1966171168
        %v1576 = vunpack.c.0.s8 %v1575
        %v1577 = vlaneseq
        %v1578 = vshrl.u32 %v1577, 7
        %v1579 = vsub.s32 %v1576, %v1578
        %v1580 = vrot.slane %v1573, %v1579
        %v1582 = vlaneseq
        %vm1583 = vcmp.ge.s32.totalorder %v1582, 0
        %vm1584 = vcmp.lt.s32.totalorder %v1582, 512
        %vm1585 = vmand %vm1583, %vm1584
        %1586 = vst.msk [vmem:[#allocation2] ss:$8 sm:$0xf] %vm1585, %v1580
        %1587 = vst.msk [vmem:[#allocation2] ss:$8 sm:$0x0] %vm1585, %v1580
        %v1588 = vmul.f32 %v1549, 0.9
        %v1589 = vmul.f32 %v1550, 0.9
        %v1590 = vmul.f32 %v1551, 0.9
        %v1591 = vmul.f32 %v1552, 0.9
        %v1596 = vrot.slane %v1241, 1
        %v1597 = vrot.slane %v1243, 1
        %v1598 = vrot.slane %v1525, 1
        %v1599 = vrot.slane %v1527, 1
        %v1604 = vadd.f32 %v1588, %v1596
        %v1605 = vadd.f32 %v1589, %v1597
        %v1606 = vadd.f32 %v1590, %v1598
        %v1607 = vadd.f32 %v1591, %v1599
        %vm1608 = vcmp.ge.f32.partialorder %v1604, 0.5
        %vm1609 = vcmp.ge.f32.partialorder %v1605, 0.5
        %vm1610 = vcmp.ge.f32.partialorder %v1606, 0.5
        %vm1611 = vcmp.ge.f32.partialorder %v1607, 0.5
        %v1612 = vsel %vm1608, 1, 0
        %v1613 = vsel %vm1609, 1, 0
        %v1614 = vsel %vm1610, 1, 0
        %v1615 = vsel %vm1611, 1, 0
        %v1616 = vcvt.s32.f32 %v1612
        %v1617 = vcvt.s32.f32 %v1613
        %v1618 = vcvt.s32.f32 %v1614
        %v1619 = vcvt.s32.f32 %v1615
        %v1620 = vsub.f32 1.0, %v1616
        %v1621 = vsub.f32 1.0, %v1617
        %v1622 = vsub.f32 1.0, %v1618
        %v1623 = vsub.f32 1.0, %v1619
        %v1624 = vmul.f32 %v1604, %v1620
        %v1625 = vmul.f32 %v1605, %v1621
        %v1626 = vmul.f32 %v1606, %v1622
        %v1627 = vmul.f32 %v1607, %v1623
        %v1632 = vcombine.low %v1616, %v1617
        %v1633 = vcombine.low %v1618, %v1619
        %v1635 = vunpack.c.l.s4 1966171168
        %v1636 = vunpack.c.0.s8 %v1635
        %v1637 = vlaneseq
        %v1638 = vshrl.u32 %v1637, 7
        %v1639 = vsub.s32 %v1636, %v1638
        %v1640 = vrot.slane %v1632, %v1639
        %v1642 = vunpack.c.l.s4 1966171168
        %v1643 = vunpack.c.0.s8 %v1642
        %v1644 = vlaneseq
        %v1645 = vshrl.u32 %v1644, 7
        %v1646 = vsub.s32 %v1643, %v1645
        %v1647 = vrot.slane %v1633, %v1646
        %v1648 = vcombine.low %v1640, %v1647
        %v1650 = vunpack.c.l.s4 1966171168
        %v1651 = vunpack.c.0.s8 %v1650
        %v1652 = vlaneseq
        %v1653 = vshrl.u32 %v1652, 7
        %v1654 = vsub.s32 %v1651, %v1653
        %v1655 = vrot.slane %v1648, %v1654
        %s1657 = scalar_lea.vmem [#allocation2], 1
        %1658 = vst.msk [vmem:[%s1657] ss:$8 sm:$0xf] %vm1585, %v1655
        %1659 = vst.msk [vmem:[%s1657] ss:$8 sm:$0x0] %vm1585, %v1655
        %v1660 = vmul.f32 %v1624, 0.9
        %v1661 = vmul.f32 %v1625, 0.9
        %v1662 = vmul.f32 %v1626, 0.9
        %v1663 = vmul.f32 %v1627, 0.9
        %v1664 = vrot.slane %v1241, 2
        %v1665 = vrot.slane %v1243, 2
        %v1666 = vrot.slane %v1525, 2
        %v1667 = vrot.slane %v1527, 2
        %v1672 = vadd.f32 %v1660, %v1664
        %v1673 = vadd.f32 %v1661, %v1665
        %v1674 = vadd.f32 %v1662, %v1666
        %v1675 = vadd.f32 %v1663, %v1667
        %vm1676 = vcmp.ge.f32.partialorder %v1672, 0.5
        %vm1677 = vcmp.ge.f32.partialorder %v1673, 0.5
        %vm1678 = vcmp.ge.f32.partialorder %v1674, 0.5
        %vm1679 = vcmp.ge.f32.partialorder %v1675, 0.5
        %v1680 = vsel %vm1676, 1, 0
        %v1681 = vsel %vm1677, 1, 0
        %v1682 = vsel %vm1678, 1, 0
        %v1683 = vsel %vm1679, 1, 0
        %v1684 = vcvt.s32.f32 %v1680
        %v1685 = vcvt.s32.f32 %v1681
        %v1686 = vcvt.s32.f32 %v1682
        %v1687 = vcvt.s32.f32 %v1683
        %v1688 = vsub.f32 1.0, %v1684
        %v1689 = vsub.f32 1.0, %v1685
        %v1690 = vsub.f32 1.0, %v1686
        %v1691 = vsub.f32 1.0, %v1687
        %v1692 = vmul.f32 %v1672, %v1688
        %v1693 = vmul.f32 %v1673, %v1689
        %v1694 = vmul.f32 %v1674, %v1690
        %v1695 = vmul.f32 %v1675, %v1691
        %v1700 = vcombine.low %v1684, %v1685
        %v1701 = vcombine.low %v1686, %v1687
        %v1703 = vunpack.c.l.s4 1966171168
        %v1704 = vunpack.c.0.s8 %v1703
        %v1705 = vlaneseq
        %v1706 = vshrl.u32 %v1705, 7
        %v1707 = vsub.s32 %v1704, %v1706
        %v1708 = vrot.slane %v1700, %v1707
        %v1710 = vunpack.c.l.s4 1966171168
        %v1711 = vunpack.c.0.s8 %v1710
        %v1712 = vlaneseq
        %v1713 = vshrl.u32 %v1712, 7
        %v1714 = vsub.s32 %v1711, %v1713
        %v1715 = vrot.slane %v1701, %v1714
        %v1716 = vcombine.low %v1708, %v1715
        %v1718 = vunpack.c.l.s4 1966171168
        %v1719 = vunpack.c.0.s8 %v1718
        %v1720 = vlaneseq
        %v1721 = vshrl.u32 %v1720, 7
        %v1722 = vsub.s32 %v1719, %v1721
        %v1723 = vrot.slane %v1716, %v1722
        %s1725 = scalar_lea.vmem [#allocation2], 2
        %1726 = vst.msk [vmem:[%s1725] ss:$8 sm:$0xf] %vm1585, %v1723
        %1727 = vst.msk [vmem:[%s1725] ss:$8 sm:$0x0] %vm1585, %v1723
        %v1728 = vmul.f32 %v1692, 0.9
        %v1729 = vmul.f32 %v1693, 0.9
        %v1730 = vmul.f32 %v1694, 0.9
        %v1731 = vmul.f32 %v1695, 0.9
        %v1732 = vrot.slane %v1241, 3
        %v1733 = vrot.slane %v1243, 3
        %v1734 = vrot.slane %v1525, 3
        %v1735 = vrot.slane %v1527, 3
        %v1740 = vadd.f32 %v1728, %v1732
        %v1741 = vadd.f32 %v1729, %v1733
        %v1742 = vadd.f32 %v1730, %v1734
        %v1743 = vadd.f32 %v1731, %v1735
        %vm1744 = vcmp.ge.f32.partialorder %v1740, 0.5
        %vm1745 = vcmp.ge.f32.partialorder %v1741, 0.5
        %vm1746 = vcmp.ge.f32.partialorder %v1742, 0.5
        %vm1747 = vcmp.ge.f32.partialorder %v1743, 0.5
        %v1748 = vsel %vm1744, 1, 0
        %v1749 = vsel %vm1745, 1, 0
        %v1750 = vsel %vm1746, 1, 0
        %v1751 = vsel %vm1747, 1, 0
        %v1752 = vcvt.s32.f32 %v1748
        %v1753 = vcvt.s32.f32 %v1749
        %v1754 = vcvt.s32.f32 %v1750
        %v1755 = vcvt.s32.f32 %v1751
        %v1756 = vsub.f32 1.0, %v1752
        %v1757 = vsub.f32 1.0, %v1753
        %v1758 = vsub.f32 1.0, %v1754
        %v1759 = vsub.f32 1.0, %v1755
        %v1760 = vmul.f32 %v1740, %v1756
        %v1761 = vmul.f32 %v1741, %v1757
        %v1762 = vmul.f32 %v1742, %v1758
        %v1763 = vmul.f32 %v1743, %v1759
        %v1768 = vcombine.low %v1752, %v1753
        %v1769 = vcombine.low %v1754, %v1755
        %v1771 = vunpack.c.l.s4 1966171168
        %v1772 = vunpack.c.0.s8 %v1771
        %v1773 = vlaneseq
        %v1774 = vshrl.u32 %v1773, 7
        %v1775 = vsub.s32 %v1772, %v1774
        %v1776 = vrot.slane %v1768, %v1775
        %v1778 = vunpack.c.l.s4 1966171168
        %v1779 = vunpack.c.0.s8 %v1778
        %v1780 = vlaneseq
        %v1781 = vshrl.u32 %v1780, 7
        %v1782 = vsub.s32 %v1779, %v1781
        %v1783 = vrot.slane %v1769, %v1782
        %v1784 = vcombine.low %v1776, %v1783
        %v1786 = vunpack.c.l.s4 1966171168
        %v1787 = vunpack.c.0.s8 %v1786
        %v1788 = vlaneseq
        %v1789 = vshrl.u32 %v1788, 7
        %v1790 = vsub.s32 %v1787, %v1789
        %v1791 = vrot.slane %v1784, %v1790
        %s1793 = scalar_lea.vmem [#allocation2], 3
        %1794 = vst.msk [vmem:[%s1793] ss:$8 sm:$0xf] %vm1585, %v1791
        %1795 = vst.msk [vmem:[%s1793] ss:$8 sm:$0x0] %vm1585, %v1791
        %v1796 = vmul.f32 %v1760, 0.9
        %v1797 = vmul.f32 %v1761, 0.9
        %v1798 = vmul.f32 %v1762, 0.9
        %v1799 = vmul.f32 %v1763, 0.9
        %v1800 = vrot.slane %v1241, 4
        %v1801 = vrot.slane %v1243, 4
        %v1802 = vrot.slane %v1525, 4
        %v1803 = vrot.slane %v1527, 4
        %v1808 = vadd.f32 %v1796, %v1800
        %v1809 = vadd.f32 %v1797, %v1801
        %v1810 = vadd.f32 %v1798, %v1802
        %v1811 = vadd.f32 %v1799, %v1803
        %vm1812 = vcmp.ge.f32.partialorder %v1808, 0.5
        %vm1813 = vcmp.ge.f32.partialorder %v1809, 0.5
        %vm1814 = vcmp.ge.f32.partialorder %v1810, 0.5
        %vm1815 = vcmp.ge.f32.partialorder %v1811, 0.5
        %v1816 = vsel %vm1812, 1, 0
        %v1817 = vsel %vm1813, 1, 0
        %v1818 = vsel %vm1814, 1, 0
        %v1819 = vsel %vm1815, 1, 0
        %v1820 = vcvt.s32.f32 %v1816
        %v1821 = vcvt.s32.f32 %v1817
        %v1822 = vcvt.s32.f32 %v1818
        %v1823 = vcvt.s32.f32 %v1819
        %v1824 = vsub.f32 1.0, %v1820
        %v1825 = vsub.f32 1.0, %v1821
        %v1826 = vsub.f32 1.0, %v1822
        %v1827 = vsub.f32 1.0, %v1823
        %v1828 = vmul.f32 %v1808, %v1824
        %v1829 = vmul.f32 %v1809, %v1825
        %v1830 = vmul.f32 %v1810, %v1826
        %v1831 = vmul.f32 %v1811, %v1827
        %v1836 = vcombine.low %v1820, %v1821
        %v1837 = vcombine.low %v1822, %v1823
        %v1839 = vunpack.c.l.s4 1966171168
        %v1840 = vunpack.c.0.s8 %v1839
        %v1841 = vlaneseq
        %v1842 = vshrl.u32 %v1841, 7
        %v1843 = vsub.s32 %v1840, %v1842
        %v1844 = vrot.slane %v1836, %v1843
        %v1846 = vunpack.c.l.s4 1966171168
        %v1847 = vunpack.c.0.s8 %v1846
        %v1848 = vlaneseq
        %v1849 = vshrl.u32 %v1848, 7
        %v1850 = vsub.s32 %v1847, %v1849
        %v1851 = vrot.slane %v1837, %v1850
        %v1852 = vcombine.low %v1844, %v1851
        %v1854 = vunpack.c.l.s4 1966171168
        %v1855 = vunpack.c.0.s8 %v1854
        %v1856 = vlaneseq
        %v1857 = vshrl.u32 %v1856, 7
        %v1858 = vsub.s32 %v1855, %v1857
        %v1859 = vrot.slane %v1852, %v1858
        %s1861 = scalar_lea.vmem [#allocation2], 4
        %1862 = vst.msk [vmem:[%s1861] ss:$8 sm:$0xf] %vm1585, %v1859
        %1863 = vst.msk [vmem:[%s1861] ss:$8 sm:$0x0] %vm1585, %v1859
        %v1864 = vmul.f32 %v1828, 0.9
        %v1865 = vmul.f32 %v1829, 0.9
        %v1866 = vmul.f32 %v1830, 0.9
        %v1867 = vmul.f32 %v1831, 0.9
        %v1868 = vrot.slane %v1241, 5
        %v1869 = vrot.slane %v1243, 5
        %v1870 = vrot.slane %v1525, 5
        %v1871 = vrot.slane %v1527, 5
        %v1876 = vadd.f32 %v1864, %v1868
        %v1877 = vadd.f32 %v1865, %v1869
        %v1878 = vadd.f32 %v1866, %v1870
        %v1879 = vadd.f32 %v1867, %v1871
        %vm1880 = vcmp.ge.f32.partialorder %v1876, 0.5
        %vm1881 = vcmp.ge.f32.partialorder %v1877, 0.5
        %vm1882 = vcmp.ge.f32.partialorder %v1878, 0.5
        %vm1883 = vcmp.ge.f32.partialorder %v1879, 0.5
        %v1884 = vsel %vm1880, 1, 0
        %v1885 = vsel %vm1881, 1, 0
        %v1886 = vsel %vm1882, 1, 0
        %v1887 = vsel %vm1883, 1, 0
        %v1888 = vcvt.s32.f32 %v1884
        %v1889 = vcvt.s32.f32 %v1885
        %v1890 = vcvt.s32.f32 %v1886
        %v1891 = vcvt.s32.f32 %v1887
        %v1892 = vsub.f32 1.0, %v1888
        %v1893 = vsub.f32 1.0, %v1889
        %v1894 = vsub.f32 1.0, %v1890
        %v1895 = vsub.f32 1.0, %v1891
        %v1896 = vmul.f32 %v1876, %v1892
        %v1897 = vmul.f32 %v1877, %v1893
        %v1898 = vmul.f32 %v1878, %v1894
        %v1899 = vmul.f32 %v1879, %v1895
        %v1904 = vcombine.low %v1888, %v1889
        %v1905 = vcombine.low %v1890, %v1891
        %v1907 = vunpack.c.l.s4 1966171168
        %v1908 = vunpack.c.0.s8 %v1907
        %v1909 = vlaneseq
        %v1910 = vshrl.u32 %v1909, 7
        %v1911 = vsub.s32 %v1908, %v1910
        %v1912 = vrot.slane %v1904, %v1911
        %v1914 = vunpack.c.l.s4 1966171168
        %v1915 = vunpack.c.0.s8 %v1914
        %v1916 = vlaneseq
        %v1917 = vshrl.u32 %v1916, 7
        %v1918 = vsub.s32 %v1915, %v1917
        %v1919 = vrot.slane %v1905, %v1918
        %v1920 = vcombine.low %v1912, %v1919
        %v1922 = vunpack.c.l.s4 1966171168
        %v1923 = vunpack.c.0.s8 %v1922
        %v1924 = vlaneseq
        %v1925 = vshrl.u32 %v1924, 7
        %v1926 = vsub.s32 %v1923, %v1925
        %v1927 = vrot.slane %v1920, %v1926
        %s1929 = scalar_lea.vmem [#allocation2], 5
        %1930 = vst.msk [vmem:[%s1929] ss:$8 sm:$0xf] %vm1585, %v1927
        %1931 = vst.msk [vmem:[%s1929] ss:$8 sm:$0x0] %vm1585, %v1927
        %v1932 = vmul.f32 %v1896, 0.9
        %v1933 = vmul.f32 %v1897, 0.9
        %v1934 = vmul.f32 %v1898, 0.9
        %v1935 = vmul.f32 %v1899, 0.9
        %v1936 = vrot.slane %v1241, 6
        %v1937 = vrot.slane %v1243, 6
        %v1938 = vrot.slane %v1525, 6
        %v1939 = vrot.slane %v1527, 6
        %v1944 = vadd.f32 %v1932, %v1936
        %v1945 = vadd.f32 %v1933, %v1937
        %v1946 = vadd.f32 %v1934, %v1938
        %v1947 = vadd.f32 %v1935, %v1939
        %vm1948 = vcmp.ge.f32.partialorder %v1944, 0.5
        %vm1949 = vcmp.ge.f32.partialorder %v1945, 0.5
        %vm1950 = vcmp.ge.f32.partialorder %v1946, 0.5
        %vm1951 = vcmp.ge.f32.partialorder %v1947, 0.5
        %v1952 = vsel %vm1948, 1, 0
        %v1953 = vsel %vm1949, 1, 0
        %v1954 = vsel %vm1950, 1, 0
        %v1955 = vsel %vm1951, 1, 0
        %v1956 = vcvt.s32.f32 %v1952
        %v1957 = vcvt.s32.f32 %v1953
        %v1958 = vcvt.s32.f32 %v1954
        %v1959 = vcvt.s32.f32 %v1955
        %v1960 = vsub.f32 1.0, %v1956
        %v1961 = vsub.f32 1.0, %v1957
        %v1962 = vsub.f32 1.0, %v1958
        %v1963 = vsub.f32 1.0, %v1959
        %v1964 = vmul.f32 %v1944, %v1960
        %v1965 = vmul.f32 %v1945, %v1961
        %v1966 = vmul.f32 %v1946, %v1962
        %v1967 = vmul.f32 %v1947, %v1963
        %v1972 = vcombine.low %v1956, %v1957
        %v1973 = vcombine.low %v1958, %v1959
        %v1975 = vunpack.c.l.s4 1966171168
        %v1976 = vunpack.c.0.s8 %v1975
        %v1977 = vlaneseq
        %v1978 = vshrl.u32 %v1977, 7
        %v1979 = vsub.s32 %v1976, %v1978
        %v1980 = vrot.slane %v1972, %v1979
        %v1982 = vunpack.c.l.s4 1966171168
        %v1983 = vunpack.c.0.s8 %v1982
        %v1984 = vlaneseq
        %v1985 = vshrl.u32 %v1984, 7
        %v1986 = vsub.s32 %v1983, %v1985
        %v1987 = vrot.slane %v1973, %v1986
        %v1988 = vcombine.low %v1980, %v1987
        %v1990 = vunpack.c.l.s4 1966171168
        %v1991 = vunpack.c.0.s8 %v1990
        %v1992 = vlaneseq
        %v1993 = vshrl.u32 %v1992, 7
        %v1994 = vsub.s32 %v1991, %v1993
        %v1995 = vrot.slane %v1988, %v1994
        %s1997 = scalar_lea.vmem [#allocation2], 6
        %1998 = vst.msk [vmem:[%s1997] ss:$8 sm:$0xf] %vm1585, %v1995
        %1999 = vst.msk [vmem:[%s1997] ss:$8 sm:$0x0] %vm1585, %v1995
        %v2000 = vmul.f32 %v1964, 0.9
        %v2001 = vmul.f32 %v1965, 0.9
        %v2002 = vmul.f32 %v1966, 0.9
        %v2003 = vmul.f32 %v1967, 0.9
        %v2004 = vrot.slane %v1241, 7
        %v2005 = vrot.slane %v1243, 7
        %v2006 = vrot.slane %v1525, 7
        %v2007 = vrot.slane %v1527, 7
        %v2012 = vadd.f32 %v2000, %v2004
        %v2013 = vadd.f32 %v2001, %v2005
        %v2014 = vadd.f32 %v2002, %v2006
        %v2015 = vadd.f32 %v2003, %v2007
        %vm2016 = vcmp.ge.f32.partialorder %v2012, 0.5
        %vm2017 = vcmp.ge.f32.partialorder %v2013, 0.5
        %vm2018 = vcmp.ge.f32.partialorder %v2014, 0.5
        %vm2019 = vcmp.ge.f32.partialorder %v2015, 0.5
        %v2020 = vsel %vm2016, 1, 0
        %v2021 = vsel %vm2017, 1, 0
        %v2022 = vsel %vm2018, 1, 0
        %v2023 = vsel %vm2019, 1, 0
        %v2024 = vcvt.s32.f32 %v2020
        %v2025 = vcvt.s32.f32 %v2021
        %v2026 = vcvt.s32.f32 %v2022
        %v2027 = vcvt.s32.f32 %v2023
        %v2032 = vcombine.low %v2024, %v2025
        %v2033 = vcombine.low %v2026, %v2027
        %v2035 = vunpack.c.l.s4 1966171168
        %v2036 = vunpack.c.0.s8 %v2035
        %v2037 = vlaneseq
        %v2038 = vshrl.u32 %v2037, 7
        %v2039 = vsub.s32 %v2036, %v2038
        %v2040 = vrot.slane %v2032, %v2039
        %v2042 = vunpack.c.l.s4 1966171168
        %v2043 = vunpack.c.0.s8 %v2042
        %v2044 = vlaneseq
        %v2045 = vshrl.u32 %v2044, 7
        %v2046 = vsub.s32 %v2043, %v2045
        %v2047 = vrot.slane %v2033, %v2046
        %v2048 = vcombine.low %v2040, %v2047
        %v2050 = vunpack.c.l.s4 1966171168
        %v2051 = vunpack.c.0.s8 %v2050
        %v2052 = vlaneseq
        %v2053 = vshrl.u32 %v2052, 7
        %v2054 = vsub.s32 %v2051, %v2053
        %v2055 = vrot.slane %v2048, %v2054
        %s2057 = scalar_lea.vmem [#allocation2], 7
        %2058 = vst.msk [vmem:[%s2057] ss:$8 sm:$0xf] %vm1585, %v2055
        %2059 = vst.msk [vmem:[%s2057] ss:$8 sm:$0x0] %vm1585, %v2055
        %v2060 = vld [vmem:[#allocation2] sm:$0xff]
        %v2061 = vld [vmem:[#allocation2 + $0x8] sm:$0xff]
        %v2062 = vld [vmem:[#allocation2 + $0x10] sm:$0xff]
        %v2063 = vld [vmem:[#allocation2 + $0x18] sm:$0xff]
        %v2064 = vld [vmem:[%s4] sm:$0xff]
        %v2065 = vld [vmem:[%s4 + $0x8] sm:$0xff]
        %v2066 = vld [vmem:[%s4 + $0x10] sm:$0xff]
        %v2067 = vld [vmem:[%s4 + $0x18] sm:$0xff]
        %v2068 = vld [vmem:[%s4 + $0x20] sm:$0xff]
        %v2069 = vld [vmem:[%s4 + $0x28] sm:$0xff]
        %v2070 = vld [vmem:[%s4 + $0x30] sm:$0xff]
        %v2071 = vld [vmem:[%s4 + $0x38] sm:$0xff]
        %v2072 = vld [vmem:[%s4 + $0x40] sm:$0xff]
        %v2073 = vld [vmem:[%s4 + $0x48] sm:$0xff]
        %v2074 = vld [vmem:[%s4 + $0x50] sm:$0xff]
        %v2075 = vld [vmem:[%s4 + $0x58] sm:$0xff]
        %v2076 = vld [vmem:[%s4 + $0x60] sm:$0xff]
        %v2077 = vld [vmem:[%s4 + $0x68] sm:$0xff]
        %v2078 = vld [vmem:[%s4 + $0x70] sm:$0xff]
        %v2079 = vld [vmem:[%s4 + $0x78] sm:$0xff]
        %v2080 = vld [vmem:[%s4 + $0x80] sm:$0xff]
        %v2081 = vld [vmem:[%s4 + $0x88] sm:$0xff]
        %v2082 = vld [vmem:[%s4 + $0x90] sm:$0xff]
        %v2083 = vld [vmem:[%s4 + $0x98] sm:$0xff]
        %v2084 = vld [vmem:[%s4 + $0xa0] sm:$0xff]
        %v2085 = vld [vmem:[%s4 + $0xa8] sm:$0xff]
        %v2086 = vld [vmem:[%s4 + $0xb0] sm:$0xff]
        %v2087 = vld [vmem:[%s4 + $0xb8] sm:$0xff]
        %v2088 = vld [vmem:[%s4 + $0xc0] sm:$0xff]
        %v2089 = vld [vmem:[%s4 + $0xc8] sm:$0xff]
        %v2090 = vld [vmem:[%s4 + $0xd0] sm:$0xff]
        %v2091 = vld [vmem:[%s4 + $0xd8] sm:$0xff]
        %v2092 = vld [vmem:[%s4 + $0xe0] sm:$0xff]
        %v2093 = vld [vmem:[%s4 + $0xe8] sm:$0xff]
        %v2094 = vld [vmem:[%s4 + $0xf0] sm:$0xff]
        %v2095 = vld [vmem:[%s4 + $0xf8] sm:$0xff]
        %v2096 = vld [vmem:[%s4 + $0x100] sm:$0xff]
        %v2097 = vld [vmem:[%s4 + $0x108] sm:$0xff]
        %v2098 = vld [vmem:[%s4 + $0x110] sm:$0xff]
        %v2099 = vld [vmem:[%s4 + $0x118] sm:$0xff]
        %v2100 = vld [vmem:[%s4 + $0x120] sm:$0xff]
        %v2101 = vld [vmem:[%s4 + $0x128] sm:$0xff]
        %v2102 = vld [vmem:[%s4 + $0x130] sm:$0xff]
        %v2103 = vld [vmem:[%s4 + $0x138] sm:$0xff]
        %v2104 = vld [vmem:[%s4 + $0x140] sm:$0xff]
        %v2105 = vld [vmem:[%s4 + $0x148] sm:$0xff]
        %v2106 = vld [vmem:[%s4 + $0x150] sm:$0xff]
        %v2107 = vld [vmem:[%s4 + $0x158] sm:$0xff]
        %v2108 = vld [vmem:[%s4 + $0x160] sm:$0xff]
        %v2109 = vld [vmem:[%s4 + $0x168] sm:$0xff]
        %v2110 = vld [vmem:[%s4 + $0x170] sm:$0xff]
        %v2111 = vld [vmem:[%s4 + $0x178] sm:$0xff]
        %v2112 = vld [vmem:[%s4 + $0x180] sm:$0xff]
        %v2113 = vld [vmem:[%s4 + $0x188] sm:$0xff]
        %v2114 = vld [vmem:[%s4 + $0x190] sm:$0xff]
        %v2115 = vld [vmem:[%s4 + $0x198] sm:$0xff]
        %v2116 = vld [vmem:[%s4 + $0x1a0] sm:$0xff]
        %v2117 = vld [vmem:[%s4 + $0x1a8] sm:$0xff]
        %v2118 = vld [vmem:[%s4 + $0x1b0] sm:$0xff]
        %v2119 = vld [vmem:[%s4 + $0x1b8] sm:$0xff]
        %v2120 = vld [vmem:[%s4 + $0x1c0] sm:$0xff]
        %v2121 = vld [vmem:[%s4 + $0x1c8] sm:$0xff]
        %v2122 = vld [vmem:[%s4 + $0x1d0] sm:$0xff]
        %v2123 = vld [vmem:[%s4 + $0x1d8] sm:$0xff]
        %v2124 = vld [vmem:[%s4 + $0x1e0] sm:$0xff]
        %v2125 = vld [vmem:[%s4 + $0x1e8] sm:$0xff]
        %v2126 = vld [vmem:[%s4 + $0x1f0] sm:$0xff]
        %v2127 = vld [vmem:[%s4 + $0x1f8] sm:$0xff]
        %v2128 = vld [vmem:[#allocation7] sm:$0x1]
        %v2130 = vlaneseq
        %v2131 = vshrl.u32 %v2130, 7
        %v2132 = vsub.s32 0, %v2131
        %v2133 = vrot.slane %v2128, %v2132
        %2135 = vmatprep.subr.mxu0 0.0
        %2136 = vmatpush1.msra.mxu0 %v2064
        %2137 = vmatprep.subr.mxu0 0.0
        %2138 = vmatpush1.msra.mxu0 %v2065
        %2139 = vmatprep.subr.mxu0 0.0
        %2140 = vmatpush1.msra.mxu0 %v2066
        %2141 = vmatprep.subr.mxu0 0.0
        %2142 = vmatpush1.msra.mxu0 %v2067
        %2143 = vmatprep.subr.mxu0 0.0
        %2144 = vmatpush1.msra.mxu0 %v2068
        %2145 = vmatprep.subr.mxu0 0.0
        %2146 = vmatpush1.msra.mxu0 %v2069
        %2147 = vmatprep.subr.mxu0 0.0
        %2148 = vmatpush1.msra.mxu0 %v2070
        %2149 = vmatprep.subr.mxu0 0.0
        %2150 = vmatpush1.msra.mxu0 %v2071
        %2151 = vmatprep.subr.mxu0 0.0
        %2152 = vmatpush1.msra.mxu0 %v2072
        %2153 = vmatprep.subr.mxu0 0.0
        %2154 = vmatpush1.msra.mxu0 %v2073
        %2155 = vmatprep.subr.mxu0 0.0
        %2156 = vmatpush1.msra.mxu0 %v2074
        %2157 = vmatprep.subr.mxu0 0.0
        %2158 = vmatpush1.msra.mxu0 %v2075
        %2159 = vmatprep.subr.mxu0 0.0
        %2160 = vmatpush1.msra.mxu0 %v2076
        %2161 = vmatprep.subr.mxu0 0.0
        %2162 = vmatpush1.msra.mxu0 %v2077
        %2163 = vmatprep.subr.mxu0 0.0
        %2164 = vmatpush1.msra.mxu0 %v2078
        %2165 = vmatprep.subr.mxu0 0.0
        %2166 = vmatpush1.msra.mxu0 %v2079
        %2167 = vmatprep.subr.mxu0 0.0
        %2168 = vmatpush1.msra.mxu0 %v2080
        %2169 = vmatprep.subr.mxu0 0.0
        %2170 = vmatpush1.msra.mxu0 %v2081
        %2171 = vmatprep.subr.mxu0 0.0
        %2172 = vmatpush1.msra.mxu0 %v2082
        %2173 = vmatprep.subr.mxu0 0.0
        %2174 = vmatpush1.msra.mxu0 %v2083
        %2175 = vmatprep.subr.mxu0 0.0
        %2176 = vmatpush1.msra.mxu0 %v2084
        %2177 = vmatprep.subr.mxu0 0.0
        %2178 = vmatpush1.msra.mxu0 %v2085
        %2179 = vmatprep.subr.mxu0 0.0
        %2180 = vmatpush1.msra.mxu0 %v2086
        %2181 = vmatprep.subr.mxu0 0.0
        %2182 = vmatpush1.msra.mxu0 %v2087
        %2183 = vmatprep.subr.mxu0 0.0
        %2184 = vmatpush1.msra.mxu0 %v2088
        %2185 = vmatprep.subr.mxu0 0.0
        %2186 = vmatpush1.msra.mxu0 %v2089
        %2187 = vmatprep.subr.mxu0 0.0
        %2188 = vmatpush1.msra.mxu0 %v2090
        %2189 = vmatprep.subr.mxu0 0.0
        %2190 = vmatpush1.msra.mxu0 %v2091
        %2191 = vmatprep.subr.mxu0 0.0
        %2192 = vmatpush1.msra.mxu0 %v2092
        %2193 = vmatprep.subr.mxu0 0.0
        %2194 = vmatpush1.msra.mxu0 %v2093
        %2195 = vmatprep.subr.mxu0 0.0
        %2196 = vmatpush1.msra.mxu0 %v2094
        %2197 = vmatprep.subr.mxu0 0.0
        %2198 = vmatpush1.msra.mxu0 %v2095
        %2199 = vmatprep.mubr.f32.mxu0 %v2061
        %2200 = vmatmul.mubr.f32.gmra.mrb[0].mxu0 %v2060
        %v2201 = vpop.f32.mrb[0].mxu0
        %v2202 = vadd.f32 %v2133, %v2201
        %v2203 = vpop.f32.mrb[0].mxu0
        %2204 = vdwg.mxu0
        %2205 = vmatprep.subr.mxu0 0.0
        %2206 = vmatpush1.msra.mxu0 %v2096
        %2207 = vmatprep.subr.mxu0 0.0
        %2208 = vmatpush1.msra.mxu0 %v2097
        %2209 = vmatprep.subr.mxu0 0.0
        %2210 = vmatpush1.msra.mxu0 %v2098
        %2211 = vmatprep.subr.mxu0 0.0
        %2212 = vmatpush1.msra.mxu0 %v2099
        %2213 = vmatprep.subr.mxu0 0.0
        %2214 = vmatpush1.msra.mxu0 %v2100
        %2215 = vmatprep.subr.mxu0 0.0
        %2216 = vmatpush1.msra.mxu0 %v2101
        %2217 = vmatprep.subr.mxu0 0.0
        %2218 = vmatpush1.msra.mxu0 %v2102
        %2219 = vmatprep.subr.mxu0 0.0
        %2220 = vmatpush1.msra.mxu0 %v2103
        %2221 = vmatprep.subr.mxu0 0.0
        %2222 = vmatpush1.msra.mxu0 %v2104
        %2223 = vmatprep.subr.mxu0 0.0
        %2224 = vmatpush1.msra.mxu0 %v2105
        %2225 = vmatprep.subr.mxu0 0.0
        %2226 = vmatpush1.msra.mxu0 %v2106
        %2227 = vmatprep.subr.mxu0 0.0
        %2228 = vmatpush1.msra.mxu0 %v2107
        %2229 = vmatprep.subr.mxu0 0.0
        %2230 = vmatpush1.msra.mxu0 %v2108
        %2231 = vmatprep.subr.mxu0 0.0
        %2232 = vmatpush1.msra.mxu0 %v2109
        %2233 = vmatprep.subr.mxu0 0.0
        %2234 = vmatpush1.msra.mxu0 %v2110
        %2235 = vmatprep.subr.mxu0 0.0
        %2236 = vmatpush1.msra.mxu0 %v2111
        %2237 = vmatprep.subr.mxu0 0.0
        %2238 = vmatpush1.msra.mxu0 %v2112
        %2239 = vmatprep.subr.mxu0 0.0
        %2240 = vmatpush1.msra.mxu0 %v2113
        %2241 = vmatprep.subr.mxu0 0.0
        %2242 = vmatpush1.msra.mxu0 %v2114
        %2243 = vmatprep.subr.mxu0 0.0
        %2244 = vmatpush1.msra.mxu0 %v2115
        %2245 = vmatprep.subr.mxu0 0.0
        %2246 = vmatpush1.msra.mxu0 %v2116
        %2247 = vmatprep.subr.mxu0 0.0
        %2248 = vmatpush1.msra.mxu0 %v2117
        %2249 = vmatprep.subr.mxu0 0.0
        %2250 = vmatpush1.msra.mxu0 %v2118
        %2251 = vmatprep.subr.mxu0 0.0
        %2252 = vmatpush1.msra.mxu0 %v2119
        %2253 = vmatprep.subr.mxu0 0.0
        %2254 = vmatpush1.msra.mxu0 %v2120
        %2255 = vmatprep.subr.mxu0 0.0
        %2256 = vmatpush1.msra.mxu0 %v2121
        %2257 = vmatprep.subr.mxu0 0.0
        %2258 = vmatpush1.msra.mxu0 %v2122
        %2259 = vmatprep.subr.mxu0 0.0
        %2260 = vmatpush1.msra.mxu0 %v2123
        %2261 = vmatprep.subr.mxu0 0.0
        %2262 = vmatpush1.msra.mxu0 %v2124
        %2263 = vmatprep.subr.mxu0 0.0
        %2264 = vmatpush1.msra.mxu0 %v2125
        %2265 = vmatprep.subr.mxu0 0.0
        %2266 = vmatpush1.msra.mxu0 %v2126
        %2267 = vmatprep.subr.mxu0 0.0
        %2268 = vmatpush1.msra.mxu0 %v2127
        %2269 = vmatprep.mubr.f32.mxu0 %v2063
        %2270 = vmatmul.mubr.f32.gmra.mrb[0].mxu0 %v2062
        %v2271 = vpop.f32.mrb[0].mxu0
        %v2272 = vadd.f32 %v2202, %v2271
        %v2273 = vpop.f32.mrb[0].mxu0
        %2274 = vdwg.mxu0
        %v2275 = vadd.f32 %v2272, 0.0
        %vm2276 = vcmp.ge.f32.partialorder %v2275, 0.5
        %v2277 = vsel %vm2276, 1, 0
        %v2278 = vcvt.s32.f32 %v2277
        %v2279 = vsub.f32 1.0, %v2278
        %v2280 = vmul.f32 %v2275, %v2279
        %v2281 = vadd.f32 %v2278, 0.0
        %v2282 = vmul.f32 %v2280, 0.9
        %v2284 = vrot.slane %v2272, 1
        %v2286 = vadd.f32 %v2282, %v2284
        %vm2287 = vcmp.ge.f32.partialorder %v2286, 0.5
        %v2288 = vsel %vm2287, 1, 0
        %v2289 = vcvt.s32.f32 %v2288
        %v2290 = vsub.f32 1.0, %v2289
        %v2291 = vmul.f32 %v2286, %v2290
        %v2292 = vadd.f32 %v2281, %v2289
        %v2293 = vmul.f32 %v2291, 0.9
        %v2294 = vrot.slane %v2272, 2
        %v2296 = vadd.f32 %v2293, %v2294
        %vm2297 = vcmp.ge.f32.partialorder %v2296, 0.5
        %v2298 = vsel %vm2297, 1, 0
        %v2299 = vcvt.s32.f32 %v2298
        %v2300 = vsub.f32 1.0, %v2299
        %v2301 = vmul.f32 %v2296, %v2300
        %v2302 = vadd.f32 %v2292, %v2299
        %v2303 = vmul.f32 %v2301, 0.9
        %v2304 = vrot.slane %v2272, 3
        %v2306 = vadd.f32 %v2303, %v2304
        %vm2307 = vcmp.ge.f32.partialorder %v2306, 0.5
        %v2308 = vsel %vm2307, 1, 0
        %v2309 = vcvt.s32.f32 %v2308
        %v2310 = vsub.f32 1.0, %v2309
        %v2311 = vmul.f32 %v2306, %v2310
        %v2312 = vadd.f32 %v2302, %v2309
        %v2313 = vmul.f32 %v2311, 0.9
        %v2314 = vrot.slane %v2272, 4
        %v2316 = vadd.f32 %v2313, %v2314
        %vm2317 = vcmp.ge.f32.partialorder %v2316, 0.5
        %v2318 = vsel %vm2317, 1, 0
        %v2319 = vcvt.s32.f32 %v2318
        %v2320 = vsub.f32 1.0, %v2319
        %v2321 = vmul.f32 %v2316, %v2320
        %v2322 = vadd.f32 %v2312, %v2319
        %v2323 = vmul.f32 %v2321, 0.9
        %v2324 = vrot.slane %v2272, 5
        %v2326 = vadd.f32 %v2323, %v2324
        %vm2327 = vcmp.ge.f32.partialorder %v2326, 0.5
        %v2328 = vsel %vm2327, 1, 0
        %v2329 = vcvt.s32.f32 %v2328
        %v2330 = vsub.f32 1.0, %v2329
        %v2331 = vmul.f32 %v2326, %v2330
        %v2332 = vadd.f32 %v2322, %v2329
        %v2333 = vmul.f32 %v2331, 0.9
        %v2334 = vrot.slane %v2272, 6
        %v2336 = vadd.f32 %v2333, %v2334
        %vm2337 = vcmp.ge.f32.partialorder %v2336, 0.5
        %v2338 = vsel %vm2337, 1, 0
        %v2339 = vcvt.s32.f32 %v2338
        %v2340 = vsub.f32 1.0, %v2339
        %v2341 = vmul.f32 %v2336, %v2340
        %v2342 = vadd.f32 %v2332, %v2339
        %v2343 = vmul.f32 %v2341, 0.9
        %v2344 = vrot.slane %v2272, 7
        %v2346 = vadd.f32 %v2343, %v2344
        %vm2347 = vcmp.ge.f32.partialorder %v2346, 0.5
        %v2348 = vsel %vm2347, 1, 0
        %v2349 = vcvt.s32.f32 %v2348
        %v2350 = vadd.f32 %v2342, %v2349
        %v2351 = vmul.f32 %v2350, 0.125
        %vm2352 = vcmask 516096
        %2353 = vst.msk [vmem:[%s344] sm:$0x1] %vm2352, %v2351
        %p2354 = scmp.lt.s32.totalorder %s21, 1
        %s2355 = scalar_select %p2354, %s21, 1
        %s2356 = smul.addr %s2355, 8
        %s2357 = smul.addr %s2356, 8
        %s2358 = scalar_lea.vmem %s6, %s2357
        %p2359 = scmp.lt.s32.totalorder %s21, 1
        %s2360 = scalar_select %p2359, %s21, 1
        %s2361 = scalar_lea.vmem %s7, %s2360
        // Predicated region
        $region57: #{img_csnn_ae_v3_forward.2} parent=43 // pred_check
          %p2362 = pneg %p175
        $region58: #{img_csnn_ae_v3_forward.2} parent=43 // pred_check_branch
          %2364 = sbr.rel (%p2362) target = $region60
        $region59: #{img_csnn_ae_v3_forward.2} parent=43 // pred_region
          _
        $region60: #{img_csnn_ae_v3_forward.2} parent=43 // pred_fallthru
          _
        // Predicated region
        $region61: #{img_csnn_ae_v3_forward.2} parent=43 // pred_check
          %p2365 = pneg %p201
        $region62: #{img_csnn_ae_v3_forward.2} parent=43 // pred_check_branch
          %2367 = sbr.rel (%p2365) target = $region64
        $region63: #{img_csnn_ae_v3_forward.2} parent=43 // pred_region
          _
        $region64: #{img_csnn_ae_v3_forward.2} parent=43 // pred_fallthru
          _
      $region44: #{img_csnn_ae_v3_forward.2} parent=5 // pred_fallthru
        _
      %p2368 = scmp.le.s32.totalorder 2, %s16
      // Predicated region
      $region65: #{img_csnn_ae_v3_forward.2} parent=5 // pred_check
        %p2369 = pneg %p2368
      $region66: #{img_csnn_ae_v3_forward.2} parent=5 // pred_check_branch
        %2371 = sbr.rel (%p2369) target = $region68
      $region67: #{img_csnn_ae_v3_forward.2} parent=5 // pred_region
        %s2372 = ssub.s32 %s16, 2
        // Predicated region
        $region69: #{img_csnn_ae_v3_forward.2} parent=67 // pred_check
          %p2373 = pneg %p181
        $region70: #{img_csnn_ae_v3_forward.2} parent=67 // pred_check_branch
          %2375 = sbr.rel (%p2373) target = $region72
        $region71: #{img_csnn_ae_v3_forward.2} parent=67 // pred_region
          %p2376 = scmp.lt.s32.totalorder %s22, 1
          %s2377 = scalar_select %p2376, %s22, 1
          %s2378 = smul.addr %s2377, 8
          %s2379 = smul.addr %s2378, 8
          %s2380 = scalar_lea.vmem %s6, %s2379
        $region72: #{img_csnn_ae_v3_forward.2} parent=67 // pred_fallthru
          _
        // Predicated region
        $region73: #{img_csnn_ae_v3_forward.2} parent=67 // pred_check
          %p2381 = pneg %p207
        $region74: #{img_csnn_ae_v3_forward.2} parent=67 // pred_check_branch
          %2383 = sbr.rel (%p2381) target = $region76
        $region75: #{img_csnn_ae_v3_forward.2} parent=67 // pred_region
          %p2384 = scmp.lt.s32.totalorder %s22, 1
          %s2385 = scalar_select %p2384, %s22, 1
          %s2386 = scalar_lea.vmem %s7, %s2385
        $region76: #{img_csnn_ae_v3_forward.2} parent=67 // pred_fallthru
          _
      $region68: #{img_csnn_ae_v3_forward.2} parent=5 // pred_fallthru
        _
    $region6: #{img_csnn_ae_v3_forward.2} parent=1 // loop_footer
      %s20 = sadd.s32 1, %s16
    $region7: #{img_csnn_ae_v3_forward.2} parent=1 // loop_footer_branch
      %15 = sbr.rel target = $region3
    $region8: #{img_csnn_ae_v3_forward.2} parent=1 // loop_exit
      _
    %2387 = vsyncpa [#allocation4], 1
    %s2388 = scalar_lea.sflag [#allocation4], 1
    %2389 = vsyncpa %s2388, 1
    %2390 = vsyncpa [#allocation6], 1

</llo_original>
